<compile_context>
chip_gen: v5e
topology: v5e:2x2
jax: 0.10.0
libtpu: 0.0.40
codegen_flags: <defaults>
</compile_context>

<pallas_src>
import jax
import jax.numpy as jnp
from jax.experimental import pallas as pl
from jax.experimental.pallas import tpu as pltpu

H = 64           # LSTM hidden size (PyTorch module)
OUT = 8          # fc output features
INPUT_SIZE = 1   # LSTM input size
G = 128          # lane-aligned gate slot width: gate g lives in lanes [g*G, g*G+H)
HP = 128         # lane-padded state width: lanes [0, H) valid, lanes [H, HP) are 0


def _gate_block(gates, c):
    """(i, f, g, o) nonlinearities + state update on 128-lane-aligned gate slots."""
    i = jax.nn.sigmoid(gates[:, 0 * G:1 * G])
    f = jax.nn.sigmoid(gates[:, 1 * G:2 * G])
    g = jnp.tanh(gates[:, 2 * G:3 * G])
    o = jax.nn.sigmoid(gates[:, 3 * G:4 * G])
    c_new = f * c + i * g
    h_new = o * jnp.tanh(c_new)
    return h_new, c_new


def lstm_kernel(x_ref, wih1_ref, b1_ref, wbig_ref, b2_ref, wfc_ref, bfc_ref,
                out_ref):
    B, T, _ = x_ref.shape
    G4 = 4 * G

    # Small, hoisted loads (a few vregs each; safe to keep live across the
    # fully-unrolled body).  The big weight stays behind its ref.
    x_all = x_ref[...]                                   # (B, T, 1) f32
    wih1 = wih1_ref[...]                                 # (1, 4G)
    b1 = b1_ref[...]                                     # (1, 4G)
    b2 = jnp.broadcast_to(b2_ref[...], (B, G4))          # hoisted broadcast

    def xproj(t):
        # Layer-1 input projection for step t (input_size == 1):
        # (B, 1) * (1, 4G) + (1, 4G) -> (B, 4G).  Padded gate lanes stay 0
        # because wih1/b1 padded columns are 0.  Off the critical path.
        return x_all[:, t, :] * wih1 + b1

    zeros = jnp.zeros((B, HP), jnp.float32)
    c1 = zeros
    h2 = zeros
    c2 = zeros

    # Layer-1 cell for t = 0: the recurrent term is zero (h1_{-1} = 0).
    h1, c1 = _gate_block(xproj(0), c1)

    # Software-pipelined recurrence (T static and small -> unrolled).
    for t in range(T):
        lhs = jnp.concatenate([h1, h2], axis=1).astype(jnp.bfloat16)   # (B, 2*HP)
        big = jnp.dot(lhs, wbig_ref[...],
                      preferred_element_type=jnp.float32)              # (B, 8G) f32
        gates2 = big[:, G4:] + b2        # layer-2 gate pre-activation for step t
        h2, c2 = _gate_block(gates2, c2)                   # layer-2 cell, step t
        if t + 1 < T:                                      # layer-1 cell, step t+1
            h1, c1 = _gate_block(xproj(t + 1) + big[:, :G4], c1)

    # fc on the last timestep's layer-2 hidden state (kept in f32; padded rows
    # of wfc are zero so the zero-padded lanes of h2 contribute nothing).
    out = jnp.dot(h2, wfc_ref[...], preferred_element_type=jnp.float32)
    out_ref[...] = (out + bfc_ref[...]).astype(out_ref.dtype)


def _pad_gate_cols(w):
    """(K, 4H) -> (K, 4G): gate g moved to lanes [g*G, g*G+H), zeros elsewhere."""
    k = w.shape[0]
    out = jnp.zeros((k, 4 * G), w.dtype)
    for gi in range(4):
        out = out.at[:, gi * G:gi * G + H].set(w[:, gi * H:(gi + 1) * H])
    return out


def pack_params(params):
    """One-time repack of PyTorch-layout (transposed) LSTM weights for the kernel."""
    wih1 = _pad_gate_cols(params["wih1"])   # (1, 4G)
    b1 = _pad_gate_cols(params["b1"])       # (1, 4G)
    b2 = _pad_gate_cols(params["b2"])       # (1, 4G)

    whh1 = _pad_gate_cols(params["whh1"])   # (H, 4G)
    wih2 = _pad_gate_cols(params["wih2"])   # (H, 4G)
    whh2 = _pad_gate_cols(params["whh2"])   # (H, 4G)

    # Merged block weight:
    #   rows [0, HP)    <- h1 lanes (rows [H, HP) zero)
    #   rows [HP, 2HP)  <- h2 lanes (rows [HP+H, 2HP) zero)
    #   cols [0, 4G)    -> layer-1 recurrent gates
    #   cols [4G, 8G)   -> layer-2 gates
    wbig = jnp.zeros((2 * HP, 8 * G), jnp.float32)
    wbig = wbig.at[0:H, 0:4 * G].set(whh1)
    wbig = wbig.at[0:H, 4 * G:8 * G].set(wih2)
    wbig = wbig.at[HP:HP + H, 4 * G:8 * G].set(whh2)
    wbig = wbig.astype(jnp.bfloat16)        # bf16 MXU operands, f32 accumulate

    wfc = jnp.zeros((HP, OUT), jnp.float32).at[:H].set(params["wfc"])
    return {"wih1": wih1, "b1": b1, "wbig": wbig, "b2": b2,
            "wfc": wfc, "bfc": params["bfc"]}


@jax.jit
def lstm_forward(x, packed):
    """x: (B, T, 1) batch_first (PyTorch layout); packed: output of pack_params."""
    B, T, _ = x.shape
    args = (x, packed["wih1"], packed["b1"], packed["wbig"],
            packed["b2"], packed["wfc"], packed["bfc"])
    in_specs = [pl.BlockSpec(memory_space=pltpu.MemorySpace.VMEM) for _ in args]
    return pl.pallas_call(
        lstm_kernel,
        out_shape=jax.ShapeDtypeStruct((B, OUT), jnp.float32),
        in_specs=in_specs,
        out_specs=pl.BlockSpec(memory_space=pltpu.MemorySpace.VMEM),
        # Deliberately no grid / tiling: working set < 1 MiB, latency-bound.
    )(*args)


def init_params(key, input_size=INPUT_SIZE, hidden=H, out=OUT):
    """Deterministic init mirroring PyTorch's U(-1/sqrt(H), 1/sqrt(H))."""
    ks = jax.random.split(key, 10)
    s = 1.0 / jnp.sqrt(jnp.float32(hidden))

    def u(k, shape, scale):
        return jax.random.uniform(k, shape, jnp.float32, -scale, scale)

    return {
        # layer 1 (input_size -> hidden), weights stored transposed, gate order i,f,g,o
        "wih1": u(ks[0], (input_size, 4 * hidden), s),
        "whh1": u(ks[1], (hidden, 4 * hidden), s),
        "b1": u(ks[2], (1, 4 * hidden), s) + u(ks[3], (1, 4 * hidden), s),
        # layer 2 (hidden -> hidden)
        "wih2": u(ks[4], (hidden, 4 * hidden), s),
        "whh2": u(ks[5], (hidden, 4 * hidden), s),
        "b2": u(ks[6], (1, 4 * hidden), s) + u(ks[7], (1, 4 * hidden), s),
        # fc (hidden -> out), stored transposed
        "wfc": u(ks[8], (hidden, out), s),
        "bfc": u(ks[9], (1, out), s),
    }


def ref_forward(x, p):
    """Pure-JAX f32 reference matching PyTorch nn.LSTM semantics."""
    B, T, _ = x.shape
    Hh = p["whh1"].shape[0]

    def cell(x_proj, h, c, whh, b):
        gates = x_proj + h @ whh + b
        i = jax.nn.sigmoid(gates[:, :Hh])
        f = jax.nn.sigmoid(gates[:, Hh:2 * Hh])
        g = jnp.tanh(gates[:, 2 * Hh:3 * Hh])
        o = jax.nn.sigmoid(gates[:, 3 * Hh:])
        c = f * c + i * g
        h = o * jnp.tanh(c)
        return h, c

    h1 = c1 = h2 = c2 = jnp.zeros((B, Hh), jnp.float32)
    for t in range(T):
        h1, c1 = cell(x[:, t, :] @ p["wih1"], h1, c1, p["whh1"], p["b1"])
        h2, c2 = cell(h1 @ p["wih2"], h2, c2, p["whh2"], p["b2"])
    return h2 @ p["wfc"] + p["bfc"]


if __name__ == "__main__":
    key = jax.random.PRNGKey(0)
    k_x, k_p = jax.random.split(key)

    B, T = 2, 8
    x = jax.random.normal(k_x, (B, T, INPUT_SIZE), jnp.float32)
    params = init_params(k_p)
    packed = pack_params(params)

    out = lstm_forward(x, packed)
    out = jax.block_until_ready(out)

    ref = ref_forward(x, params)
    assert out.shape == (B, OUT)
    # bf16 MXU operands in the recurrence -> tolerance loosened vs the f32 reference.
    assert jnp.allclose(out, ref, atol=2e-2, rtol=2e-2), (out, ref)

    print("KERNEL_OK")
</pallas_src>

<mosaic_0001>
module attributes {stable_mosaic.version = 11 : i64} {
  func.func @lstm_kernel(%arg0: memref<2x8x1xf32, #tpu.memory_space<vmem>>, %arg1: memref<1x512xf32, #tpu.memory_space<vmem>>, %arg2: memref<1x512xf32, #tpu.memory_space<vmem>>, %arg3: memref<256x1024xbf16, #tpu.memory_space<vmem>>, %arg4: memref<1x512xf32, #tpu.memory_space<vmem>>, %arg5: memref<128x8xf32, #tpu.memory_space<vmem>>, %arg6: memref<1x8xf32, #tpu.memory_space<vmem>>, %arg7: memref<2x8xf32, #tpu.memory_space<vmem>>) attributes {dimension_semantics = [], scalar_prefetch = 0 : i64, scratch_operands = 0 : i64, tpu.core_type = #tpu.core_type<tc>} {
    %c0 = arith.constant 0 : index
    %c0_0 = arith.constant 0 : index
    %c0_1 = arith.constant 0 : index
    %0 = vector.load %arg0[%c0, %c0_0, %c0_1] : memref<2x8x1xf32, #tpu.memory_space<vmem>>, vector<2x8x1xf32>
    %c0_2 = arith.constant 0 : index
    %c0_3 = arith.constant 0 : index
    %1 = vector.load %arg1[%c0_2, %c0_3] : memref<1x512xf32, #tpu.memory_space<vmem>>, vector<1x512xf32>
    %c0_4 = arith.constant 0 : index
    %c0_5 = arith.constant 0 : index
    %2 = vector.load %arg2[%c0_4, %c0_5] : memref<1x512xf32, #tpu.memory_space<vmem>>, vector<1x512xf32>
    %c0_6 = arith.constant 0 : index
    %c0_7 = arith.constant 0 : index
    %3 = vector.load %arg4[%c0_6, %c0_7] : memref<1x512xf32, #tpu.memory_space<vmem>>, vector<1x512xf32>
    %4 = vector.shape_cast %3 : vector<1x512xf32> to vector<1x512xf32>
    %5 = vector.broadcast %4 : vector<1x512xf32> to vector<2x512xf32>
    %cst = arith.constant 0.000000e+00 : f32
    %6 = vector.broadcast %cst : f32 to vector<2x128xf32>
    %7 = vector.extract_strided_slice %0 {offsets = [0, 0, 0], sizes = [2, 1, 1], strides = [1, 1, 1]} : vector<2x8x1xf32> to vector<2x1x1xf32>
    %8 = vector.shape_cast %7 : vector<2x1x1xf32> to vector<2x1xf32>
    %9 = vector.broadcast %8 : vector<2x1xf32> to vector<2x512xf32>
    %10 = vector.broadcast %1 : vector<1x512xf32> to vector<2x512xf32>
    %11 = arith.mulf %9, %10 : vector<2x512xf32>
    %12 = vector.broadcast %2 : vector<1x512xf32> to vector<2x512xf32>
    %13 = arith.addf %11, %12 : vector<2x512xf32>
    %14 = vector.extract_strided_slice %13 {offsets = [0, 0], sizes = [2, 128], strides = [1, 1]} : vector<2x512xf32> to vector<2x128xf32>
    %15 = arith.negf %14 : vector<2x128xf32>
    %16 = math.exp %15 : vector<2x128xf32>
    %cst_8 = arith.constant 1.000000e+00 : f32
    %17 = vector.broadcast %cst_8 : f32 to vector<2x128xf32>
    %18 = arith.addf %17, %16 : vector<2x128xf32>
    %19 = arith.divf %17, %18 : vector<2x128xf32>
    %20 = vector.extract_strided_slice %13 {offsets = [0, 128], sizes = [2, 128], strides = [1, 1]} : vector<2x512xf32> to vector<2x128xf32>
    %21 = arith.negf %20 : vector<2x128xf32>
    %22 = math.exp %21 : vector<2x128xf32>
    %cst_9 = arith.constant 1.000000e+00 : f32
    %23 = vector.broadcast %cst_9 : f32 to vector<2x128xf32>
    %24 = arith.addf %23, %22 : vector<2x128xf32>
    %25 = arith.divf %23, %24 : vector<2x128xf32>
    %26 = vector.extract_strided_slice %13 {offsets = [0, 256], sizes = [2, 128], strides = [1, 1]} : vector<2x512xf32> to vector<2x128xf32>
    %27 = math.tanh %26 : vector<2x128xf32>
    %28 = vector.extract_strided_slice %13 {offsets = [0, 384], sizes = [2, 128], strides = [1, 1]} : vector<2x512xf32> to vector<2x128xf32>
    %29 = arith.negf %28 : vector<2x128xf32>
    %30 = math.exp %29 : vector<2x128xf32>
    %cst_10 = arith.constant 1.000000e+00 : f32
    %31 = vector.broadcast %cst_10 : f32 to vector<2x128xf32>
    %32 = arith.addf %31, %30 : vector<2x128xf32>
    %33 = arith.divf %31, %32 : vector<2x128xf32>
    %34 = arith.mulf %25, %6 : vector<2x128xf32>
    %35 = arith.mulf %19, %27 : vector<2x128xf32>
    %36 = arith.addf %34, %35 : vector<2x128xf32>
    %37 = math.tanh %36 : vector<2x128xf32>
    %38 = arith.mulf %33, %37 : vector<2x128xf32>
    %39 = tpu.concatenate %38, %6 in 1 : vector<2x128xf32>, vector<2x128xf32> -> vector<2x256xf32>
    %40 = arith.truncf %39 : vector<2x256xf32> to vector<2x256xbf16>
    %c0_11 = arith.constant 0 : index
    %c0_12 = arith.constant 0 : index
    %41 = vector.load %arg3[%c0_11, %c0_12] : memref<256x1024xbf16, #tpu.memory_space<vmem>>, vector<256x1024xbf16>
    %cst_13 = arith.constant dense<0.000000e+00> : vector<2x1024xf32>
    %42 = tpu.matmul %40, %41, %cst_13 {dimension_numbers = #tpu.dot_dimension_numbers<[1], [0], [0], [1], [0, 0, 1, 1], [], []>} : vector<2x256xbf16>, vector<256x1024xbf16>, vector<2x1024xf32> -> vector<2x1024xf32>
    %43 = vector.extract_strided_slice %42 {offsets = [0, 512], sizes = [2, 512], strides = [1, 1]} : vector<2x1024xf32> to vector<2x512xf32>
    %44 = arith.addf %43, %5 : vector<2x512xf32>
    %45 = vector.extract_strided_slice %44 {offsets = [0, 0], sizes = [2, 128], strides = [1, 1]} : vector<2x512xf32> to vector<2x128xf32>
    %46 = arith.negf %45 : vector<2x128xf32>
    %47 = math.exp %46 : vector<2x128xf32>
    %cst_14 = arith.constant 1.000000e+00 : f32
    %48 = vector.broadcast %cst_14 : f32 to vector<2x128xf32>
    %49 = arith.addf %48, %47 : vector<2x128xf32>
    %50 = arith.divf %48, %49 : vector<2x128xf32>
    %51 = vector.extract_strided_slice %44 {offsets = [0, 128], sizes = [2, 128], strides = [1, 1]} : vector<2x512xf32> to vector<2x128xf32>
    %52 = arith.negf %51 : vector<2x128xf32>
    %53 = math.exp %52 : vector<2x128xf32>
    %cst_15 = arith.constant 1.000000e+00 : f32
    %54 = vector.broadcast %cst_15 : f32 to vector<2x128xf32>
    %55 = arith.addf %54, %53 : vector<2x128xf32>
    %56 = arith.divf %54, %55 : vector<2x128xf32>
    %57 = vector.extract_strided_slice %44 {offsets = [0, 256], sizes = [2, 128], strides = [1, 1]} : vector<2x512xf32> to vector<2x128xf32>
    %58 = math.tanh %57 : vector<2x128xf32>
    %59 = vector.extract_strided_slice %44 {offsets = [0, 384], sizes = [2, 128], strides = [1, 1]} : vector<2x512xf32> to vector<2x128xf32>
    %60 = arith.negf %59 : vector<2x128xf32>
    %61 = math.exp %60 : vector<2x128xf32>
    %cst_16 = arith.constant 1.000000e+00 : f32
    %62 = vector.broadcast %cst_16 : f32 to vector<2x128xf32>
    %63 = arith.addf %62, %61 : vector<2x128xf32>
    %64 = arith.divf %62, %63 : vector<2x128xf32>
    %65 = arith.mulf %56, %6 : vector<2x128xf32>
    %66 = arith.mulf %50, %58 : vector<2x128xf32>
    %67 = arith.addf %65, %66 : vector<2x128xf32>
    %68 = math.tanh %67 : vector<2x128xf32>
    %69 = arith.mulf %64, %68 : vector<2x128xf32>
    %70 = vector.extract_strided_slice %0 {offsets = [0, 1, 0], sizes = [2, 1, 1], strides = [1, 1, 1]} : vector<2x8x1xf32> to vector<2x1x1xf32>
    %71 = vector.shape_cast %70 : vector<2x1x1xf32> to vector<2x1xf32>
    %72 = vector.broadcast %71 : vector<2x1xf32> to vector<2x512xf32>
    %73 = vector.broadcast %1 : vector<1x512xf32> to vector<2x512xf32>
    %74 = arith.mulf %72, %73 : vector<2x512xf32>
    %75 = vector.broadcast %2 : vector<1x512xf32> to vector<2x512xf32>
    %76 = arith.addf %74, %75 : vector<2x512xf32>
    %77 = vector.extract_strided_slice %42 {offsets = [0, 0], sizes = [2, 512], strides = [1, 1]} : vector<2x1024xf32> to vector<2x512xf32>
    %78 = arith.addf %76, %77 : vector<2x512xf32>
    %79 = vector.extract_strided_slice %78 {offsets = [0, 0], sizes = [2, 128], strides = [1, 1]} : vector<2x512xf32> to vector<2x128xf32>
    %80 = arith.negf %79 : vector<2x128xf32>
    %81 = math.exp %80 : vector<2x128xf32>
    %cst_17 = arith.constant 1.000000e+00 : f32
    %82 = vector.broadcast %cst_17 : f32 to vector<2x128xf32>
    %83 = arith.addf %82, %81 : vector<2x128xf32>
    %84 = arith.divf %82, %83 : vector<2x128xf32>
    %85 = vector.extract_strided_slice %78 {offsets = [0, 128], sizes = [2, 128], strides = [1, 1]} : vector<2x512xf32> to vector<2x128xf32>
    %86 = arith.negf %85 : vector<2x128xf32>
    %87 = math.exp %86 : vector<2x128xf32>
    %cst_18 = arith.constant 1.000000e+00 : f32
    %88 = vector.broadcast %cst_18 : f32 to vector<2x128xf32>
    %89 = arith.addf %88, %87 : vector<2x128xf32>
    %90 = arith.divf %88, %89 : vector<2x128xf32>
    %91 = vector.extract_strided_slice %78 {offsets = [0, 256], sizes = [2, 128], strides = [1, 1]} : vector<2x512xf32> to vector<2x128xf32>
    %92 = math.tanh %91 : vector<2x128xf32>
    %93 = vector.extract_strided_slice %78 {offsets = [0, 384], sizes = [2, 128], strides = [1, 1]} : vector<2x512xf32> to vector<2x128xf32>
    %94 = arith.negf %93 : vector<2x128xf32>
    %95 = math.exp %94 : vector<2x128xf32>
    %cst_19 = arith.constant 1.000000e+00 : f32
    %96 = vector.broadcast %cst_19 : f32 to vector<2x128xf32>
    %97 = arith.addf %96, %95 : vector<2x128xf32>
    %98 = arith.divf %96, %97 : vector<2x128xf32>
    %99 = arith.mulf %90, %36 : vector<2x128xf32>
    %100 = arith.mulf %84, %92 : vector<2x128xf32>
    %101 = arith.addf %99, %100 : vector<2x128xf32>
    %102 = math.tanh %101 : vector<2x128xf32>
    %103 = arith.mulf %98, %102 : vector<2x128xf32>
    %104 = tpu.concatenate %103, %69 in 1 : vector<2x128xf32>, vector<2x128xf32> -> vector<2x256xf32>
    %105 = arith.truncf %104 : vector<2x256xf32> to vector<2x256xbf16>
    %c0_20 = arith.constant 0 : index
    %c0_21 = arith.constant 0 : index
    %106 = vector.load %arg3[%c0_20, %c0_21] : memref<256x1024xbf16, #tpu.memory_space<vmem>>, vector<256x1024xbf16>
    %cst_22 = arith.constant dense<0.000000e+00> : vector<2x1024xf32>
    %107 = tpu.matmul %105, %106, %cst_22 {dimension_numbers = #tpu.dot_dimension_numbers<[1], [0], [0], [1], [0, 0, 1, 1], [], []>} : vector<2x256xbf16>, vector<256x1024xbf16>, vector<2x1024xf32> -> vector<2x1024xf32>
    %108 = vector.extract_strided_slice %107 {offsets = [0, 512], sizes = [2, 512], strides = [1, 1]} : vector<2x1024xf32> to vector<2x512xf32>
    %109 = arith.addf %108, %5 : vector<2x512xf32>
    %110 = vector.extract_strided_slice %109 {offsets = [0, 0], sizes = [2, 128], strides = [1, 1]} : vector<2x512xf32> to vector<2x128xf32>
    %111 = arith.negf %110 : vector<2x128xf32>
    %112 = math.exp %111 : vector<2x128xf32>
    %cst_23 = arith.constant 1.000000e+00 : f32
    %113 = vector.broadcast %cst_23 : f32 to vector<2x128xf32>
    %114 = arith.addf %113, %112 : vector<2x128xf32>
    %115 = arith.divf %113, %114 : vector<2x128xf32>
    %116 = vector.extract_strided_slice %109 {offsets = [0, 128], sizes = [2, 128], strides = [1, 1]} : vector<2x512xf32> to vector<2x128xf32>
    %117 = arith.negf %116 : vector<2x128xf32>
    %118 = math.exp %117 : vector<2x128xf32>
    %cst_24 = arith.constant 1.000000e+00 : f32
    %119 = vector.broadcast %cst_24 : f32 to vector<2x128xf32>
    %120 = arith.addf %119, %118 : vector<2x128xf32>
    %121 = arith.divf %119, %120 : vector<2x128xf32>
    %122 = vector.extract_strided_slice %109 {offsets = [0, 256], sizes = [2, 128], strides = [1, 1]} : vector<2x512xf32> to vector<2x128xf32>
    %123 = math.tanh %122 : vector<2x128xf32>
    %124 = vector.extract_strided_slice %109 {offsets = [0, 384], sizes = [2, 128], strides = [1, 1]} : vector<2x512xf32> to vector<2x128xf32>
    %125 = arith.negf %124 : vector<2x128xf32>
    %126 = math.exp %125 : vector<2x128xf32>
    %cst_25 = arith.constant 1.000000e+00 : f32
    %127 = vector.broadcast %cst_25 : f32 to vector<2x128xf32>
    %128 = arith.addf %127, %126 : vector<2x128xf32>
    %129 = arith.divf %127, %128 : vector<2x128xf32>
    %130 = arith.mulf %121, %67 : vector<2x128xf32>
    %131 = arith.mulf %115, %123 : vector<2x128xf32>
    %132 = arith.addf %130, %131 : vector<2x128xf32>
    %133 = math.tanh %132 : vector<2x128xf32>
    %134 = arith.mulf %129, %133 : vector<2x128xf32>
    %135 = vector.extract_strided_slice %0 {offsets = [0, 2, 0], sizes = [2, 1, 1], strides = [1, 1, 1]} : vector<2x8x1xf32> to vector<2x1x1xf32>
    %136 = vector.shape_cast %135 : vector<2x1x1xf32> to vector<2x1xf32>
    %137 = vector.broadcast %136 : vector<2x1xf32> to vector<2x512xf32>
    %138 = vector.broadcast %1 : vector<1x512xf32> to vector<2x512xf32>
    %139 = arith.mulf %137, %138 : vector<2x512xf32>
    %140 = vector.broadcast %2 : vector<1x512xf32> to vector<2x512xf32>
    %141 = arith.addf %139, %140 : vector<2x512xf32>
    %142 = vector.extract_strided_slice %107 {offsets = [0, 0], sizes = [2, 512], strides = [1, 1]} : vector<2x1024xf32> to vector<2x512xf32>
    %143 = arith.addf %141, %142 : vector<2x512xf32>
    %144 = vector.extract_strided_slice %143 {offsets = [0, 0], sizes = [2, 128], strides = [1, 1]} : vector<2x512xf32> to vector<2x128xf32>
    %145 = arith.negf %144 : vector<2x128xf32>
    %146 = math.exp %145 : vector<2x128xf32>
    %cst_26 = arith.constant 1.000000e+00 : f32
    %147 = vector.broadcast %cst_26 : f32 to vector<2x128xf32>
    %148 = arith.addf %147, %146 : vector<2x128xf32>
    %149 = arith.divf %147, %148 : vector<2x128xf32>
    %150 = vector.extract_strided_slice %143 {offsets = [0, 128], sizes = [2, 128], strides = [1, 1]} : vector<2x512xf32> to vector<2x128xf32>
    %151 = arith.negf %150 : vector<2x128xf32>
    %152 = math.exp %151 : vector<2x128xf32>
    %cst_27 = arith.constant 1.000000e+00 : f32
    %153 = vector.broadcast %cst_27 : f32 to vector<2x128xf32>
    %154 = arith.addf %153, %152 : vector<2x128xf32>
    %155 = arith.divf %153, %154 : vector<2x128xf32>
    %156 = vector.extract_strided_slice %143 {offsets = [0, 256], sizes = [2, 128], strides = [1, 1]} : vector<2x512xf32> to vector<2x128xf32>
    %157 = math.tanh %156 : vector<2x128xf32>
    %158 = vector.extract_strided_slice %143 {offsets = [0, 384], sizes = [2, 128], strides = [1, 1]} : vector<2x512xf32> to vector<2x128xf32>
    %159 = arith.negf %158 : vector<2x128xf32>
    %160 = math.exp %159 : vector<2x128xf32>
    %cst_28 = arith.constant 1.000000e+00 : f32
    %161 = vector.broadcast %cst_28 : f32 to vector<2x128xf32>
    %162 = arith.addf %161, %160 : vector<2x128xf32>
    %163 = arith.divf %161, %162 : vector<2x128xf32>
    %164 = arith.mulf %155, %101 : vector<2x128xf32>
    %165 = arith.mulf %149, %157 : vector<2x128xf32>
    %166 = arith.addf %164, %165 : vector<2x128xf32>
    %167 = math.tanh %166 : vector<2x128xf32>
    %168 = arith.mulf %163, %167 : vector<2x128xf32>
    %169 = tpu.concatenate %168, %134 in 1 : vector<2x128xf32>, vector<2x128xf32> -> vector<2x256xf32>
    %170 = arith.truncf %169 : vector<2x256xf32> to vector<2x256xbf16>
    %c0_29 = arith.constant 0 : index
    %c0_30 = arith.constant 0 : index
    %171 = vector.load %arg3[%c0_29, %c0_30] : memref<256x1024xbf16, #tpu.memory_space<vmem>>, vector<256x1024xbf16>
    %cst_31 = arith.constant dense<0.000000e+00> : vector<2x1024xf32>
    %172 = tpu.matmul %170, %171, %cst_31 {dimension_numbers = #tpu.dot_dimension_numbers<[1], [0], [0], [1], [0, 0, 1, 1], [], []>} : vector<2x256xbf16>, vector<256x1024xbf16>, vector<2x1024xf32> -> vector<2x1024xf32>
    %173 = vector.extract_strided_slice %172 {offsets = [0, 512], sizes = [2, 512], strides = [1, 1]} : vector<2x1024xf32> to vector<2x512xf32>
    %174 = arith.addf %173, %5 : vector<2x512xf32>
    %175 = vector.extract_strided_slice %174 {offsets = [0, 0], sizes = [2, 128], strides = [1, 1]} : vector<2x512xf32> to vector<2x128xf32>
    %176 = arith.negf %175 : vector<2x128xf32>
    %177 = math.exp %176 : vector<2x128xf32>
    %cst_32 = arith.constant 1.000000e+00 : f32
    %178 = vector.broadcast %cst_32 : f32 to vector<2x128xf32>
    %179 = arith.addf %178, %177 : vector<2x128xf32>
    %180 = arith.divf %178, %179 : vector<2x128xf32>
    %181 = vector.extract_strided_slice %174 {offsets = [0, 128], sizes = [2, 128], strides = [1, 1]} : vector<2x512xf32> to vector<2x128xf32>
    %182 = arith.negf %181 : vector<2x128xf32>
    %183 = math.exp %182 : vector<2x128xf32>
    %cst_33 = arith.constant 1.000000e+00 : f32
    %184 = vector.broadcast %cst_33 : f32 to vector<2x128xf32>
    %185 = arith.addf %184, %183 : vector<2x128xf32>
    %186 = arith.divf %184, %185 : vector<2x128xf32>
    %187 = vector.extract_strided_slice %174 {offsets = [0, 256], sizes = [2, 128], strides = [1, 1]} : vector<2x512xf32> to vector<2x128xf32>
    %188 = math.tanh %187 : vector<2x128xf32>
    %189 = vector.extract_strided_slice %174 {offsets = [0, 384], sizes = [2, 128], strides = [1, 1]} : vector<2x512xf32> to vector<2x128xf32>
    %190 = arith.negf %189 : vector<2x128xf32>
    %191 = math.exp %190 : vector<2x128xf32>
    %cst_34 = arith.constant 1.000000e+00 : f32
    %192 = vector.broadcast %cst_34 : f32 to vector<2x128xf32>
    %193 = arith.addf %192, %191 : vector<2x128xf32>
    %194 = arith.divf %192, %193 : vector<2x128xf32>
    %195 = arith.mulf %186, %132 : vector<2x128xf32>
    %196 = arith.mulf %180, %188 : vector<2x128xf32>
    %197 = arith.addf %195, %196 : vector<2x128xf32>
    %198 = math.tanh %197 : vector<2x128xf32>
    %199 = arith.mulf %194, %198 : vector<2x128xf32>
    %200 = vector.extract_strided_slice %0 {offsets = [0, 3, 0], sizes = [2, 1, 1], strides = [1, 1, 1]} : vector<2x8x1xf32> to vector<2x1x1xf32>
    %201 = vector.shape_cast %200 : vector<2x1x1xf32> to vector<2x1xf32>
    %202 = vector.broadcast %201 : vector<2x1xf32> to vector<2x512xf32>
    %203 = vector.broadcast %1 : vector<1x512xf32> to vector<2x512xf32>
    %204 = arith.mulf %202, %203 : vector<2x512xf32>
    %205 = vector.broadcast %2 : vector<1x512xf32> to vector<2x512xf32>
    %206 = arith.addf %204, %205 : vector<2x512xf32>
    %207 = vector.extract_strided_slice %172 {offsets = [0, 0], sizes = [2, 512], strides = [1, 1]} : vector<2x1024xf32> to vector<2x512xf32>
    %208 = arith.addf %206, %207 : vector<2x512xf32>
    %209 = vector.extract_strided_slice %208 {offsets = [0, 0], sizes = [2, 128], strides = [1, 1]} : vector<2x512xf32> to vector<2x128xf32>
    %210 = arith.negf %209 : vector<2x128xf32>
    %211 = math.exp %210 : vector<2x128xf32>
    %cst_35 = arith.constant 1.000000e+00 : f32
    %212 = vector.broadcast %cst_35 : f32 to vector<2x128xf32>
    %213 = arith.addf %212, %211 : vector<2x128xf32>
    %214 = arith.divf %212, %213 : vector<2x128xf32>
    %215 = vector.extract_strided_slice %208 {offsets = [0, 128], sizes = [2, 128], strides = [1, 1]} : vector<2x512xf32> to vector<2x128xf32>
    %216 = arith.negf %215 : vector<2x128xf32>
    %217 = math.exp %216 : vector<2x128xf32>
    %cst_36 = arith.constant 1.000000e+00 : f32
    %218 = vector.broadcast %cst_36 : f32 to vector<2x128xf32>
    %219 = arith.addf %218, %217 : vector<2x128xf32>
    %220 = arith.divf %218, %219 : vector<2x128xf32>
    %221 = vector.extract_strided_slice %208 {offsets = [0, 256], sizes = [2, 128], strides = [1, 1]} : vector<2x512xf32> to vector<2x128xf32>
    %222 = math.tanh %221 : vector<2x128xf32>
    %223 = vector.extract_strided_slice %208 {offsets = [0, 384], sizes = [2, 128], strides = [1, 1]} : vector<2x512xf32> to vector<2x128xf32>
    %224 = arith.negf %223 : vector<2x128xf32>
    %225 = math.exp %224 : vector<2x128xf32>
    %cst_37 = arith.constant 1.000000e+00 : f32
    %226 = vector.broadcast %cst_37 : f32 to vector<2x128xf32>
    %227 = arith.addf %226, %225 : vector<2x128xf32>
    %228 = arith.divf %226, %227 : vector<2x128xf32>
    %229 = arith.mulf %220, %166 : vector<2x128xf32>
    %230 = arith.mulf %214, %222 : vector<2x128xf32>
    %231 = arith.addf %229, %230 : vector<2x128xf32>
    %232 = math.tanh %231 : vector<2x128xf32>
    %233 = arith.mulf %228, %232 : vector<2x128xf32>
    %234 = tpu.concatenate %233, %199 in 1 : vector<2x128xf32>, vector<2x128xf32> -> vector<2x256xf32>
    %235 = arith.truncf %234 : vector<2x256xf32> to vector<2x256xbf16>
    %c0_38 = arith.constant 0 : index
    %c0_39 = arith.constant 0 : index
    %236 = vector.load %arg3[%c0_38, %c0_39] : memref<256x1024xbf16, #tpu.memory_space<vmem>>, vector<256x1024xbf16>
    %cst_40 = arith.constant dense<0.000000e+00> : vector<2x1024xf32>
    %237 = tpu.matmul %235, %236, %cst_40 {dimension_numbers = #tpu.dot_dimension_numbers<[1], [0], [0], [1], [0, 0, 1, 1], [], []>} : vector<2x256xbf16>, vector<256x1024xbf16>, vector<2x1024xf32> -> vector<2x1024xf32>
    %238 = vector.extract_strided_slice %237 {offsets = [0, 512], sizes = [2, 512], strides = [1, 1]} : vector<2x1024xf32> to vector<2x512xf32>
    %239 = arith.addf %238, %5 : vector<2x512xf32>
    %240 = vector.extract_strided_slice %239 {offsets = [0, 0], sizes = [2, 128], strides = [1, 1]} : vector<2x512xf32> to vector<2x128xf32>
    %241 = arith.negf %240 : vector<2x128xf32>
    %242 = math.exp %241 : vector<2x128xf32>
    %cst_41 = arith.constant 1.000000e+00 : f32
    %243 = vector.broadcast %cst_41 : f32 to vector<2x128xf32>
    %244 = arith.addf %243, %242 : vector<2x128xf32>
    %245 = arith.divf %243, %244 : vector<2x128xf32>
    %246 = vector.extract_strided_slice %239 {offsets = [0, 128], sizes = [2, 128], strides = [1, 1]} : vector<2x512xf32> to vector<2x128xf32>
    %247 = arith.negf %246 : vector<2x128xf32>
    %248 = math.exp %247 : vector<2x128xf32>
    %cst_42 = arith.constant 1.000000e+00 : f32
    %249 = vector.broadcast %cst_42 : f32 to vector<2x128xf32>
    %250 = arith.addf %249, %248 : vector<2x128xf32>
    %251 = arith.divf %249, %250 : vector<2x128xf32>
    %252 = vector.extract_strided_slice %239 {offsets = [0, 256], sizes = [2, 128], strides = [1, 1]} : vector<2x512xf32> to vector<2x128xf32>
    %253 = math.tanh %252 : vector<2x128xf32>
    %254 = vector.extract_strided_slice %239 {offsets = [0, 384], sizes = [2, 128], strides = [1, 1]} : vector<2x512xf32> to vector<2x128xf32>
    %255 = arith.negf %254 : vector<2x128xf32>
    %256 = math.exp %255 : vector<2x128xf32>
    %cst_43 = arith.constant 1.000000e+00 : f32
    %257 = vector.broadcast %cst_43 : f32 to vector<2x128xf32>
    %258 = arith.addf %257, %256 : vector<2x128xf32>
    %259 = arith.divf %257, %258 : vector<2x128xf32>
    %260 = arith.mulf %251, %197 : vector<2x128xf32>
    %261 = arith.mulf %245, %253 : vector<2x128xf32>
    %262 = arith.addf %260, %261 : vector<2x128xf32>
    %263 = math.tanh %262 : vector<2x128xf32>
    %264 = arith.mulf %259, %263 : vector<2x128xf32>
    %265 = vector.extract_strided_slice %0 {offsets = [0, 4, 0], sizes = [2, 1, 1], strides = [1, 1, 1]} : vector<2x8x1xf32> to vector<2x1x1xf32>
    %266 = vector.shape_cast %265 : vector<2x1x1xf32> to vector<2x1xf32>
    %267 = vector.broadcast %266 : vector<2x1xf32> to vector<2x512xf32>
    %268 = vector.broadcast %1 : vector<1x512xf32> to vector<2x512xf32>
    %269 = arith.mulf %267, %268 : vector<2x512xf32>
    %270 = vector.broadcast %2 : vector<1x512xf32> to vector<2x512xf32>
    %271 = arith.addf %269, %270 : vector<2x512xf32>
    %272 = vector.extract_strided_slice %237 {offsets = [0, 0], sizes = [2, 512], strides = [1, 1]} : vector<2x1024xf32> to vector<2x512xf32>
    %273 = arith.addf %271, %272 : vector<2x512xf32>
    %274 = vector.extract_strided_slice %273 {offsets = [0, 0], sizes = [2, 128], strides = [1, 1]} : vector<2x512xf32> to vector<2x128xf32>
    %275 = arith.negf %274 : vector<2x128xf32>
    %276 = math.exp %275 : vector<2x128xf32>
    %cst_44 = arith.constant 1.000000e+00 : f32
    %277 = vector.broadcast %cst_44 : f32 to vector<2x128xf32>
    %278 = arith.addf %277, %276 : vector<2x128xf32>
    %279 = arith.divf %277, %278 : vector<2x128xf32>
    %280 = vector.extract_strided_slice %273 {offsets = [0, 128], sizes = [2, 128], strides = [1, 1]} : vector<2x512xf32> to vector<2x128xf32>
    %281 = arith.negf %280 : vector<2x128xf32>
    %282 = math.exp %281 : vector<2x128xf32>
    %cst_45 = arith.constant 1.000000e+00 : f32
    %283 = vector.broadcast %cst_45 : f32 to vector<2x128xf32>
    %284 = arith.addf %283, %282 : vector<2x128xf32>
    %285 = arith.divf %283, %284 : vector<2x128xf32>
    %286 = vector.extract_strided_slice %273 {offsets = [0, 256], sizes = [2, 128], strides = [1, 1]} : vector<2x512xf32> to vector<2x128xf32>
    %287 = math.tanh %286 : vector<2x128xf32>
    %288 = vector.extract_strided_slice %273 {offsets = [0, 384], sizes = [2, 128], strides = [1, 1]} : vector<2x512xf32> to vector<2x128xf32>
    %289 = arith.negf %288 : vector<2x128xf32>
    %290 = math.exp %289 : vector<2x128xf32>
    %cst_46 = arith.constant 1.000000e+00 : f32
    %291 = vector.broadcast %cst_46 : f32 to vector<2x128xf32>
    %292 = arith.addf %291, %290 : vector<2x128xf32>
    %293 = arith.divf %291, %292 : vector<2x128xf32>
    %294 = arith.mulf %285, %231 : vector<2x128xf32>
    %295 = arith.mulf %279, %287 : vector<2x128xf32>
    %296 = arith.addf %294, %295 : vector<2x128xf32>
    %297 = math.tanh %296 : vector<2x128xf32>
    %298 = arith.mulf %293, %297 : vector<2x128xf32>
    %299 = tpu.concatenate %298, %264 in 1 : vector<2x128xf32>, vector<2x128xf32> -> vector<2x256xf32>
    %300 = arith.truncf %299 : vector<2x256xf32> to vector<2x256xbf16>
    %c0_47 = arith.constant 0 : index
    %c0_48 = arith.constant 0 : index
    %301 = vector.load %arg3[%c0_47, %c0_48] : memref<256x1024xbf16, #tpu.memory_space<vmem>>, vector<256x1024xbf16>
    %cst_49 = arith.constant dense<0.000000e+00> : vector<2x1024xf32>
    %302 = tpu.matmul %300, %301, %cst_49 {dimension_numbers = #tpu.dot_dimension_numbers<[1], [0], [0], [1], [0, 0, 1, 1], [], []>} : vector<2x256xbf16>, vector<256x1024xbf16>, vector<2x1024xf32> -> vector<2x1024xf32>
    %303 = vector.extract_strided_slice %302 {offsets = [0, 512], sizes = [2, 512], strides = [1, 1]} : vector<2x1024xf32> to vector<2x512xf32>
    %304 = arith.addf %303, %5 : vector<2x512xf32>
    %305 = vector.extract_strided_slice %304 {offsets = [0, 0], sizes = [2, 128], strides = [1, 1]} : vector<2x512xf32> to vector<2x128xf32>
    %306 = arith.negf %305 : vector<2x128xf32>
    %307 = math.exp %306 : vector<2x128xf32>
    %cst_50 = arith.constant 1.000000e+00 : f32
    %308 = vector.broadcast %cst_50 : f32 to vector<2x128xf32>
    %309 = arith.addf %308, %307 : vector<2x128xf32>
    %310 = arith.divf %308, %309 : vector<2x128xf32>
    %311 = vector.extract_strided_slice %304 {offsets = [0, 128], sizes = [2, 128], strides = [1, 1]} : vector<2x512xf32> to vector<2x128xf32>
    %312 = arith.negf %311 : vector<2x128xf32>
    %313 = math.exp %312 : vector<2x128xf32>
    %cst_51 = arith.constant 1.000000e+00 : f32
    %314 = vector.broadcast %cst_51 : f32 to vector<2x128xf32>
    %315 = arith.addf %314, %313 : vector<2x128xf32>
    %316 = arith.divf %314, %315 : vector<2x128xf32>
    %317 = vector.extract_strided_slice %304 {offsets = [0, 256], sizes = [2, 128], strides = [1, 1]} : vector<2x512xf32> to vector<2x128xf32>
    %318 = math.tanh %317 : vector<2x128xf32>
    %319 = vector.extract_strided_slice %304 {offsets = [0, 384], sizes = [2, 128], strides = [1, 1]} : vector<2x512xf32> to vector<2x128xf32>
    %320 = arith.negf %319 : vector<2x128xf32>
    %321 = math.exp %320 : vector<2x128xf32>
    %cst_52 = arith.constant 1.000000e+00 : f32
    %322 = vector.broadcast %cst_52 : f32 to vector<2x128xf32>
    %323 = arith.addf %322, %321 : vector<2x128xf32>
    %324 = arith.divf %322, %323 : vector<2x128xf32>
    %325 = arith.mulf %316, %262 : vector<2x128xf32>
    %326 = arith.mulf %310, %318 : vector<2x128xf32>
    %327 = arith.addf %325, %326 : vector<2x128xf32>
    %328 = math.tanh %327 : vector<2x128xf32>
    %329 = arith.mulf %324, %328 : vector<2x128xf32>
    %330 = vector.extract_strided_slice %0 {offsets = [0, 5, 0], sizes = [2, 1, 1], strides = [1, 1, 1]} : vector<2x8x1xf32> to vector<2x1x1xf32>
    %331 = vector.shape_cast %330 : vector<2x1x1xf32> to vector<2x1xf32>
    %332 = vector.broadcast %331 : vector<2x1xf32> to vector<2x512xf32>
    %333 = vector.broadcast %1 : vector<1x512xf32> to vector<2x512xf32>
    %334 = arith.mulf %332, %333 : vector<2x512xf32>
    %335 = vector.broadcast %2 : vector<1x512xf32> to vector<2x512xf32>
    %336 = arith.addf %334, %335 : vector<2x512xf32>
    %337 = vector.extract_strided_slice %302 {offsets = [0, 0], sizes = [2, 512], strides = [1, 1]} : vector<2x1024xf32> to vector<2x512xf32>
    %338 = arith.addf %336, %337 : vector<2x512xf32>
    %339 = vector.extract_strided_slice %338 {offsets = [0, 0], sizes = [2, 128], strides = [1, 1]} : vector<2x512xf32> to vector<2x128xf32>
    %340 = arith.negf %339 : vector<2x128xf32>
    %341 = math.exp %340 : vector<2x128xf32>
    %cst_53 = arith.constant 1.000000e+00 : f32
    %342 = vector.broadcast %cst_53 : f32 to vector<2x128xf32>
    %343 = arith.addf %342, %341 : vector<2x128xf32>
    %344 = arith.divf %342, %343 : vector<2x128xf32>
    %345 = vector.extract_strided_slice %338 {offsets = [0, 128], sizes = [2, 128], strides = [1, 1]} : vector<2x512xf32> to vector<2x128xf32>
    %346 = arith.negf %345 : vector<2x128xf32>
    %347 = math.exp %346 : vector<2x128xf32>
    %cst_54 = arith.constant 1.000000e+00 : f32
    %348 = vector.broadcast %cst_54 : f32 to vector<2x128xf32>
    %349 = arith.addf %348, %347 : vector<2x128xf32>
    %350 = arith.divf %348, %349 : vector<2x128xf32>
    %351 = vector.extract_strided_slice %338 {offsets = [0, 256], sizes = [2, 128], strides = [1, 1]} : vector<2x512xf32> to vector<2x128xf32>
    %352 = math.tanh %351 : vector<2x128xf32>
    %353 = vector.extract_strided_slice %338 {offsets = [0, 384], sizes = [2, 128], strides = [1, 1]} : vector<2x512xf32> to vector<2x128xf32>
    %354 = arith.negf %353 : vector<2x128xf32>
    %355 = math.exp %354 : vector<2x128xf32>
    %cst_55 = arith.constant 1.000000e+00 : f32
    %356 = vector.broadcast %cst_55 : f32 to vector<2x128xf32>
    %357 = arith.addf %356, %355 : vector<2x128xf32>
    %358 = arith.divf %356, %357 : vector<2x128xf32>
    %359 = arith.mulf %350, %296 : vector<2x128xf32>
    %360 = arith.mulf %344, %352 : vector<2x128xf32>
    %361 = arith.addf %359, %360 : vector<2x128xf32>
    %362 = math.tanh %361 : vector<2x128xf32>
    %363 = arith.mulf %358, %362 : vector<2x128xf32>
    %364 = tpu.concatenate %363, %329 in 1 : vector<2x128xf32>, vector<2x128xf32> -> vector<2x256xf32>
    %365 = arith.truncf %364 : vector<2x256xf32> to vector<2x256xbf16>
    %c0_56 = arith.constant 0 : index
    %c0_57 = arith.constant 0 : index
    %366 = vector.load %arg3[%c0_56, %c0_57] : memref<256x1024xbf16, #tpu.memory_space<vmem>>, vector<256x1024xbf16>
    %cst_58 = arith.constant dense<0.000000e+00> : vector<2x1024xf32>
    %367 = tpu.matmul %365, %366, %cst_58 {dimension_numbers = #tpu.dot_dimension_numbers<[1], [0], [0], [1], [0, 0, 1, 1], [], []>} : vector<2x256xbf16>, vector<256x1024xbf16>, vector<2x1024xf32> -> vector<2x1024xf32>
    %368 = vector.extract_strided_slice %367 {offsets = [0, 512], sizes = [2, 512], strides = [1, 1]} : vector<2x1024xf32> to vector<2x512xf32>
    %369 = arith.addf %368, %5 : vector<2x512xf32>
    %370 = vector.extract_strided_slice %369 {offsets = [0, 0], sizes = [2, 128], strides = [1, 1]} : vector<2x512xf32> to vector<2x128xf32>
    %371 = arith.negf %370 : vector<2x128xf32>
    %372 = math.exp %371 : vector<2x128xf32>
    %cst_59 = arith.constant 1.000000e+00 : f32
    %373 = vector.broadcast %cst_59 : f32 to vector<2x128xf32>
    %374 = arith.addf %373, %372 : vector<2x128xf32>
    %375 = arith.divf %373, %374 : vector<2x128xf32>
    %376 = vector.extract_strided_slice %369 {offsets = [0, 128], sizes = [2, 128], strides = [1, 1]} : vector<2x512xf32> to vector<2x128xf32>
    %377 = arith.negf %376 : vector<2x128xf32>
    %378 = math.exp %377 : vector<2x128xf32>
    %cst_60 = arith.constant 1.000000e+00 : f32
    %379 = vector.broadcast %cst_60 : f32 to vector<2x128xf32>
    %380 = arith.addf %379, %378 : vector<2x128xf32>
    %381 = arith.divf %379, %380 : vector<2x128xf32>
    %382 = vector.extract_strided_slice %369 {offsets = [0, 256], sizes = [2, 128], strides = [1, 1]} : vector<2x512xf32> to vector<2x128xf32>
    %383 = math.tanh %382 : vector<2x128xf32>
    %384 = vector.extract_strided_slice %369 {offsets = [0, 384], sizes = [2, 128], strides = [1, 1]} : vector<2x512xf32> to vector<2x128xf32>
    %385 = arith.negf %384 : vector<2x128xf32>
    %386 = math.exp %385 : vector<2x128xf32>
    %cst_61 = arith.constant 1.000000e+00 : f32
    %387 = vector.broadcast %cst_61 : f32 to vector<2x128xf32>
    %388 = arith.addf %387, %386 : vector<2x128xf32>
    %389 = arith.divf %387, %388 : vector<2x128xf32>
    %390 = arith.mulf %381, %327 : vector<2x128xf32>
    %391 = arith.mulf %375, %383 : vector<2x128xf32>
    %392 = arith.addf %390, %391 : vector<2x128xf32>
    %393 = math.tanh %392 : vector<2x128xf32>
    %394 = arith.mulf %389, %393 : vector<2x128xf32>
    %395 = vector.extract_strided_slice %0 {offsets = [0, 6, 0], sizes = [2, 1, 1], strides = [1, 1, 1]} : vector<2x8x1xf32> to vector<2x1x1xf32>
    %396 = vector.shape_cast %395 : vector<2x1x1xf32> to vector<2x1xf32>
    %397 = vector.broadcast %396 : vector<2x1xf32> to vector<2x512xf32>
    %398 = vector.broadcast %1 : vector<1x512xf32> to vector<2x512xf32>
    %399 = arith.mulf %397, %398 : vector<2x512xf32>
    %400 = vector.broadcast %2 : vector<1x512xf32> to vector<2x512xf32>
    %401 = arith.addf %399, %400 : vector<2x512xf32>
    %402 = vector.extract_strided_slice %367 {offsets = [0, 0], sizes = [2, 512], strides = [1, 1]} : vector<2x1024xf32> to vector<2x512xf32>
    %403 = arith.addf %401, %402 : vector<2x512xf32>
    %404 = vector.extract_strided_slice %403 {offsets = [0, 0], sizes = [2, 128], strides = [1, 1]} : vector<2x512xf32> to vector<2x128xf32>
    %405 = arith.negf %404 : vector<2x128xf32>
    %406 = math.exp %405 : vector<2x128xf32>
    %cst_62 = arith.constant 1.000000e+00 : f32
    %407 = vector.broadcast %cst_62 : f32 to vector<2x128xf32>
    %408 = arith.addf %407, %406 : vector<2x128xf32>
    %409 = arith.divf %407, %408 : vector<2x128xf32>
    %410 = vector.extract_strided_slice %403 {offsets = [0, 128], sizes = [2, 128], strides = [1, 1]} : vector<2x512xf32> to vector<2x128xf32>
    %411 = arith.negf %410 : vector<2x128xf32>
    %412 = math.exp %411 : vector<2x128xf32>
    %cst_63 = arith.constant 1.000000e+00 : f32
    %413 = vector.broadcast %cst_63 : f32 to vector<2x128xf32>
    %414 = arith.addf %413, %412 : vector<2x128xf32>
    %415 = arith.divf %413, %414 : vector<2x128xf32>
    %416 = vector.extract_strided_slice %403 {offsets = [0, 256], sizes = [2, 128], strides = [1, 1]} : vector<2x512xf32> to vector<2x128xf32>
    %417 = math.tanh %416 : vector<2x128xf32>
    %418 = vector.extract_strided_slice %403 {offsets = [0, 384], sizes = [2, 128], strides = [1, 1]} : vector<2x512xf32> to vector<2x128xf32>
    %419 = arith.negf %418 : vector<2x128xf32>
    %420 = math.exp %419 : vector<2x128xf32>
    %cst_64 = arith.constant 1.000000e+00 : f32
    %421 = vector.broadcast %cst_64 : f32 to vector<2x128xf32>
    %422 = arith.addf %421, %420 : vector<2x128xf32>
    %423 = arith.divf %421, %422 : vector<2x128xf32>
    %424 = arith.mulf %415, %361 : vector<2x128xf32>
    %425 = arith.mulf %409, %417 : vector<2x128xf32>
    %426 = arith.addf %424, %425 : vector<2x128xf32>
    %427 = math.tanh %426 : vector<2x128xf32>
    %428 = arith.mulf %423, %427 : vector<2x128xf32>
    %429 = tpu.concatenate %428, %394 in 1 : vector<2x128xf32>, vector<2x128xf32> -> vector<2x256xf32>
    %430 = arith.truncf %429 : vector<2x256xf32> to vector<2x256xbf16>
    %c0_65 = arith.constant 0 : index
    %c0_66 = arith.constant 0 : index
    %431 = vector.load %arg3[%c0_65, %c0_66] : memref<256x1024xbf16, #tpu.memory_space<vmem>>, vector<256x1024xbf16>
    %cst_67 = arith.constant dense<0.000000e+00> : vector<2x1024xf32>
    %432 = tpu.matmul %430, %431, %cst_67 {dimension_numbers = #tpu.dot_dimension_numbers<[1], [0], [0], [1], [0, 0, 1, 1], [], []>} : vector<2x256xbf16>, vector<256x1024xbf16>, vector<2x1024xf32> -> vector<2x1024xf32>
    %433 = vector.extract_strided_slice %432 {offsets = [0, 512], sizes = [2, 512], strides = [1, 1]} : vector<2x1024xf32> to vector<2x512xf32>
    %434 = arith.addf %433, %5 : vector<2x512xf32>
    %435 = vector.extract_strided_slice %434 {offsets = [0, 0], sizes = [2, 128], strides = [1, 1]} : vector<2x512xf32> to vector<2x128xf32>
    %436 = arith.negf %435 : vector<2x128xf32>
    %437 = math.exp %436 : vector<2x128xf32>
    %cst_68 = arith.constant 1.000000e+00 : f32
    %438 = vector.broadcast %cst_68 : f32 to vector<2x128xf32>
    %439 = arith.addf %438, %437 : vector<2x128xf32>
    %440 = arith.divf %438, %439 : vector<2x128xf32>
    %441 = vector.extract_strided_slice %434 {offsets = [0, 128], sizes = [2, 128], strides = [1, 1]} : vector<2x512xf32> to vector<2x128xf32>
    %442 = arith.negf %441 : vector<2x128xf32>
    %443 = math.exp %442 : vector<2x128xf32>
    %cst_69 = arith.constant 1.000000e+00 : f32
    %444 = vector.broadcast %cst_69 : f32 to vector<2x128xf32>
    %445 = arith.addf %444, %443 : vector<2x128xf32>
    %446 = arith.divf %444, %445 : vector<2x128xf32>
    %447 = vector.extract_strided_slice %434 {offsets = [0, 256], sizes = [2, 128], strides = [1, 1]} : vector<2x512xf32> to vector<2x128xf32>
    %448 = math.tanh %447 : vector<2x128xf32>
    %449 = vector.extract_strided_slice %434 {offsets = [0, 384], sizes = [2, 128], strides = [1, 1]} : vector<2x512xf32> to vector<2x128xf32>
    %450 = arith.negf %449 : vector<2x128xf32>
    %451 = math.exp %450 : vector<2x128xf32>
    %cst_70 = arith.constant 1.000000e+00 : f32
    %452 = vector.broadcast %cst_70 : f32 to vector<2x128xf32>
    %453 = arith.addf %452, %451 : vector<2x128xf32>
    %454 = arith.divf %452, %453 : vector<2x128xf32>
    %455 = arith.mulf %446, %392 : vector<2x128xf32>
    %456 = arith.mulf %440, %448 : vector<2x128xf32>
    %457 = arith.addf %455, %456 : vector<2x128xf32>
    %458 = math.tanh %457 : vector<2x128xf32>
    %459 = arith.mulf %454, %458 : vector<2x128xf32>
    %460 = vector.extract_strided_slice %0 {offsets = [0, 7, 0], sizes = [2, 1, 1], strides = [1, 1, 1]} : vector<2x8x1xf32> to vector<2x1x1xf32>
    %461 = vector.shape_cast %460 : vector<2x1x1xf32> to vector<2x1xf32>
    %462 = vector.broadcast %461 : vector<2x1xf32> to vector<2x512xf32>
    %463 = vector.broadcast %1 : vector<1x512xf32> to vector<2x512xf32>
    %464 = arith.mulf %462, %463 : vector<2x512xf32>
    %465 = vector.broadcast %2 : vector<1x512xf32> to vector<2x512xf32>
    %466 = arith.addf %464, %465 : vector<2x512xf32>
    %467 = vector.extract_strided_slice %432 {offsets = [0, 0], sizes = [2, 512], strides = [1, 1]} : vector<2x1024xf32> to vector<2x512xf32>
    %468 = arith.addf %466, %467 : vector<2x512xf32>
    %469 = vector.extract_strided_slice %468 {offsets = [0, 0], sizes = [2, 128], strides = [1, 1]} : vector<2x512xf32> to vector<2x128xf32>
    %470 = arith.negf %469 : vector<2x128xf32>
    %471 = math.exp %470 : vector<2x128xf32>
    %cst_71 = arith.constant 1.000000e+00 : f32
    %472 = vector.broadcast %cst_71 : f32 to vector<2x128xf32>
    %473 = arith.addf %472, %471 : vector<2x128xf32>
    %474 = arith.divf %472, %473 : vector<2x128xf32>
    %475 = vector.extract_strided_slice %468 {offsets = [0, 128], sizes = [2, 128], strides = [1, 1]} : vector<2x512xf32> to vector<2x128xf32>
    %476 = arith.negf %475 : vector<2x128xf32>
    %477 = math.exp %476 : vector<2x128xf32>
    %cst_72 = arith.constant 1.000000e+00 : f32
    %478 = vector.broadcast %cst_72 : f32 to vector<2x128xf32>
    %479 = arith.addf %478, %477 : vector<2x128xf32>
    %480 = arith.divf %478, %479 : vector<2x128xf32>
    %481 = vector.extract_strided_slice %468 {offsets = [0, 256], sizes = [2, 128], strides = [1, 1]} : vector<2x512xf32> to vector<2x128xf32>
    %482 = math.tanh %481 : vector<2x128xf32>
    %483 = vector.extract_strided_slice %468 {offsets = [0, 384], sizes = [2, 128], strides = [1, 1]} : vector<2x512xf32> to vector<2x128xf32>
    %484 = arith.negf %483 : vector<2x128xf32>
    %485 = math.exp %484 : vector<2x128xf32>
    %cst_73 = arith.constant 1.000000e+00 : f32
    %486 = vector.broadcast %cst_73 : f32 to vector<2x128xf32>
    %487 = arith.addf %486, %485 : vector<2x128xf32>
    %488 = arith.divf %486, %487 : vector<2x128xf32>
    %489 = arith.mulf %480, %426 : vector<2x128xf32>
    %490 = arith.mulf %474, %482 : vector<2x128xf32>
    %491 = arith.addf %489, %490 : vector<2x128xf32>
    %492 = math.tanh %491 : vector<2x128xf32>
    %493 = arith.mulf %488, %492 : vector<2x128xf32>
    %494 = tpu.concatenate %493, %459 in 1 : vector<2x128xf32>, vector<2x128xf32> -> vector<2x256xf32>
    %495 = arith.truncf %494 : vector<2x256xf32> to vector<2x256xbf16>
    %c0_74 = arith.constant 0 : index
    %c0_75 = arith.constant 0 : index
    %496 = vector.load %arg3[%c0_74, %c0_75] : memref<256x1024xbf16, #tpu.memory_space<vmem>>, vector<256x1024xbf16>
    %cst_76 = arith.constant dense<0.000000e+00> : vector<2x1024xf32>
    %497 = tpu.matmul %495, %496, %cst_76 {dimension_numbers = #tpu.dot_dimension_numbers<[1], [0], [0], [1], [0, 0, 1, 1], [], []>} : vector<2x256xbf16>, vector<256x1024xbf16>, vector<2x1024xf32> -> vector<2x1024xf32>
    %498 = vector.extract_strided_slice %497 {offsets = [0, 512], sizes = [2, 512], strides = [1, 1]} : vector<2x1024xf32> to vector<2x512xf32>
    %499 = arith.addf %498, %5 : vector<2x512xf32>
    %500 = vector.extract_strided_slice %499 {offsets = [0, 0], sizes = [2, 128], strides = [1, 1]} : vector<2x512xf32> to vector<2x128xf32>
    %501 = arith.negf %500 : vector<2x128xf32>
    %502 = math.exp %501 : vector<2x128xf32>
    %cst_77 = arith.constant 1.000000e+00 : f32
    %503 = vector.broadcast %cst_77 : f32 to vector<2x128xf32>
    %504 = arith.addf %503, %502 : vector<2x128xf32>
    %505 = arith.divf %503, %504 : vector<2x128xf32>
    %506 = vector.extract_strided_slice %499 {offsets = [0, 128], sizes = [2, 128], strides = [1, 1]} : vector<2x512xf32> to vector<2x128xf32>
    %507 = arith.negf %506 : vector<2x128xf32>
    %508 = math.exp %507 : vector<2x128xf32>
    %cst_78 = arith.constant 1.000000e+00 : f32
    %509 = vector.broadcast %cst_78 : f32 to vector<2x128xf32>
    %510 = arith.addf %509, %508 : vector<2x128xf32>
    %511 = arith.divf %509, %510 : vector<2x128xf32>
    %512 = vector.extract_strided_slice %499 {offsets = [0, 256], sizes = [2, 128], strides = [1, 1]} : vector<2x512xf32> to vector<2x128xf32>
    %513 = math.tanh %512 : vector<2x128xf32>
    %514 = vector.extract_strided_slice %499 {offsets = [0, 384], sizes = [2, 128], strides = [1, 1]} : vector<2x512xf32> to vector<2x128xf32>
    %515 = arith.negf %514 : vector<2x128xf32>
    %516 = math.exp %515 : vector<2x128xf32>
    %cst_79 = arith.constant 1.000000e+00 : f32
    %517 = vector.broadcast %cst_79 : f32 to vector<2x128xf32>
    %518 = arith.addf %517, %516 : vector<2x128xf32>
    %519 = arith.divf %517, %518 : vector<2x128xf32>
    %520 = arith.mulf %511, %457 : vector<2x128xf32>
    %521 = arith.mulf %505, %513 : vector<2x128xf32>
    %522 = arith.addf %520, %521 : vector<2x128xf32>
    %523 = math.tanh %522 : vector<2x128xf32>
    %524 = arith.mulf %519, %523 : vector<2x128xf32>
    %c0_80 = arith.constant 0 : index
    %c0_81 = arith.constant 0 : index
    %525 = vector.load %arg5[%c0_80, %c0_81] : memref<128x8xf32, #tpu.memory_space<vmem>>, vector<128x8xf32>
    %cst_82 = arith.constant dense<0.000000e+00> : vector<2x8xf32>
    %526 = tpu.matmul %524, %525, %cst_82 {dimension_numbers = #tpu.dot_dimension_numbers<[1], [0], [0], [1], [0, 0, 1, 1], [], []>} : vector<2x128xf32>, vector<128x8xf32>, vector<2x8xf32> -> vector<2x8xf32>
    %c0_83 = arith.constant 0 : index
    %c0_84 = arith.constant 0 : index
    %527 = vector.load %arg6[%c0_83, %c0_84] : memref<1x8xf32, #tpu.memory_space<vmem>>, vector<1x8xf32>
    %528 = vector.broadcast %527 : vector<1x8xf32> to vector<2x8xf32>
    %529 = arith.addf %526, %528 : vector<2x8xf32>
    %c0_85 = arith.constant 0 : index
    %c0_86 = arith.constant 0 : index
    %530 = vector.load %arg7[%c0_85, %c0_86] : memref<2x8xf32, #tpu.memory_space<vmem>>, vector<2x8xf32>
    tpu.vector_store %arg7[%c0_85, %c0_86], %529 {strides = array<i32>} : memref<2x8xf32, #tpu.memory_space<vmem>>, vector<2x8xf32>,
    return
  }
}

</mosaic_0001>

<llo_original>
// kernel: lstm_forward.1
$region0: #{lstm_forward.1}
  #allocation0 [shape = 'u32[]', space=smem, size = 0x4, offset = 0x4, fixed_abs, tag = 'smem constant byte address 0x4 - core index']
  #allocation1 [shape = 'u32[72,128]{1,0:T(1,128)}', space=vmem, size = 0x9000, scoped, tag = 'internal scratch']
  %s0 = inlined_call_operand.vmem [shape: f32[2,8,1], index: 0, kind: input, shape index: {}]
  %s1 = inlined_call_operand.vmem [shape: f32[1,512], index: 1, kind: input, shape index: {}]
  %s2 = inlined_call_operand.vmem [shape: f32[1,512], index: 2, kind: input, shape index: {}]
  %s3 = inlined_call_operand.hbm [shape: bf16[256,1024], index: 3, kind: input, shape index: {}]
  %s4 = inlined_call_operand.vmem [shape: f32[1,512], index: 4, kind: input, shape index: {}]
  %s5 = inlined_call_operand.vmem [shape: f32[128,8], index: 5, kind: input, shape index: {}]
  %s6 = inlined_call_operand.vmem [shape: f32[1,8], index: 6, kind: input, shape index: {}]
  %s7 = inlined_call_operand.hbm [shape: f32[2,8], index: 7, kind: output, shape index: {}]
  %s8 = sld [smem:[#allocation0]]
  $region42: #{lstm_forward.1} parent=0
    _
  %s10 = ssub.s32 1, %s8
  %s11 = scalar_select 0, %s10, %s8
  $region1: #{lstm_forward.1} parent=0
    #allocation2 [shape = 'u8[524288]{0}', space=vmem, size = 0x80000, scoped, tag = 'input window, operand 3, single buffered']
    #allocation3 [shape = 's32[1]{0}', space=sflag, size = 0x4, scoped, tag = 'scoped memory for lstm_forward.1']
    #allocation4 [shape = 's32[1]{0}', space=sflag, size = 0x4, scoped, tag = 'scoped memory for lstm_forward.1']
    #allocation5 [shape = 'u8[1024]{0}', space=vmem, size = 0x400, scoped, tag = 'output window, operand 0, single buffered']
    %12 = vsyncpa [#allocation3], 0
    %13 = vsyncpa [#allocation4], 0
    // Predicated region
    $region2: #{lstm_forward.1} parent=1 // pred_check
      _
    $region3: #{lstm_forward.1} parent=1 // pred_check_branch
      %15 = sbr.rel (0) target = $region5
    $region4: #{lstm_forward.1} parent=1 // pred_region
      _
    $region5: #{lstm_forward.1} parent=1 // pred_fallthru
      _
    // Predicated region
    $region6: #{lstm_forward.1} parent=1 // pred_check
      _
    $region7: #{lstm_forward.1} parent=1 // pred_check_branch
      %17 = sbr.rel (0) target = $region9
    $region8: #{lstm_forward.1} parent=1 // pred_region
      _
    $region9: #{lstm_forward.1} parent=1 // pred_fallthru
      _
    // Predicated region
    $region10: #{lstm_forward.1} parent=1 // pred_check
      _
    $region11: #{lstm_forward.1} parent=1 // pred_check_branch
      %19 = sbr.rel (0) target = $region13
    $region12: #{lstm_forward.1} parent=1 // pred_region
      _
    $region13: #{lstm_forward.1} parent=1 // pred_fallthru
      _
    // Predicated region
    $region14: #{lstm_forward.1} parent=1 // pred_check
      _
    $region15: #{lstm_forward.1} parent=1 // pred_check_branch
      %21 = sbr.rel (0) target = $region17
    $region16: #{lstm_forward.1} parent=1 // pred_region
      %23 = vsyncadd [#allocation3], 0
      %s24 = sshll.u32 %s3, 4
      %s25 = int_to_ptr.hbm [resolvable:$true] %s24
      %s26 = sshll.u32 [#allocation2], 4
      %s27 = int_to_ptr.vmem [resolvable:$true] %s26
      %32 = dma.hbm_to_vmem [thread:$0]  %s25, 16384, %s27, [#allocation3], 512, 512, 32
    $region17: #{lstm_forward.1} parent=1 // pred_fallthru
      _
    // Predicated region
    $region18: #{lstm_forward.1} parent=1 // pred_check
      _
    $region19: #{lstm_forward.1} parent=1 // pred_check_branch
      %34 = sbr.rel (0) target = $region21
    $region20: #{lstm_forward.1} parent=1 // pred_region
      _
    $region21: #{lstm_forward.1} parent=1 // pred_fallthru
      _
    // Predicated region
    $region22: #{lstm_forward.1} parent=1 // pred_check
      _
    $region23: #{lstm_forward.1} parent=1 // pred_check_branch
      %36 = sbr.rel (0) target = $region25
    $region24: #{lstm_forward.1} parent=1 // pred_region
      _
    $region25: #{lstm_forward.1} parent=1 // pred_fallthru
      _
    // Predicated region
    $region26: #{lstm_forward.1} parent=1 // pred_check
      _
    $region27: #{lstm_forward.1} parent=1 // pred_check_branch
      %38 = sbr.rel (0) target = $region29
    $region28: #{lstm_forward.1} parent=1 // pred_region
      _
    $region29: #{lstm_forward.1} parent=1 // pred_fallthru
      _
    // Predicated region
    $region30: #{lstm_forward.1} parent=1 // pred_check
      _
    $region31: #{lstm_forward.1} parent=1 // pred_check_branch
      %40 = sbr.rel (0) target = $region33
    $region32: #{lstm_forward.1} parent=1 // pred_region
      %42 = dma.done [#allocation3], 16384
    $region33: #{lstm_forward.1} parent=1 // pred_fallthru
      _
    %v43 = vld [vmem:[%s0] sm:$0xff]
    %v44 = vld [vmem:[%s0 + $0x8] sm:$0xff]
    %v45 = vld [vmem:[%s1] sm:$0xf]
    %v46 = vld [vmem:[%s2] sm:$0xf]
    %v47 = vld [vmem:[%s4] sm:$0xf]
    %v49 = vperm.slane %v47, 0
    %v50 = vperm.slane %v47, 1
    %v51 = vperm.slane %v47, 2
    %v52 = vperm.slane %v47, 3
    %58 = vset.pattern.permute.xlu0 0
    %59 = vperm.xlu0 %58, %v43
    %v60 = vpop.permute.xlu0 %59
    %63 = vset.pattern.permute.xlu0 0
    %64 = vperm.xlu0 %63, %v44
    %v65 = vpop.permute.xlu0 %64
    %v68 = vperm.slane %v45, 0
    %v69 = vperm.slane %v45, 1
    %v70 = vperm.slane %v45, 2
    %v71 = vperm.slane %v45, 3
    %v76 = vmul.f32 %v60, %v68
    %v77 = vmul.f32 %v60, %v69
    %v78 = vmul.f32 %v60, %v70
    %v79 = vmul.f32 %v60, %v71
    %v80 = vmul.f32 %v65, %v68
    %v81 = vmul.f32 %v65, %v69
    %v82 = vmul.f32 %v65, %v70
    %v83 = vmul.f32 %v65, %v71
    %v85 = vperm.slane %v46, 0
    %v86 = vperm.slane %v46, 1
    %v87 = vperm.slane %v46, 2
    %v88 = vperm.slane %v46, 3
    %v93 = vadd.f32 %v76, %v85
    %v94 = vadd.f32 %v77, %v86
    %v95 = vadd.f32 %v78, %v87
    %v96 = vadd.f32 %v79, %v88
    %v97 = vadd.f32 %v80, %v85
    %v98 = vadd.f32 %v81, %v86
    %v99 = vadd.f32 %v82, %v87
    %v100 = vadd.f32 %v83, %v88
    %v101 = vxor.u32 %v93, 2147483648
    %v102 = vxor.u32 %v97, 2147483648
    %v103 = vmul.f32 %v101, 1.442695
    %v104 = vpow.pop %v103
    %v105 = vmul.f32 %v102, 1.442695
    %v106 = vpow.pop %v105
    %v107 = vadd.f32 %v104, 1.0
    %v108 = vadd.f32 %v106, 1.0
    %v109 = vrcp.pop %v107
    %v110 = vmul.f32 %v107, %v109
    %v111 = vsub.f32 1.0, %v110
    %v112 = vmul.f32 %v109, %v111
    %v113 = vadd.f32 %v109, %v112
    %vm114 = vweird.f32 %v107
    %vm115 = vweird.f32 %v109
    %vm116 = vmor %vm114, %vm115
    %v117 = vsel %vm116, %v109, %v113
    %v118 = vand.u32 2147483647, %v107
    %vm119 = vcmp.eq.f32.partialorder %v118, 8.507059e+37
    %v120 = vand.u32 %v107, 2147483648
    %v121 = vor.u32 1.1754944e-38, %v120
    %v122 = vsel %vm119, %v121, %v117
    %v123 = vmul.f32 1.0, %v122
    %v124 = vrcp.pop %v108
    %v125 = vmul.f32 %v108, %v124
    %v126 = vsub.f32 1.0, %v125
    %v127 = vmul.f32 %v124, %v126
    %v128 = vadd.f32 %v124, %v127
    %vm129 = vweird.f32 %v108
    %vm130 = vweird.f32 %v124
    %vm131 = vmor %vm129, %vm130
    %v132 = vsel %vm131, %v124, %v128
    %v133 = vand.u32 2147483647, %v108
    %vm134 = vcmp.eq.f32.partialorder %v133, 8.507059e+37
    %v135 = vand.u32 %v108, 2147483648
    %v136 = vor.u32 1.1754944e-38, %v135
    %v137 = vsel %vm134, %v136, %v132
    %v138 = vmul.f32 1.0, %v137
    %v139 = vxor.u32 %v94, 2147483648
    %v140 = vxor.u32 %v98, 2147483648
    %v141 = vmul.f32 %v139, 1.442695
    %v142 = vpow.pop %v141
    %v143 = vmul.f32 %v140, 1.442695
    %v144 = vpow.pop %v143
    %v145 = vadd.f32 %v142, 1.0
    %v146 = vadd.f32 %v144, 1.0
    %v147 = vrcp.pop %v145
    %v148 = vmul.f32 %v145, %v147
    %v149 = vsub.f32 1.0, %v148
    %v150 = vmul.f32 %v147, %v149
    %v151 = vadd.f32 %v147, %v150
    %vm152 = vweird.f32 %v145
    %vm153 = vweird.f32 %v147
    %vm154 = vmor %vm152, %vm153
    %v155 = vsel %vm154, %v147, %v151
    %v156 = vand.u32 2147483647, %v145
    %vm157 = vcmp.eq.f32.partialorder %v156, 8.507059e+37
    %v158 = vand.u32 %v145, 2147483648
    %v159 = vor.u32 1.1754944e-38, %v158
    %v160 = vsel %vm157, %v159, %v155
    %v161 = vmul.f32 1.0, %v160
    %v162 = vrcp.pop %v146
    %v163 = vmul.f32 %v146, %v162
    %v164 = vsub.f32 1.0, %v163
    %v165 = vmul.f32 %v162, %v164
    %v166 = vadd.f32 %v162, %v165
    %vm167 = vweird.f32 %v146
    %vm168 = vweird.f32 %v162
    %vm169 = vmor %vm167, %vm168
    %v170 = vsel %vm169, %v162, %v166
    %v171 = vand.u32 2147483647, %v146
    %vm172 = vcmp.eq.f32.partialorder %v171, 8.507059e+37
    %v173 = vand.u32 %v146, 2147483648
    %v174 = vor.u32 1.1754944e-38, %v173
    %v175 = vsel %vm172, %v174, %v170
    %v176 = vmul.f32 1.0, %v175
    %v177 = vtanh.pop %v95
    %v178 = vtanh.pop %v99
    %v179 = vxor.u32 %v96, 2147483648
    %v180 = vxor.u32 %v100, 2147483648
    %v181 = vmul.f32 %v179, 1.442695
    %v182 = vpow.pop %v181
    %v183 = vmul.f32 %v180, 1.442695
    %v184 = vpow.pop %v183
    %v185 = vadd.f32 %v182, 1.0
    %v186 = vadd.f32 %v184, 1.0
    %v187 = vrcp.pop %v185
    %v188 = vmul.f32 %v185, %v187
    %v189 = vsub.f32 1.0, %v188
    %v190 = vmul.f32 %v187, %v189
    %v191 = vadd.f32 %v187, %v190
    %vm192 = vweird.f32 %v185
    %vm193 = vweird.f32 %v187
    %vm194 = vmor %vm192, %vm193
    %v195 = vsel %vm194, %v187, %v191
    %v196 = vand.u32 2147483647, %v185
    %vm197 = vcmp.eq.f32.partialorder %v196, 8.507059e+37
    %v198 = vand.u32 %v185, 2147483648
    %v199 = vor.u32 1.1754944e-38, %v198
    %v200 = vsel %vm197, %v199, %v195
    %v201 = vmul.f32 1.0, %v200
    %v202 = vrcp.pop %v186
    %v203 = vmul.f32 %v186, %v202
    %v204 = vsub.f32 1.0, %v203
    %v205 = vmul.f32 %v202, %v204
    %v206 = vadd.f32 %v202, %v205
    %vm207 = vweird.f32 %v186
    %vm208 = vweird.f32 %v202
    %vm209 = vmor %vm207, %vm208
    %v210 = vsel %vm209, %v202, %v206
    %v211 = vand.u32 2147483647, %v186
    %vm212 = vcmp.eq.f32.partialorder %v211, 8.507059e+37
    %v213 = vand.u32 %v186, 2147483648
    %v214 = vor.u32 1.1754944e-38, %v213
    %v215 = vsel %vm212, %v214, %v210
    %v216 = vmul.f32 1.0, %v215
    %v217 = vmul.f32 %v161, 0.0
    %v218 = vmul.f32 %v176, 0.0
    %v219 = vmul.f32 %v123, %v177
    %v220 = vmul.f32 %v138, %v178
    %v221 = vadd.f32 %v217, %v219
    %v222 = vadd.f32 %v218, %v220
    %v223 = vtanh.pop %v221
    %v224 = vtanh.pop %v222
    %v225 = vmul.f32 %v201, %v223
    %v226 = vmul.f32 %v216, %v224
    %v229 = vrot.slane %v226, 7
    %vm230 = vcmask 1041409
    %v231 = vsel %vm230, %v229, %v225
    %v233 = vpack.c.bf16 %v231, %v231
    %v234 = vpack.c.bf16 0.0, 0.0
    %v235 = vld [vmem:[#allocation2] sm:$0xff]
    %v236 = vld [vmem:[#allocation2 + $0x8] sm:$0xff]
    %v237 = vld [vmem:[#allocation2 + $0x10] sm:$0xff]
    %v238 = vld [vmem:[#allocation2 + $0x18] sm:$0xff]
    %v239 = vld [vmem:[#allocation2 + $0x20] sm:$0xff]
    %v240 = vld [vmem:[#allocation2 + $0x28] sm:$0xff]
    %v241 = vld [vmem:[#allocation2 + $0x30] sm:$0xff]
    %v242 = vld [vmem:[#allocation2 + $0x38] sm:$0xff]
    %v243 = vld [vmem:[#allocation2 + $0x40] sm:$0xff]
    %v244 = vld [vmem:[#allocation2 + $0x48] sm:$0xff]
    %v245 = vld [vmem:[#allocation2 + $0x50] sm:$0xff]
    %v246 = vld [vmem:[#allocation2 + $0x58] sm:$0xff]
    %v247 = vld [vmem:[#allocation2 + $0x60] sm:$0xff]
    %v248 = vld [vmem:[#allocation2 + $0x68] sm:$0xff]
    %v249 = vld [vmem:[#allocation2 + $0x70] sm:$0xff]
    %v250 = vld [vmem:[#allocation2 + $0x78] sm:$0xff]
    %v251 = vld [vmem:[#allocation2 + $0x80] sm:$0xff]
    %v252 = vld [vmem:[#allocation2 + $0x88] sm:$0xff]
    %v253 = vld [vmem:[#allocation2 + $0x90] sm:$0xff]
    %v254 = vld [vmem:[#allocation2 + $0x98] sm:$0xff]
    %v255 = vld [vmem:[#allocation2 + $0xa0] sm:$0xff]
    %v256 = vld [vmem:[#allocation2 + $0xa8] sm:$0xff]
    %v257 = vld [vmem:[#allocation2 + $0xb0] sm:$0xff]
    %v258 = vld [vmem:[#allocation2 + $0xb8] sm:$0xff]
    %v259 = vld [vmem:[#allocation2 + $0xc0] sm:$0xff]
    %v260 = vld [vmem:[#allocation2 + $0xc8] sm:$0xff]
    %v261 = vld [vmem:[#allocation2 + $0xd0] sm:$0xff]
    %v262 = vld [vmem:[#allocation2 + $0xd8] sm:$0xff]
    %v263 = vld [vmem:[#allocation2 + $0xe0] sm:$0xff]
    %v264 = vld [vmem:[#allocation2 + $0xe8] sm:$0xff]
    %v265 = vld [vmem:[#allocation2 + $0xf0] sm:$0xff]
    %v266 = vld [vmem:[#allocation2 + $0xf8] sm:$0xff]
    %v267 = vld [vmem:[#allocation2 + $0x100] sm:$0xff]
    %v268 = vld [vmem:[#allocation2 + $0x108] sm:$0xff]
    %v269 = vld [vmem:[#allocation2 + $0x110] sm:$0xff]
    %v270 = vld [vmem:[#allocation2 + $0x118] sm:$0xff]
    %v271 = vld [vmem:[#allocation2 + $0x120] sm:$0xff]
    %v272 = vld [vmem:[#allocation2 + $0x128] sm:$0xff]
    %v273 = vld [vmem:[#allocation2 + $0x130] sm:$0xff]
    %v274 = vld [vmem:[#allocation2 + $0x138] sm:$0xff]
    %v275 = vld [vmem:[#allocation2 + $0x140] sm:$0xff]
    %v276 = vld [vmem:[#allocation2 + $0x148] sm:$0xff]
    %v277 = vld [vmem:[#allocation2 + $0x150] sm:$0xff]
    %v278 = vld [vmem:[#allocation2 + $0x158] sm:$0xff]
    %v279 = vld [vmem:[#allocation2 + $0x160] sm:$0xff]
    %v280 = vld [vmem:[#allocation2 + $0x168] sm:$0xff]
    %v281 = vld [vmem:[#allocation2 + $0x170] sm:$0xff]
    %v282 = vld [vmem:[#allocation2 + $0x178] sm:$0xff]
    %v283 = vld [vmem:[#allocation2 + $0x180] sm:$0xff]
    %v284 = vld [vmem:[#allocation2 + $0x188] sm:$0xff]
    %v285 = vld [vmem:[#allocation2 + $0x190] sm:$0xff]
    %v286 = vld [vmem:[#allocation2 + $0x198] sm:$0xff]
    %v287 = vld [vmem:[#allocation2 + $0x1a0] sm:$0xff]
    %v288 = vld [vmem:[#allocation2 + $0x1a8] sm:$0xff]
    %v289 = vld [vmem:[#allocation2 + $0x1b0] sm:$0xff]
    %v290 = vld [vmem:[#allocation2 + $0x1b8] sm:$0xff]
    %v291 = vld [vmem:[#allocation2 + $0x1c0] sm:$0xff]
    %v292 = vld [vmem:[#allocation2 + $0x1c8] sm:$0xff]
    %v293 = vld [vmem:[#allocation2 + $0x1d0] sm:$0xff]
    %v294 = vld [vmem:[#allocation2 + $0x1d8] sm:$0xff]
    %v295 = vld [vmem:[#allocation2 + $0x1e0] sm:$0xff]
    %v296 = vld [vmem:[#allocation2 + $0x1e8] sm:$0xff]
    %v297 = vld [vmem:[#allocation2 + $0x1f0] sm:$0xff]
    %v298 = vld [vmem:[#allocation2 + $0x1f8] sm:$0xff]
    %v299 = vld [vmem:[#allocation2 + $0x200] sm:$0xff]
    %v300 = vld [vmem:[#allocation2 + $0x208] sm:$0xff]
    %v301 = vld [vmem:[#allocation2 + $0x210] sm:$0xff]
    %v302 = vld [vmem:[#allocation2 + $0x218] sm:$0xff]
    %v303 = vld [vmem:[#allocation2 + $0x220] sm:$0xff]
    %v304 = vld [vmem:[#allocation2 + $0x228] sm:$0xff]
    %v305 = vld [vmem:[#allocation2 + $0x230] sm:$0xff]
    %v306 = vld [vmem:[#allocation2 + $0x238] sm:$0xff]
    %v307 = vld [vmem:[#allocation2 + $0x240] sm:$0xff]
    %v308 = vld [vmem:[#allocation2 + $0x248] sm:$0xff]
    %v309 = vld [vmem:[#allocation2 + $0x250] sm:$0xff]
    %v310 = vld [vmem:[#allocation2 + $0x258] sm:$0xff]
    %v311 = vld [vmem:[#allocation2 + $0x260] sm:$0xff]
    %v312 = vld [vmem:[#allocation2 + $0x268] sm:$0xff]
    %v313 = vld [vmem:[#allocation2 + $0x270] sm:$0xff]
    %v314 = vld [vmem:[#allocation2 + $0x278] sm:$0xff]
    %v315 = vld [vmem:[#allocation2 + $0x280] sm:$0xff]
    %v316 = vld [vmem:[#allocation2 + $0x288] sm:$0xff]
    %v317 = vld [vmem:[#allocation2 + $0x290] sm:$0xff]
    %v318 = vld [vmem:[#allocation2 + $0x298] sm:$0xff]
    %v319 = vld [vmem:[#allocation2 + $0x2a0] sm:$0xff]
    %v320 = vld [vmem:[#allocation2 + $0x2a8] sm:$0xff]
    %v321 = vld [vmem:[#allocation2 + $0x2b0] sm:$0xff]
    %v322 = vld [vmem:[#allocation2 + $0x2b8] sm:$0xff]
    %v323 = vld [vmem:[#allocation2 + $0x2c0] sm:$0xff]
    %v324 = vld [vmem:[#allocation2 + $0x2c8] sm:$0xff]
    %v325 = vld [vmem:[#allocation2 + $0x2d0] sm:$0xff]
    %v326 = vld [vmem:[#allocation2 + $0x2d8] sm:$0xff]
    %v327 = vld [vmem:[#allocation2 + $0x2e0] sm:$0xff]
    %v328 = vld [vmem:[#allocation2 + $0x2e8] sm:$0xff]
    %v329 = vld [vmem:[#allocation2 + $0x2f0] sm:$0xff]
    %v330 = vld [vmem:[#allocation2 + $0x2f8] sm:$0xff]
    %v331 = vld [vmem:[#allocation2 + $0x300] sm:$0xff]
    %v332 = vld [vmem:[#allocation2 + $0x308] sm:$0xff]
    %v333 = vld [vmem:[#allocation2 + $0x310] sm:$0xff]
    %v334 = vld [vmem:[#allocation2 + $0x318] sm:$0xff]
    %v335 = vld [vmem:[#allocation2 + $0x320] sm:$0xff]
    %v336 = vld [vmem:[#allocation2 + $0x328] sm:$0xff]
    %v337 = vld [vmem:[#allocation2 + $0x330] sm:$0xff]
    %v338 = vld [vmem:[#allocation2 + $0x338] sm:$0xff]
    %v339 = vld [vmem:[#allocation2 + $0x340] sm:$0xff]
    %v340 = vld [vmem:[#allocation2 + $0x348] sm:$0xff]
    %v341 = vld [vmem:[#allocation2 + $0x350] sm:$0xff]
    %v342 = vld [vmem:[#allocation2 + $0x358] sm:$0xff]
    %v343 = vld [vmem:[#allocation2 + $0x360] sm:$0xff]
    %v344 = vld [vmem:[#allocation2 + $0x368] sm:$0xff]
    %v345 = vld [vmem:[#allocation2 + $0x370] sm:$0xff]
    %v346 = vld [vmem:[#allocation2 + $0x378] sm:$0xff]
    %v347 = vld [vmem:[#allocation2 + $0x380] sm:$0xff]
    %v348 = vld [vmem:[#allocation2 + $0x388] sm:$0xff]
    %v349 = vld [vmem:[#allocation2 + $0x390] sm:$0xff]
    %v350 = vld [vmem:[#allocation2 + $0x398] sm:$0xff]
    %v351 = vld [vmem:[#allocation2 + $0x3a0] sm:$0xff]
    %v352 = vld [vmem:[#allocation2 + $0x3a8] sm:$0xff]
    %v353 = vld [vmem:[#allocation2 + $0x3b0] sm:$0xff]
    %v354 = vld [vmem:[#allocation2 + $0x3b8] sm:$0xff]
    %v355 = vld [vmem:[#allocation2 + $0x3c0] sm:$0xff]
    %v356 = vld [vmem:[#allocation2 + $0x3c8] sm:$0xff]
    %v357 = vld [vmem:[#allocation2 + $0x3d0] sm:$0xff]
    %v358 = vld [vmem:[#allocation2 + $0x3d8] sm:$0xff]
    %v359 = vld [vmem:[#allocation2 + $0x3e0] sm:$0xff]
    %v360 = vld [vmem:[#allocation2 + $0x3e8] sm:$0xff]
    %v361 = vld [vmem:[#allocation2 + $0x3f0] sm:$0xff]
    %v362 = vld [vmem:[#allocation2 + $0x3f8] sm:$0xff]
    %v491 = vunpack.c.l.b16 %v235
    %v492 = vunpack.c.h.b16 %v235
    %v493 = vunpack.c.l.b16 %v236
    %v494 = vunpack.c.h.b16 %v236
    %v495 = vunpack.c.l.b16 %v237
    %v496 = vunpack.c.h.b16 %v237
    %v497 = vunpack.c.l.b16 %v238
    %v498 = vunpack.c.h.b16 %v238
    %v499 = vunpack.c.l.b16 %v239
    %v500 = vunpack.c.h.b16 %v239
    %v501 = vunpack.c.l.b16 %v240
    %v502 = vunpack.c.h.b16 %v240
    %v503 = vunpack.c.l.b16 %v241
    %v504 = vunpack.c.h.b16 %v241
    %v505 = vunpack.c.l.b16 %v242
    %v506 = vunpack.c.h.b16 %v242
    %v507 = vunpack.c.l.b16 %v243
    %v508 = vunpack.c.h.b16 %v243
    %v509 = vunpack.c.l.b16 %v244
    %v510 = vunpack.c.h.b16 %v244
    %v511 = vunpack.c.l.b16 %v245
    %v512 = vunpack.c.h.b16 %v245
    %v513 = vunpack.c.l.b16 %v246
    %v514 = vunpack.c.h.b16 %v246
    %v515 = vunpack.c.l.b16 %v247
    %v516 = vunpack.c.h.b16 %v247
    %v517 = vunpack.c.l.b16 %v248
    %v518 = vunpack.c.h.b16 %v248
    %v519 = vunpack.c.l.b16 %v249
    %v520 = vunpack.c.h.b16 %v249
    %v521 = vunpack.c.l.b16 %v250
    %v522 = vunpack.c.h.b16 %v250
    %v523 = vunpack.c.l.b16 %v251
    %v524 = vunpack.c.h.b16 %v251
    %v525 = vunpack.c.l.b16 %v252
    %v526 = vunpack.c.h.b16 %v252
    %v527 = vunpack.c.l.b16 %v253
    %v528 = vunpack.c.h.b16 %v253
    %v529 = vunpack.c.l.b16 %v254
    %v530 = vunpack.c.h.b16 %v254
    %v531 = vunpack.c.l.b16 %v255
    %v532 = vunpack.c.h.b16 %v255
    %v533 = vunpack.c.l.b16 %v256
    %v534 = vunpack.c.h.b16 %v256
    %v535 = vunpack.c.l.b16 %v257
    %v536 = vunpack.c.h.b16 %v257
    %v537 = vunpack.c.l.b16 %v258
    %v538 = vunpack.c.h.b16 %v258
    %v539 = vunpack.c.l.b16 %v259
    %v540 = vunpack.c.h.b16 %v259
    %v541 = vunpack.c.l.b16 %v260
    %v542 = vunpack.c.h.b16 %v260
    %v543 = vunpack.c.l.b16 %v261
    %v544 = vunpack.c.h.b16 %v261
    %v545 = vunpack.c.l.b16 %v262
    %v546 = vunpack.c.h.b16 %v262
    %v547 = vunpack.c.l.b16 %v263
    %v548 = vunpack.c.h.b16 %v263
    %v549 = vunpack.c.l.b16 %v264
    %v550 = vunpack.c.h.b16 %v264
    %v551 = vunpack.c.l.b16 %v265
    %v552 = vunpack.c.h.b16 %v265
    %v553 = vunpack.c.l.b16 %v266
    %v554 = vunpack.c.h.b16 %v266
    %v555 = vunpack.c.l.b16 %v267
    %v556 = vunpack.c.h.b16 %v267
    %v557 = vunpack.c.l.b16 %v268
    %v558 = vunpack.c.h.b16 %v268
    %v559 = vunpack.c.l.b16 %v269
    %v560 = vunpack.c.h.b16 %v269
    %v561 = vunpack.c.l.b16 %v270
    %v562 = vunpack.c.h.b16 %v270
    %v563 = vunpack.c.l.b16 %v271
    %v564 = vunpack.c.h.b16 %v271
    %v565 = vunpack.c.l.b16 %v272
    %v566 = vunpack.c.h.b16 %v272
    %v567 = vunpack.c.l.b16 %v273
    %v568 = vunpack.c.h.b16 %v273
    %v569 = vunpack.c.l.b16 %v274
    %v570 = vunpack.c.h.b16 %v274
    %v571 = vunpack.c.l.b16 %v275
    %v572 = vunpack.c.h.b16 %v275
    %v573 = vunpack.c.l.b16 %v276
    %v574 = vunpack.c.h.b16 %v276
    %v575 = vunpack.c.l.b16 %v277
    %v576 = vunpack.c.h.b16 %v277
    %v577 = vunpack.c.l.b16 %v278
    %v578 = vunpack.c.h.b16 %v278
    %v579 = vunpack.c.l.b16 %v279
    %v580 = vunpack.c.h.b16 %v279
    %v581 = vunpack.c.l.b16 %v280
    %v582 = vunpack.c.h.b16 %v280
    %v583 = vunpack.c.l.b16 %v281
    %v584 = vunpack.c.h.b16 %v281
    %v585 = vunpack.c.l.b16 %v282
    %v586 = vunpack.c.h.b16 %v282
    %v587 = vunpack.c.l.b16 %v283
    %v588 = vunpack.c.h.b16 %v283
    %v589 = vunpack.c.l.b16 %v284
    %v590 = vunpack.c.h.b16 %v284
    %v591 = vunpack.c.l.b16 %v285
    %v592 = vunpack.c.h.b16 %v285
    %v593 = vunpack.c.l.b16 %v286
    %v594 = vunpack.c.h.b16 %v286
    %v595 = vunpack.c.l.b16 %v287
    %v596 = vunpack.c.h.b16 %v287
    %v597 = vunpack.c.l.b16 %v288
    %v598 = vunpack.c.h.b16 %v288
    %v599 = vunpack.c.l.b16 %v289
    %v600 = vunpack.c.h.b16 %v289
    %v601 = vunpack.c.l.b16 %v290
    %v602 = vunpack.c.h.b16 %v290
    %v603 = vunpack.c.l.b16 %v291
    %v604 = vunpack.c.h.b16 %v291
    %v605 = vunpack.c.l.b16 %v292
    %v606 = vunpack.c.h.b16 %v292
    %v607 = vunpack.c.l.b16 %v293
    %v608 = vunpack.c.h.b16 %v293
    %v609 = vunpack.c.l.b16 %v294
    %v610 = vunpack.c.h.b16 %v294
    %v611 = vunpack.c.l.b16 %v295
    %v612 = vunpack.c.h.b16 %v295
    %v613 = vunpack.c.l.b16 %v296
    %v614 = vunpack.c.h.b16 %v296
    %v615 = vunpack.c.l.b16 %v297
    %v616 = vunpack.c.h.b16 %v297
    %v617 = vunpack.c.l.b16 %v298
    %v618 = vunpack.c.h.b16 %v298
    %v619 = vunpack.c.l.b16 %v299
    %v620 = vunpack.c.h.b16 %v299
    %v621 = vunpack.c.l.b16 %v300
    %v622 = vunpack.c.h.b16 %v300
    %v623 = vunpack.c.l.b16 %v301
    %v624 = vunpack.c.h.b16 %v301
    %v625 = vunpack.c.l.b16 %v302
    %v626 = vunpack.c.h.b16 %v302
    %v627 = vunpack.c.l.b16 %v303
    %v628 = vunpack.c.h.b16 %v303
    %v629 = vunpack.c.l.b16 %v304
    %v630 = vunpack.c.h.b16 %v304
    %v631 = vunpack.c.l.b16 %v305
    %v632 = vunpack.c.h.b16 %v305
    %v633 = vunpack.c.l.b16 %v306
    %v634 = vunpack.c.h.b16 %v306
    %v635 = vunpack.c.l.b16 %v307
    %v636 = vunpack.c.h.b16 %v307
    %v637 = vunpack.c.l.b16 %v308
    %v638 = vunpack.c.h.b16 %v308
    %v639 = vunpack.c.l.b16 %v309
    %v640 = vunpack.c.h.b16 %v309
    %v641 = vunpack.c.l.b16 %v310
    %v642 = vunpack.c.h.b16 %v310
    %v643 = vunpack.c.l.b16 %v311
    %v644 = vunpack.c.h.b16 %v311
    %v645 = vunpack.c.l.b16 %v312
    %v646 = vunpack.c.h.b16 %v312
    %v647 = vunpack.c.l.b16 %v313
    %v648 = vunpack.c.h.b16 %v313
    %v649 = vunpack.c.l.b16 %v314
    %v650 = vunpack.c.h.b16 %v314
    %v651 = vunpack.c.l.b16 %v315
    %v652 = vunpack.c.h.b16 %v315
    %v653 = vunpack.c.l.b16 %v316
    %v654 = vunpack.c.h.b16 %v316
    %v655 = vunpack.c.l.b16 %v317
    %v656 = vunpack.c.h.b16 %v317
    %v657 = vunpack.c.l.b16 %v318
    %v658 = vunpack.c.h.b16 %v318
    %v659 = vunpack.c.l.b16 %v319
    %v660 = vunpack.c.h.b16 %v319
    %v661 = vunpack.c.l.b16 %v320
    %v662 = vunpack.c.h.b16 %v320
    %v663 = vunpack.c.l.b16 %v321
    %v664 = vunpack.c.h.b16 %v321
    %v665 = vunpack.c.l.b16 %v322
    %v666 = vunpack.c.h.b16 %v322
    %v667 = vunpack.c.l.b16 %v323
    %v668 = vunpack.c.h.b16 %v323
    %v669 = vunpack.c.l.b16 %v324
    %v670 = vunpack.c.h.b16 %v324
    %v671 = vunpack.c.l.b16 %v325
    %v672 = vunpack.c.h.b16 %v325
    %v673 = vunpack.c.l.b16 %v326
    %v674 = vunpack.c.h.b16 %v326
    %v675 = vunpack.c.l.b16 %v327
    %v676 = vunpack.c.h.b16 %v327
    %v677 = vunpack.c.l.b16 %v328
    %v678 = vunpack.c.h.b16 %v328
    %v679 = vunpack.c.l.b16 %v329
    %v680 = vunpack.c.h.b16 %v329
    %v681 = vunpack.c.l.b16 %v330
    %v682 = vunpack.c.h.b16 %v330
    %v683 = vunpack.c.l.b16 %v331
    %v684 = vunpack.c.h.b16 %v331
    %v685 = vunpack.c.l.b16 %v332
    %v686 = vunpack.c.h.b16 %v332
    %v687 = vunpack.c.l.b16 %v333
    %v688 = vunpack.c.h.b16 %v333
    %v689 = vunpack.c.l.b16 %v334
    %v690 = vunpack.c.h.b16 %v334
    %v691 = vunpack.c.l.b16 %v335
    %v692 = vunpack.c.h.b16 %v335
    %v693 = vunpack.c.l.b16 %v336
    %v694 = vunpack.c.h.b16 %v336
    %v695 = vunpack.c.l.b16 %v337
    %v696 = vunpack.c.h.b16 %v337
    %v697 = vunpack.c.l.b16 %v338
    %v698 = vunpack.c.h.b16 %v338
    %v699 = vunpack.c.l.b16 %v339
    %v700 = vunpack.c.h.b16 %v339
    %v701 = vunpack.c.l.b16 %v340
    %v702 = vunpack.c.h.b16 %v340
    %v703 = vunpack.c.l.b16 %v341
    %v704 = vunpack.c.h.b16 %v341
    %v705 = vunpack.c.l.b16 %v342
    %v706 = vunpack.c.h.b16 %v342
    %v707 = vunpack.c.l.b16 %v343
    %v708 = vunpack.c.h.b16 %v343
    %v709 = vunpack.c.l.b16 %v344
    %v710 = vunpack.c.h.b16 %v344
    %v711 = vunpack.c.l.b16 %v345
    %v712 = vunpack.c.h.b16 %v345
    %v713 = vunpack.c.l.b16 %v346
    %v714 = vunpack.c.h.b16 %v346
    %v715 = vunpack.c.l.b16 %v347
    %v716 = vunpack.c.h.b16 %v347
    %v717 = vunpack.c.l.b16 %v348
    %v718 = vunpack.c.h.b16 %v348
    %v719 = vunpack.c.l.b16 %v349
    %v720 = vunpack.c.h.b16 %v349
    %v721 = vunpack.c.l.b16 %v350
    %v722 = vunpack.c.h.b16 %v350
    %v723 = vunpack.c.l.b16 %v351
    %v724 = vunpack.c.h.b16 %v351
    %v725 = vunpack.c.l.b16 %v352
    %v726 = vunpack.c.h.b16 %v352
    %v727 = vunpack.c.l.b16 %v353
    %v728 = vunpack.c.h.b16 %v353
    %v729 = vunpack.c.l.b16 %v354
    %v730 = vunpack.c.h.b16 %v354
    %v731 = vunpack.c.l.b16 %v355
    %v732 = vunpack.c.h.b16 %v355
    %v733 = vunpack.c.l.b16 %v356
    %v734 = vunpack.c.h.b16 %v356
    %v735 = vunpack.c.l.b16 %v357
    %v736 = vunpack.c.h.b16 %v357
    %v737 = vunpack.c.l.b16 %v358
    %v738 = vunpack.c.h.b16 %v358
    %v739 = vunpack.c.l.b16 %v359
    %v740 = vunpack.c.h.b16 %v359
    %v741 = vunpack.c.l.b16 %v360
    %v742 = vunpack.c.h.b16 %v360
    %v743 = vunpack.c.l.b16 %v361
    %v744 = vunpack.c.h.b16 %v361
    %v745 = vunpack.c.l.b16 %v362
    %v746 = vunpack.c.h.b16 %v362
    %v747 = vpack.c.b16 %v499, %v491
    %v748 = vpack.c.b16 %v500, %v492
    %v749 = vpack.c.b16 %v501, %v493
    %v750 = vpack.c.b16 %v502, %v494
    %v751 = vpack.c.b16 %v503, %v495
    %v752 = vpack.c.b16 %v504, %v496
    %v753 = vpack.c.b16 %v505, %v497
    %v754 = vpack.c.b16 %v506, %v498
    %v755 = vpack.c.b16 %v515, %v507
    %v756 = vpack.c.b16 %v516, %v508
    %v757 = vpack.c.b16 %v517, %v509
    %v758 = vpack.c.b16 %v518, %v510
    %v759 = vpack.c.b16 %v519, %v511
    %v760 = vpack.c.b16 %v520, %v512
    %v761 = vpack.c.b16 %v521, %v513
    %v762 = vpack.c.b16 %v522, %v514
    %v763 = vpack.c.b16 %v531, %v523
    %v764 = vpack.c.b16 %v532, %v524
    %v765 = vpack.c.b16 %v533, %v525
    %v766 = vpack.c.b16 %v534, %v526
    %v767 = vpack.c.b16 %v535, %v527
    %v768 = vpack.c.b16 %v536, %v528
    %v769 = vpack.c.b16 %v537, %v529
    %v770 = vpack.c.b16 %v538, %v530
    %v771 = vpack.c.b16 %v547, %v539
    %v772 = vpack.c.b16 %v548, %v540
    %v773 = vpack.c.b16 %v549, %v541
    %v774 = vpack.c.b16 %v550, %v542
    %v775 = vpack.c.b16 %v551, %v543
    %v776 = vpack.c.b16 %v552, %v544
    %v777 = vpack.c.b16 %v553, %v545
    %v778 = vpack.c.b16 %v554, %v546
    %v779 = vpack.c.b16 %v563, %v555
    %v780 = vpack.c.b16 %v564, %v556
    %v781 = vpack.c.b16 %v565, %v557
    %v782 = vpack.c.b16 %v566, %v558
    %v783 = vpack.c.b16 %v567, %v559
    %v784 = vpack.c.b16 %v568, %v560
    %v785 = vpack.c.b16 %v569, %v561
    %v786 = vpack.c.b16 %v570, %v562
    %v787 = vpack.c.b16 %v579, %v571
    %v788 = vpack.c.b16 %v580, %v572
    %v789 = vpack.c.b16 %v581, %v573
    %v790 = vpack.c.b16 %v582, %v574
    %v791 = vpack.c.b16 %v583, %v575
    %v792 = vpack.c.b16 %v584, %v576
    %v793 = vpack.c.b16 %v585, %v577
    %v794 = vpack.c.b16 %v586, %v578
    %v795 = vpack.c.b16 %v595, %v587
    %v796 = vpack.c.b16 %v596, %v588
    %v797 = vpack.c.b16 %v597, %v589
    %v798 = vpack.c.b16 %v598, %v590
    %v799 = vpack.c.b16 %v599, %v591
    %v800 = vpack.c.b16 %v600, %v592
    %v801 = vpack.c.b16 %v601, %v593
    %v802 = vpack.c.b16 %v602, %v594
    %v803 = vpack.c.b16 %v611, %v603
    %v804 = vpack.c.b16 %v612, %v604
    %v805 = vpack.c.b16 %v613, %v605
    %v806 = vpack.c.b16 %v614, %v606
    %v807 = vpack.c.b16 %v615, %v607
    %v808 = vpack.c.b16 %v616, %v608
    %v809 = vpack.c.b16 %v617, %v609
    %v810 = vpack.c.b16 %v618, %v610
    %v811 = vpack.c.b16 %v627, %v619
    %v812 = vpack.c.b16 %v628, %v620
    %v813 = vpack.c.b16 %v629, %v621
    %v814 = vpack.c.b16 %v630, %v622
    %v815 = vpack.c.b16 %v631, %v623
    %v816 = vpack.c.b16 %v632, %v624
    %v817 = vpack.c.b16 %v633, %v625
    %v818 = vpack.c.b16 %v634, %v626
    %v819 = vpack.c.b16 %v643, %v635
    %v820 = vpack.c.b16 %v644, %v636
    %v821 = vpack.c.b16 %v645, %v637
    %v822 = vpack.c.b16 %v646, %v638
    %v823 = vpack.c.b16 %v647, %v639
    %v824 = vpack.c.b16 %v648, %v640
    %v825 = vpack.c.b16 %v649, %v641
    %v826 = vpack.c.b16 %v650, %v642
    %v827 = vpack.c.b16 %v659, %v651
    %v828 = vpack.c.b16 %v660, %v652
    %v829 = vpack.c.b16 %v661, %v653
    %v830 = vpack.c.b16 %v662, %v654
    %v831 = vpack.c.b16 %v663, %v655
    %v832 = vpack.c.b16 %v664, %v656
    %v833 = vpack.c.b16 %v665, %v657
    %v834 = vpack.c.b16 %v666, %v658
    %v835 = vpack.c.b16 %v675, %v667
    %v836 = vpack.c.b16 %v676, %v668
    %v837 = vpack.c.b16 %v677, %v669
    %v838 = vpack.c.b16 %v678, %v670
    %v839 = vpack.c.b16 %v679, %v671
    %v840 = vpack.c.b16 %v680, %v672
    %v841 = vpack.c.b16 %v681, %v673
    %v842 = vpack.c.b16 %v682, %v674
    %v843 = vpack.c.b16 %v691, %v683
    %v844 = vpack.c.b16 %v692, %v684
    %v845 = vpack.c.b16 %v693, %v685
    %v846 = vpack.c.b16 %v694, %v686
    %v847 = vpack.c.b16 %v695, %v687
    %v848 = vpack.c.b16 %v696, %v688
    %v849 = vpack.c.b16 %v697, %v689
    %v850 = vpack.c.b16 %v698, %v690
    %v851 = vpack.c.b16 %v707, %v699
    %v852 = vpack.c.b16 %v708, %v700
    %v853 = vpack.c.b16 %v709, %v701
    %v854 = vpack.c.b16 %v710, %v702
    %v855 = vpack.c.b16 %v711, %v703
    %v856 = vpack.c.b16 %v712, %v704
    %v857 = vpack.c.b16 %v713, %v705
    %v858 = vpack.c.b16 %v714, %v706
    %v859 = vpack.c.b16 %v723, %v715
    %v860 = vpack.c.b16 %v724, %v716
    %v861 = vpack.c.b16 %v725, %v717
    %v862 = vpack.c.b16 %v726, %v718
    %v863 = vpack.c.b16 %v727, %v719
    %v864 = vpack.c.b16 %v728, %v720
    %v865 = vpack.c.b16 %v729, %v721
    %v866 = vpack.c.b16 %v730, %v722
    %v867 = vpack.c.b16 %v739, %v731
    %v868 = vpack.c.b16 %v740, %v732
    %v869 = vpack.c.b16 %v741, %v733
    %v870 = vpack.c.b16 %v742, %v734
    %v871 = vpack.c.b16 %v743, %v735
    %v872 = vpack.c.b16 %v744, %v736
    %v873 = vpack.c.b16 %v745, %v737
    %v874 = vpack.c.b16 %v746, %v738
    %1003 = vmatpush.bf16.msra.mxu0 %v803
    %1004 = vmatpush.bf16.msra.mxu0 %v795
    %1005 = vmatpush.bf16.msra.mxu0 %v787
    %1006 = vmatpush.bf16.msra.mxu0 %v779
    %1007 = vmatpush.bf16.msra.mxu0 %v771
    %1008 = vmatpush.bf16.msra.mxu0 %v763
    %1009 = vmatpush.bf16.msra.mxu0 %v755
    %1010 = vmatpush.bf16.msra.mxu0 %v747
    %1011 = vmatmul.bf16.gmra.mxu0 %v233
    %v1012 = vpop.f32.mrf.mxu0
    %v1013 = vadd.f32 0.0, %v1012
    %v1014 = vpop.f32.mrf.mxu0
    %1015 = vdwg.mxu0
    %1016 = vmatpush.bf16.msra.mxu0 %v867
    %1017 = vmatpush.bf16.msra.mxu0 %v859
    %1018 = vmatpush.bf16.msra.mxu0 %v851
    %1019 = vmatpush.bf16.msra.mxu0 %v843
    %1020 = vmatpush.bf16.msra.mxu0 %v835
    %1021 = vmatpush.bf16.msra.mxu0 %v827
    %1022 = vmatpush.bf16.msra.mxu0 %v819
    %1023 = vmatpush.bf16.msra.mxu0 %v811
    %1024 = vmatmul.bf16.gmra.mxu0 %v234
    %v1025 = vpop.f32.mrf.mxu0
    %v1026 = vadd.f32 %v1013, %v1025
    %v1027 = vpop.f32.mrf.mxu0
    %1028 = vdwg.mxu0
    %1029 = vmatpush.bf16.msra.mxu0 %v804
    %1030 = vmatpush.bf16.msra.mxu0 %v796
    %1031 = vmatpush.bf16.msra.mxu0 %v788
    %1032 = vmatpush.bf16.msra.mxu0 %v780
    %1033 = vmatpush.bf16.msra.mxu0 %v772
    %1034 = vmatpush.bf16.msra.mxu0 %v764
    %1035 = vmatpush.bf16.msra.mxu0 %v756
    %1036 = vmatpush.bf16.msra.mxu0 %v748
    %1037 = vmatmul.bf16.gmra.mxu0 %v233
    %v1038 = vpop.f32.mrf.mxu0
    %v1039 = vadd.f32 0.0, %v1038
    %v1040 = vpop.f32.mrf.mxu0
    %1041 = vdwg.mxu0
    %1042 = vmatpush.bf16.msra.mxu0 %v868
    %1043 = vmatpush.bf16.msra.mxu0 %v860
    %1044 = vmatpush.bf16.msra.mxu0 %v852
    %1045 = vmatpush.bf16.msra.mxu0 %v844
    %1046 = vmatpush.bf16.msra.mxu0 %v836
    %1047 = vmatpush.bf16.msra.mxu0 %v828
    %1048 = vmatpush.bf16.msra.mxu0 %v820
    %1049 = vmatpush.bf16.msra.mxu0 %v812
    %1050 = vmatmul.bf16.gmra.mxu0 %v234
    %v1051 = vpop.f32.mrf.mxu0
    %v1052 = vadd.f32 %v1039, %v1051
    %v1053 = vpop.f32.mrf.mxu0
    %1054 = vdwg.mxu0
    %1055 = vmatpush.bf16.msra.mxu0 %v805
    %1056 = vmatpush.bf16.msra.mxu0 %v797
    %1057 = vmatpush.bf16.msra.mxu0 %v789
    %1058 = vmatpush.bf16.msra.mxu0 %v781
    %1059 = vmatpush.bf16.msra.mxu0 %v773
    %1060 = vmatpush.bf16.msra.mxu0 %v765
    %1061 = vmatpush.bf16.msra.mxu0 %v757
    %1062 = vmatpush.bf16.msra.mxu0 %v749
    %1063 = vmatmul.bf16.gmra.mxu0 %v233
    %v1064 = vpop.f32.mrf.mxu0
    %v1065 = vadd.f32 0.0, %v1064
    %v1066 = vpop.f32.mrf.mxu0
    %1067 = vdwg.mxu0
    %1068 = vmatpush.bf16.msra.mxu0 %v869
    %1069 = vmatpush.bf16.msra.mxu0 %v861
    %1070 = vmatpush.bf16.msra.mxu0 %v853
    %1071 = vmatpush.bf16.msra.mxu0 %v845
    %1072 = vmatpush.bf16.msra.mxu0 %v837
    %1073 = vmatpush.bf16.msra.mxu0 %v829
    %1074 = vmatpush.bf16.msra.mxu0 %v821
    %1075 = vmatpush.bf16.msra.mxu0 %v813
    %1076 = vmatmul.bf16.gmra.mxu0 %v234
    %v1077 = vpop.f32.mrf.mxu0
    %v1078 = vadd.f32 %v1065, %v1077
    %v1079 = vpop.f32.mrf.mxu0
    %1080 = vdwg.mxu0
    %1081 = vmatpush.bf16.msra.mxu0 %v806
    %1082 = vmatpush.bf16.msra.mxu0 %v798
    %1083 = vmatpush.bf16.msra.mxu0 %v790
    %1084 = vmatpush.bf16.msra.mxu0 %v782
    %1085 = vmatpush.bf16.msra.mxu0 %v774
    %1086 = vmatpush.bf16.msra.mxu0 %v766
    %1087 = vmatpush.bf16.msra.mxu0 %v758
    %1088 = vmatpush.bf16.msra.mxu0 %v750
    %1089 = vmatmul.bf16.gmra.mxu0 %v233
    %v1090 = vpop.f32.mrf.mxu0
    %v1091 = vadd.f32 0.0, %v1090
    %v1092 = vpop.f32.mrf.mxu0
    %1093 = vdwg.mxu0
    %1094 = vmatpush.bf16.msra.mxu0 %v870
    %1095 = vmatpush.bf16.msra.mxu0 %v862
    %1096 = vmatpush.bf16.msra.mxu0 %v854
    %1097 = vmatpush.bf16.msra.mxu0 %v846
    %1098 = vmatpush.bf16.msra.mxu0 %v838
    %1099 = vmatpush.bf16.msra.mxu0 %v830
    %1100 = vmatpush.bf16.msra.mxu0 %v822
    %1101 = vmatpush.bf16.msra.mxu0 %v814
    %1102 = vmatmul.bf16.gmra.mxu0 %v234
    %v1103 = vpop.f32.mrf.mxu0
    %v1104 = vadd.f32 %v1091, %v1103
    %v1105 = vpop.f32.mrf.mxu0
    %1106 = vdwg.mxu0
    %1107 = vmatpush.bf16.msra.mxu0 %v807
    %1108 = vmatpush.bf16.msra.mxu0 %v799
    %1109 = vmatpush.bf16.msra.mxu0 %v791
    %1110 = vmatpush.bf16.msra.mxu0 %v783
    %1111 = vmatpush.bf16.msra.mxu0 %v775
    %1112 = vmatpush.bf16.msra.mxu0 %v767
    %1113 = vmatpush.bf16.msra.mxu0 %v759
    %1114 = vmatpush.bf16.msra.mxu0 %v751
    %1115 = vmatmul.bf16.gmra.mxu0 %v233
    %v1116 = vpop.f32.mrf.mxu0
    %v1117 = vadd.f32 0.0, %v1116
    %v1118 = vpop.f32.mrf.mxu0
    %1119 = vdwg.mxu0
    %1120 = vmatpush.bf16.msra.mxu0 %v871
    %1121 = vmatpush.bf16.msra.mxu0 %v863
    %1122 = vmatpush.bf16.msra.mxu0 %v855
    %1123 = vmatpush.bf16.msra.mxu0 %v847
    %1124 = vmatpush.bf16.msra.mxu0 %v839
    %1125 = vmatpush.bf16.msra.mxu0 %v831
    %1126 = vmatpush.bf16.msra.mxu0 %v823
    %1127 = vmatpush.bf16.msra.mxu0 %v815
    %1128 = vmatmul.bf16.gmra.mxu0 %v234
    %v1129 = vpop.f32.mrf.mxu0
    %v1130 = vadd.f32 %v1117, %v1129
    %v1131 = vpop.f32.mrf.mxu0
    %1132 = vdwg.mxu0
    %1133 = vmatpush.bf16.msra.mxu0 %v808
    %1134 = vmatpush.bf16.msra.mxu0 %v800
    %1135 = vmatpush.bf16.msra.mxu0 %v792
    %1136 = vmatpush.bf16.msra.mxu0 %v784
    %1137 = vmatpush.bf16.msra.mxu0 %v776
    %1138 = vmatpush.bf16.msra.mxu0 %v768
    %1139 = vmatpush.bf16.msra.mxu0 %v760
    %1140 = vmatpush.bf16.msra.mxu0 %v752
    %1141 = vmatmul.bf16.gmra.mxu0 %v233
    %v1142 = vpop.f32.mrf.mxu0
    %v1143 = vadd.f32 0.0, %v1142
    %v1144 = vpop.f32.mrf.mxu0
    %1145 = vdwg.mxu0
    %1146 = vmatpush.bf16.msra.mxu0 %v872
    %1147 = vmatpush.bf16.msra.mxu0 %v864
    %1148 = vmatpush.bf16.msra.mxu0 %v856
    %1149 = vmatpush.bf16.msra.mxu0 %v848
    %1150 = vmatpush.bf16.msra.mxu0 %v840
    %1151 = vmatpush.bf16.msra.mxu0 %v832
    %1152 = vmatpush.bf16.msra.mxu0 %v824
    %1153 = vmatpush.bf16.msra.mxu0 %v816
    %1154 = vmatmul.bf16.gmra.mxu0 %v234
    %v1155 = vpop.f32.mrf.mxu0
    %v1156 = vadd.f32 %v1143, %v1155
    %v1157 = vpop.f32.mrf.mxu0
    %1158 = vdwg.mxu0
    %1159 = vmatpush.bf16.msra.mxu0 %v809
    %1160 = vmatpush.bf16.msra.mxu0 %v801
    %1161 = vmatpush.bf16.msra.mxu0 %v793
    %1162 = vmatpush.bf16.msra.mxu0 %v785
    %1163 = vmatpush.bf16.msra.mxu0 %v777
    %1164 = vmatpush.bf16.msra.mxu0 %v769
    %1165 = vmatpush.bf16.msra.mxu0 %v761
    %1166 = vmatpush.bf16.msra.mxu0 %v753
    %1167 = vmatmul.bf16.gmra.mxu0 %v233
    %v1168 = vpop.f32.mrf.mxu0
    %v1169 = vadd.f32 0.0, %v1168
    %v1170 = vpop.f32.mrf.mxu0
    %1171 = vdwg.mxu0
    %1172 = vmatpush.bf16.msra.mxu0 %v873
    %1173 = vmatpush.bf16.msra.mxu0 %v865
    %1174 = vmatpush.bf16.msra.mxu0 %v857
    %1175 = vmatpush.bf16.msra.mxu0 %v849
    %1176 = vmatpush.bf16.msra.mxu0 %v841
    %1177 = vmatpush.bf16.msra.mxu0 %v833
    %1178 = vmatpush.bf16.msra.mxu0 %v825
    %1179 = vmatpush.bf16.msra.mxu0 %v817
    %1180 = vmatmul.bf16.gmra.mxu0 %v234
    %v1181 = vpop.f32.mrf.mxu0
    %v1182 = vadd.f32 %v1169, %v1181
    %v1183 = vpop.f32.mrf.mxu0
    %1184 = vdwg.mxu0
    %1185 = vmatpush.bf16.msra.mxu0 %v810
    %1186 = vmatpush.bf16.msra.mxu0 %v802
    %1187 = vmatpush.bf16.msra.mxu0 %v794
    %1188 = vmatpush.bf16.msra.mxu0 %v786
    %1189 = vmatpush.bf16.msra.mxu0 %v778
    %1190 = vmatpush.bf16.msra.mxu0 %v770
    %1191 = vmatpush.bf16.msra.mxu0 %v762
    %1192 = vmatpush.bf16.msra.mxu0 %v754
    %1193 = vmatmul.bf16.gmra.mxu0 %v233
    %v1194 = vpop.f32.mrf.mxu0
    %v1195 = vadd.f32 0.0, %v1194
    %v1196 = vpop.f32.mrf.mxu0
    %1197 = vdwg.mxu0
    %1198 = vmatpush.bf16.msra.mxu0 %v874
    %1199 = vmatpush.bf16.msra.mxu0 %v866
    %1200 = vmatpush.bf16.msra.mxu0 %v858
    %1201 = vmatpush.bf16.msra.mxu0 %v850
    %1202 = vmatpush.bf16.msra.mxu0 %v842
    %1203 = vmatpush.bf16.msra.mxu0 %v834
    %1204 = vmatpush.bf16.msra.mxu0 %v826
    %1205 = vmatpush.bf16.msra.mxu0 %v818
    %1206 = vmatmul.bf16.gmra.mxu0 %v234
    %v1207 = vpop.f32.mrf.mxu0
    %v1208 = vadd.f32 %v1195, %v1207
    %v1209 = vpop.f32.mrf.mxu0
    %1210 = vdwg.mxu0
    %v1211 = vadd.f32 %v1130, %v49
    %v1212 = vadd.f32 %v1156, %v50
    %v1213 = vadd.f32 %v1182, %v51
    %v1214 = vadd.f32 %v1208, %v52
    %v1215 = vxor.u32 %v1211, 2147483648
    %v1216 = vmul.f32 %v1215, 1.442695
    %v1217 = vpow.pop %v1216
    %v1218 = vadd.f32 %v1217, 1.0
    %v1219 = vrcp.pop %v1218
    %v1220 = vmul.f32 %v1218, %v1219
    %v1221 = vsub.f32 1.0, %v1220
    %v1222 = vmul.f32 %v1219, %v1221
    %v1223 = vadd.f32 %v1219, %v1222
    %vm1224 = vweird.f32 %v1218
    %vm1225 = vweird.f32 %v1219
    %vm1226 = vmor %vm1224, %vm1225
    %v1227 = vsel %vm1226, %v1219, %v1223
    %v1228 = vand.u32 2147483647, %v1218
    %vm1229 = vcmp.eq.f32.partialorder %v1228, 8.507059e+37
    %v1230 = vand.u32 %v1218, 2147483648
    %v1231 = vor.u32 1.1754944e-38, %v1230
    %v1232 = vsel %vm1229, %v1231, %v1227
    %v1233 = vmul.f32 1.0, %v1232
    %v1234 = vxor.u32 %v1212, 2147483648
    %v1235 = vmul.f32 %v1234, 1.442695
    %v1236 = vpow.pop %v1235
    %v1237 = vadd.f32 %v1236, 1.0
    %v1238 = vrcp.pop %v1237
    %v1239 = vmul.f32 %v1237, %v1238
    %v1240 = vsub.f32 1.0, %v1239
    %v1241 = vmul.f32 %v1238, %v1240
    %v1242 = vadd.f32 %v1238, %v1241
    %vm1243 = vweird.f32 %v1237
    %vm1244 = vweird.f32 %v1238
    %vm1245 = vmor %vm1243, %vm1244
    %v1246 = vsel %vm1245, %v1238, %v1242
    %v1247 = vand.u32 2147483647, %v1237
    %vm1248 = vcmp.eq.f32.partialorder %v1247, 8.507059e+37
    %v1249 = vand.u32 %v1237, 2147483648
    %v1250 = vor.u32 1.1754944e-38, %v1249
    %v1251 = vsel %vm1248, %v1250, %v1246
    %v1252 = vmul.f32 1.0, %v1251
    %v1253 = vtanh.pop %v1213
    %v1254 = vxor.u32 %v1214, 2147483648
    %v1255 = vmul.f32 %v1254, 1.442695
    %v1256 = vpow.pop %v1255
    %v1257 = vadd.f32 %v1256, 1.0
    %v1258 = vrcp.pop %v1257
    %v1259 = vmul.f32 %v1257, %v1258
    %v1260 = vsub.f32 1.0, %v1259
    %v1261 = vmul.f32 %v1258, %v1260
    %v1262 = vadd.f32 %v1258, %v1261
    %vm1263 = vweird.f32 %v1257
    %vm1264 = vweird.f32 %v1258
    %vm1265 = vmor %vm1263, %vm1264
    %v1266 = vsel %vm1265, %v1258, %v1262
    %v1267 = vand.u32 2147483647, %v1257
    %vm1268 = vcmp.eq.f32.partialorder %v1267, 8.507059e+37
    %v1269 = vand.u32 %v1257, 2147483648
    %v1270 = vor.u32 1.1754944e-38, %v1269
    %v1271 = vsel %vm1268, %v1270, %v1266
    %v1272 = vmul.f32 1.0, %v1271
    %v1273 = vmul.f32 %v1252, 0.0
    %v1274 = vmul.f32 %v1233, %v1253
    %v1275 = vadd.f32 %v1273, %v1274
    %v1276 = vtanh.pop %v1275
    %v1277 = vmul.f32 %v1272, %v1276
    %v1282 = vrot.slane %v1026, 7
    %v1283 = vrot.slane %v1052, 7
    %v1284 = vrot.slane %v1078, 7
    %v1285 = vrot.slane %v1104, 7
    %v1294 = vadd.f32 %v93, %v1282
    %v1295 = vadd.f32 %v94, %v1283
    %v1296 = vadd.f32 %v95, %v1284
    %v1297 = vadd.f32 %v96, %v1285
    %v1298 = vadd.f32 %v97, %v1026
    %v1299 = vadd.f32 %v98, %v1052
    %v1300 = vadd.f32 %v99, %v1078
    %v1301 = vadd.f32 %v100, %v1104
    %v1302 = vxor.u32 %v1294, 2147483648
    %v1303 = vxor.u32 %v1298, 2147483648
    %v1304 = vmul.f32 %v1302, 1.442695
    %v1305 = vpow.pop %v1304
    %v1306 = vmul.f32 %v1303, 1.442695
    %v1307 = vpow.pop %v1306
    %v1308 = vadd.f32 %v1305, 1.0
    %v1309 = vadd.f32 %v1307, 1.0
    %v1310 = vrcp.pop %v1308
    %v1311 = vmul.f32 %v1308, %v1310
    %v1312 = vsub.f32 1.0, %v1311
    %v1313 = vmul.f32 %v1310, %v1312
    %v1314 = vadd.f32 %v1310, %v1313
    %vm1315 = vweird.f32 %v1308
    %vm1316 = vweird.f32 %v1310
    %vm1317 = vmor %vm1315, %vm1316
    %v1318 = vsel %vm1317, %v1310, %v1314
    %v1319 = vand.u32 2147483647, %v1308
    %vm1320 = vcmp.eq.f32.partialorder %v1319, 8.507059e+37
    %v1321 = vand.u32 %v1308, 2147483648
    %v1322 = vor.u32 1.1754944e-38, %v1321
    %v1323 = vsel %vm1320, %v1322, %v1318
    %v1324 = vmul.f32 1.0, %v1323
    %v1325 = vrcp.pop %v1309
    %v1326 = vmul.f32 %v1309, %v1325
    %v1327 = vsub.f32 1.0, %v1326
    %v1328 = vmul.f32 %v1325, %v1327
    %v1329 = vadd.f32 %v1325, %v1328
    %vm1330 = vweird.f32 %v1309
    %vm1331 = vweird.f32 %v1325
    %vm1332 = vmor %vm1330, %vm1331
    %v1333 = vsel %vm1332, %v1325, %v1329
    %v1334 = vand.u32 2147483647, %v1309
    %vm1335 = vcmp.eq.f32.partialorder %v1334, 8.507059e+37
    %v1336 = vand.u32 %v1309, 2147483648
    %v1337 = vor.u32 1.1754944e-38, %v1336
    %v1338 = vsel %vm1335, %v1337, %v1333
    %v1339 = vmul.f32 1.0, %v1338
    %v1340 = vxor.u32 %v1295, 2147483648
    %v1341 = vxor.u32 %v1299, 2147483648
    %v1342 = vmul.f32 %v1340, 1.442695
    %v1343 = vpow.pop %v1342
    %v1344 = vmul.f32 %v1341, 1.442695
    %v1345 = vpow.pop %v1344
    %v1346 = vadd.f32 %v1343, 1.0
    %v1347 = vadd.f32 %v1345, 1.0
    %v1348 = vrcp.pop %v1346
    %v1349 = vmul.f32 %v1346, %v1348
    %v1350 = vsub.f32 1.0, %v1349
    %v1351 = vmul.f32 %v1348, %v1350
    %v1352 = vadd.f32 %v1348, %v1351
    %vm1353 = vweird.f32 %v1346
    %vm1354 = vweird.f32 %v1348
    %vm1355 = vmor %vm1353, %vm1354
    %v1356 = vsel %vm1355, %v1348, %v1352
    %v1357 = vand.u32 2147483647, %v1346
    %vm1358 = vcmp.eq.f32.partialorder %v1357, 8.507059e+37
    %v1359 = vand.u32 %v1346, 2147483648
    %v1360 = vor.u32 1.1754944e-38, %v1359
    %v1361 = vsel %vm1358, %v1360, %v1356
    %v1362 = vmul.f32 1.0, %v1361
    %v1363 = vrcp.pop %v1347
    %v1364 = vmul.f32 %v1347, %v1363
    %v1365 = vsub.f32 1.0, %v1364
    %v1366 = vmul.f32 %v1363, %v1365
    %v1367 = vadd.f32 %v1363, %v1366
    %vm1368 = vweird.f32 %v1347
    %vm1369 = vweird.f32 %v1363
    %vm1370 = vmor %vm1368, %vm1369
    %v1371 = vsel %vm1370, %v1363, %v1367
    %v1372 = vand.u32 2147483647, %v1347
    %vm1373 = vcmp.eq.f32.partialorder %v1372, 8.507059e+37
    %v1374 = vand.u32 %v1347, 2147483648
    %v1375 = vor.u32 1.1754944e-38, %v1374
    %v1376 = vsel %vm1373, %v1375, %v1371
    %v1377 = vmul.f32 1.0, %v1376
    %v1378 = vtanh.pop %v1296
    %v1379 = vtanh.pop %v1300
    %v1380 = vxor.u32 %v1297, 2147483648
    %v1381 = vxor.u32 %v1301, 2147483648
    %v1382 = vmul.f32 %v1380, 1.442695
    %v1383 = vpow.pop %v1382
    %v1384 = vmul.f32 %v1381, 1.442695
    %v1385 = vpow.pop %v1384
    %v1386 = vadd.f32 %v1383, 1.0
    %v1387 = vadd.f32 %v1385, 1.0
    %v1388 = vrcp.pop %v1386
    %v1389 = vmul.f32 %v1386, %v1388
    %v1390 = vsub.f32 1.0, %v1389
    %v1391 = vmul.f32 %v1388, %v1390
    %v1392 = vadd.f32 %v1388, %v1391
    %vm1393 = vweird.f32 %v1386
    %vm1394 = vweird.f32 %v1388
    %vm1395 = vmor %vm1393, %vm1394
    %v1396 = vsel %vm1395, %v1388, %v1392
    %v1397 = vand.u32 2147483647, %v1386
    %vm1398 = vcmp.eq.f32.partialorder %v1397, 8.507059e+37
    %v1399 = vand.u32 %v1386, 2147483648
    %v1400 = vor.u32 1.1754944e-38, %v1399
    %v1401 = vsel %vm1398, %v1400, %v1396
    %v1402 = vmul.f32 1.0, %v1401
    %v1403 = vrcp.pop %v1387
    %v1404 = vmul.f32 %v1387, %v1403
    %v1405 = vsub.f32 1.0, %v1404
    %v1406 = vmul.f32 %v1403, %v1405
    %v1407 = vadd.f32 %v1403, %v1406
    %vm1408 = vweird.f32 %v1387
    %vm1409 = vweird.f32 %v1403
    %vm1410 = vmor %vm1408, %vm1409
    %v1411 = vsel %vm1410, %v1403, %v1407
    %v1412 = vand.u32 2147483647, %v1387
    %vm1413 = vcmp.eq.f32.partialorder %v1412, 8.507059e+37
    %v1414 = vand.u32 %v1387, 2147483648
    %v1415 = vor.u32 1.1754944e-38, %v1414
    %v1416 = vsel %vm1413, %v1415, %v1411
    %v1417 = vmul.f32 1.0, %v1416
    %v1420 = vrot.slane %v221, 7
    %v1421 = vrot.slane %v222, 7
    %v1424 = vmul.f32 %v1362, %v1420
    %v1425 = vmul.f32 %v1377, %v1421
    %v1426 = vmul.f32 %v1324, %v1378
    %v1427 = vmul.f32 %v1339, %v1379
    %v1428 = vadd.f32 %v1424, %v1426
    %v1429 = vadd.f32 %v1425, %v1427
    %v1430 = vtanh.pop %v1428
    %v1431 = vtanh.pop %v1429
    %v1432 = vmul.f32 %v1402, %v1430
    %v1433 = vmul.f32 %v1417, %v1431
    %v1436 = vrot.slane %v1433, 7
    %vm1437 = vcmask 1042434
    %v1438 = vsel %vm1437, %v1436, %v1432
    %v1441 = vrot.slane %v1277, 7
    %v1443 = vpack.c.bf16 %v1438, %v1438
    %v1444 = vpack.c.bf16 %v1441, %v1441
    %v1446 = vshrl.u32 %v1443, 16
    %v1448 = vshll.u32 %v1443, 16
    %v1450 = vrot.slane %v1448, 1
    %v1451 = vor.u32 %v1446, %v1450
    %v1453 = vshrl.u32 %v1444, 16
    %v1455 = vshll.u32 %v1444, 16
    %v1457 = vrot.slane %v1455, 1
    %v1458 = vor.u32 %v1453, %v1457
    %1461 = vmatpush.bf16.msra.mxu0 %v803
    %1462 = vmatpush.bf16.msra.mxu0 %v795
    %1463 = vmatpush.bf16.msra.mxu0 %v787
    %1464 = vmatpush.bf16.msra.mxu0 %v779
    %1465 = vmatpush.bf16.msra.mxu0 %v771
    %1466 = vmatpush.bf16.msra.mxu0 %v763
    %1467 = vmatpush.bf16.msra.mxu0 %v755
    %1468 = vmatpush.bf16.msra.mxu0 %v747
    %1469 = vmatmul.bf16.gmra.mxu0 %v1451
    %v1470 = vpop.f32.mrf.mxu0
    %v1471 = vadd.f32 0.0, %v1470
    %v1472 = vpop.f32.mrf.mxu0
    %1473 = vdwg.mxu0
    %1474 = vmatpush.bf16.msra.mxu0 %v867
    %1475 = vmatpush.bf16.msra.mxu0 %v859
    %1476 = vmatpush.bf16.msra.mxu0 %v851
    %1477 = vmatpush.bf16.msra.mxu0 %v843
    %1478 = vmatpush.bf16.msra.mxu0 %v835
    %1479 = vmatpush.bf16.msra.mxu0 %v827
    %1480 = vmatpush.bf16.msra.mxu0 %v819
    %1481 = vmatpush.bf16.msra.mxu0 %v811
    %1482 = vmatmul.bf16.gmra.mxu0 %v1458
    %v1483 = vpop.f32.mrf.mxu0
    %v1484 = vadd.f32 %v1471, %v1483
    %v1485 = vpop.f32.mrf.mxu0
    %1486 = vdwg.mxu0
    %1487 = vmatpush.bf16.msra.mxu0 %v804
    %1488 = vmatpush.bf16.msra.mxu0 %v796
    %1489 = vmatpush.bf16.msra.mxu0 %v788
    %1490 = vmatpush.bf16.msra.mxu0 %v780
    %1491 = vmatpush.bf16.msra.mxu0 %v772
    %1492 = vmatpush.bf16.msra.mxu0 %v764
    %1493 = vmatpush.bf16.msra.mxu0 %v756
    %1494 = vmatpush.bf16.msra.mxu0 %v748
    %1495 = vmatmul.bf16.gmra.mxu0 %v1451
    %v1496 = vpop.f32.mrf.mxu0
    %v1497 = vadd.f32 0.0, %v1496
    %v1498 = vpop.f32.mrf.mxu0
    %1499 = vdwg.mxu0
    %1500 = vmatpush.bf16.msra.mxu0 %v868
    %1501 = vmatpush.bf16.msra.mxu0 %v860
    %1502 = vmatpush.bf16.msra.mxu0 %v852
    %1503 = vmatpush.bf16.msra.mxu0 %v844
    %1504 = vmatpush.bf16.msra.mxu0 %v836
    %1505 = vmatpush.bf16.msra.mxu0 %v828
    %1506 = vmatpush.bf16.msra.mxu0 %v820
    %1507 = vmatpush.bf16.msra.mxu0 %v812
    %1508 = vmatmul.bf16.gmra.mxu0 %v1458
    %v1509 = vpop.f32.mrf.mxu0
    %v1510 = vadd.f32 %v1497, %v1509
    %v1511 = vpop.f32.mrf.mxu0
    %1512 = vdwg.mxu0
    %1513 = vmatpush.bf16.msra.mxu0 %v805
    %1514 = vmatpush.bf16.msra.mxu0 %v797
    %1515 = vmatpush.bf16.msra.mxu0 %v789
    %1516 = vmatpush.bf16.msra.mxu0 %v781
    %1517 = vmatpush.bf16.msra.mxu0 %v773
    %1518 = vmatpush.bf16.msra.mxu0 %v765
    %1519 = vmatpush.bf16.msra.mxu0 %v757
    %1520 = vmatpush.bf16.msra.mxu0 %v749
    %1521 = vmatmul.bf16.gmra.mxu0 %v1451
    %v1522 = vpop.f32.mrf.mxu0
    %v1523 = vadd.f32 0.0, %v1522
    %v1524 = vpop.f32.mrf.mxu0
    %1525 = vdwg.mxu0
    %1526 = vmatpush.bf16.msra.mxu0 %v869
    %1527 = vmatpush.bf16.msra.mxu0 %v861
    %1528 = vmatpush.bf16.msra.mxu0 %v853
    %1529 = vmatpush.bf16.msra.mxu0 %v845
    %1530 = vmatpush.bf16.msra.mxu0 %v837
    %1531 = vmatpush.bf16.msra.mxu0 %v829
    %1532 = vmatpush.bf16.msra.mxu0 %v821
    %1533 = vmatpush.bf16.msra.mxu0 %v813
    %1534 = vmatmul.bf16.gmra.mxu0 %v1458
    %v1535 = vpop.f32.mrf.mxu0
    %v1536 = vadd.f32 %v1523, %v1535
    %v1537 = vpop.f32.mrf.mxu0
    %1538 = vdwg.mxu0
    %1539 = vmatpush.bf16.msra.mxu0 %v806
    %1540 = vmatpush.bf16.msra.mxu0 %v798
    %1541 = vmatpush.bf16.msra.mxu0 %v790
    %1542 = vmatpush.bf16.msra.mxu0 %v782
    %1543 = vmatpush.bf16.msra.mxu0 %v774
    %1544 = vmatpush.bf16.msra.mxu0 %v766
    %1545 = vmatpush.bf16.msra.mxu0 %v758
    %1546 = vmatpush.bf16.msra.mxu0 %v750
    %1547 = vmatmul.bf16.gmra.mxu0 %v1451
    %v1548 = vpop.f32.mrf.mxu0
    %v1549 = vadd.f32 0.0, %v1548
    %v1550 = vpop.f32.mrf.mxu0
    %1551 = vdwg.mxu0
    %1552 = vmatpush.bf16.msra.mxu0 %v870
    %1553 = vmatpush.bf16.msra.mxu0 %v862
    %1554 = vmatpush.bf16.msra.mxu0 %v854
    %1555 = vmatpush.bf16.msra.mxu0 %v846
    %1556 = vmatpush.bf16.msra.mxu0 %v838
    %1557 = vmatpush.bf16.msra.mxu0 %v830
    %1558 = vmatpush.bf16.msra.mxu0 %v822
    %1559 = vmatpush.bf16.msra.mxu0 %v814
    %1560 = vmatmul.bf16.gmra.mxu0 %v1458
    %v1561 = vpop.f32.mrf.mxu0
    %v1562 = vadd.f32 %v1549, %v1561
    %v1563 = vpop.f32.mrf.mxu0
    %1564 = vdwg.mxu0
    %1565 = vmatpush.bf16.msra.mxu0 %v807
    %1566 = vmatpush.bf16.msra.mxu0 %v799
    %1567 = vmatpush.bf16.msra.mxu0 %v791
    %1568 = vmatpush.bf16.msra.mxu0 %v783
    %1569 = vmatpush.bf16.msra.mxu0 %v775
    %1570 = vmatpush.bf16.msra.mxu0 %v767
    %1571 = vmatpush.bf16.msra.mxu0 %v759
    %1572 = vmatpush.bf16.msra.mxu0 %v751
    %1573 = vmatmul.bf16.gmra.mxu0 %v1451
    %v1574 = vpop.f32.mrf.mxu0
    %v1575 = vadd.f32 0.0, %v1574
    %v1576 = vpop.f32.mrf.mxu0
    %1577 = vdwg.mxu0
    %1578 = vmatpush.bf16.msra.mxu0 %v871
    %1579 = vmatpush.bf16.msra.mxu0 %v863
    %1580 = vmatpush.bf16.msra.mxu0 %v855
    %1581 = vmatpush.bf16.msra.mxu0 %v847
    %1582 = vmatpush.bf16.msra.mxu0 %v839
    %1583 = vmatpush.bf16.msra.mxu0 %v831
    %1584 = vmatpush.bf16.msra.mxu0 %v823
    %1585 = vmatpush.bf16.msra.mxu0 %v815
    %1586 = vmatmul.bf16.gmra.mxu0 %v1458
    %v1587 = vpop.f32.mrf.mxu0
    %v1588 = vadd.f32 %v1575, %v1587
    %v1589 = vpop.f32.mrf.mxu0
    %1590 = vdwg.mxu0
    %1591 = vmatpush.bf16.msra.mxu0 %v808
    %1592 = vmatpush.bf16.msra.mxu0 %v800
    %1593 = vmatpush.bf16.msra.mxu0 %v792
    %1594 = vmatpush.bf16.msra.mxu0 %v784
    %1595 = vmatpush.bf16.msra.mxu0 %v776
    %1596 = vmatpush.bf16.msra.mxu0 %v768
    %1597 = vmatpush.bf16.msra.mxu0 %v760
    %1598 = vmatpush.bf16.msra.mxu0 %v752
    %1599 = vmatmul.bf16.gmra.mxu0 %v1451
    %v1600 = vpop.f32.mrf.mxu0
    %v1601 = vadd.f32 0.0, %v1600
    %v1602 = vpop.f32.mrf.mxu0
    %1603 = vdwg.mxu0
    %1604 = vmatpush.bf16.msra.mxu0 %v872
    %1605 = vmatpush.bf16.msra.mxu0 %v864
    %1606 = vmatpush.bf16.msra.mxu0 %v856
    %1607 = vmatpush.bf16.msra.mxu0 %v848
    %1608 = vmatpush.bf16.msra.mxu0 %v840
    %1609 = vmatpush.bf16.msra.mxu0 %v832
    %1610 = vmatpush.bf16.msra.mxu0 %v824
    %1611 = vmatpush.bf16.msra.mxu0 %v816
    %1612 = vmatmul.bf16.gmra.mxu0 %v1458
    %v1613 = vpop.f32.mrf.mxu0
    %v1614 = vadd.f32 %v1601, %v1613
    %v1615 = vpop.f32.mrf.mxu0
    %1616 = vdwg.mxu0
    %1617 = vmatpush.bf16.msra.mxu0 %v809
    %1618 = vmatpush.bf16.msra.mxu0 %v801
    %1619 = vmatpush.bf16.msra.mxu0 %v793
    %1620 = vmatpush.bf16.msra.mxu0 %v785
    %1621 = vmatpush.bf16.msra.mxu0 %v777
    %1622 = vmatpush.bf16.msra.mxu0 %v769
    %1623 = vmatpush.bf16.msra.mxu0 %v761
    %1624 = vmatpush.bf16.msra.mxu0 %v753
    %1625 = vmatmul.bf16.gmra.mxu0 %v1451
    %v1626 = vpop.f32.mrf.mxu0
    %v1627 = vadd.f32 0.0, %v1626
    %v1628 = vpop.f32.mrf.mxu0
    %1629 = vdwg.mxu0
    %1630 = vmatpush.bf16.msra.mxu0 %v873
    %1631 = vmatpush.bf16.msra.mxu0 %v865
    %1632 = vmatpush.bf16.msra.mxu0 %v857
    %1633 = vmatpush.bf16.msra.mxu0 %v849
    %1634 = vmatpush.bf16.msra.mxu0 %v841
    %1635 = vmatpush.bf16.msra.mxu0 %v833
    %1636 = vmatpush.bf16.msra.mxu0 %v825
    %1637 = vmatpush.bf16.msra.mxu0 %v817
    %1638 = vmatmul.bf16.gmra.mxu0 %v1458
    %v1639 = vpop.f32.mrf.mxu0
    %v1640 = vadd.f32 %v1627, %v1639
    %v1641 = vpop.f32.mrf.mxu0
    %1642 = vdwg.mxu0
    %1643 = vmatpush.bf16.msra.mxu0 %v810
    %1644 = vmatpush.bf16.msra.mxu0 %v802
    %1645 = vmatpush.bf16.msra.mxu0 %v794
    %1646 = vmatpush.bf16.msra.mxu0 %v786
    %1647 = vmatpush.bf16.msra.mxu0 %v778
    %1648 = vmatpush.bf16.msra.mxu0 %v770
    %1649 = vmatpush.bf16.msra.mxu0 %v762
    %1650 = vmatpush.bf16.msra.mxu0 %v754
    %1651 = vmatmul.bf16.gmra.mxu0 %v1451
    %v1652 = vpop.f32.mrf.mxu0
    %v1653 = vadd.f32 0.0, %v1652
    %v1654 = vpop.f32.mrf.mxu0
    %1655 = vdwg.mxu0
    %1656 = vmatpush.bf16.msra.mxu0 %v874
    %1657 = vmatpush.bf16.msra.mxu0 %v866
    %1658 = vmatpush.bf16.msra.mxu0 %v858
    %1659 = vmatpush.bf16.msra.mxu0 %v850
    %1660 = vmatpush.bf16.msra.mxu0 %v842
    %1661 = vmatpush.bf16.msra.mxu0 %v834
    %1662 = vmatpush.bf16.msra.mxu0 %v826
    %1663 = vmatpush.bf16.msra.mxu0 %v818
    %1664 = vmatmul.bf16.gmra.mxu0 %v1458
    %v1665 = vpop.f32.mrf.mxu0
    %v1666 = vadd.f32 %v1653, %v1665
    %v1667 = vpop.f32.mrf.mxu0
    %1668 = vdwg.mxu0
    %v1669 = vadd.f32 %v1588, %v49
    %v1670 = vadd.f32 %v1614, %v50
    %v1671 = vadd.f32 %v1640, %v51
    %v1672 = vadd.f32 %v1666, %v52
    %v1673 = vxor.u32 %v1669, 2147483648
    %v1674 = vmul.f32 %v1673, 1.442695
    %v1675 = vpow.pop %v1674
    %v1676 = vadd.f32 %v1675, 1.0
    %v1677 = vrcp.pop %v1676
    %v1678 = vmul.f32 %v1676, %v1677
    %v1679 = vsub.f32 1.0, %v1678
    %v1680 = vmul.f32 %v1677, %v1679
    %v1681 = vadd.f32 %v1677, %v1680
    %vm1682 = vweird.f32 %v1676
    %vm1683 = vweird.f32 %v1677
    %vm1684 = vmor %vm1682, %vm1683
    %v1685 = vsel %vm1684, %v1677, %v1681
    %v1686 = vand.u32 2147483647, %v1676
    %vm1687 = vcmp.eq.f32.partialorder %v1686, 8.507059e+37
    %v1688 = vand.u32 %v1676, 2147483648
    %v1689 = vor.u32 1.1754944e-38, %v1688
    %v1690 = vsel %vm1687, %v1689, %v1685
    %v1691 = vmul.f32 1.0, %v1690
    %v1692 = vxor.u32 %v1670, 2147483648
    %v1693 = vmul.f32 %v1692, 1.442695
    %v1694 = vpow.pop %v1693
    %v1695 = vadd.f32 %v1694, 1.0
    %v1696 = vrcp.pop %v1695
    %v1697 = vmul.f32 %v1695, %v1696
    %v1698 = vsub.f32 1.0, %v1697
    %v1699 = vmul.f32 %v1696, %v1698
    %v1700 = vadd.f32 %v1696, %v1699
    %vm1701 = vweird.f32 %v1695
    %vm1702 = vweird.f32 %v1696
    %vm1703 = vmor %vm1701, %vm1702
    %v1704 = vsel %vm1703, %v1696, %v1700
    %v1705 = vand.u32 2147483647, %v1695
    %vm1706 = vcmp.eq.f32.partialorder %v1705, 8.507059e+37
    %v1707 = vand.u32 %v1695, 2147483648
    %v1708 = vor.u32 1.1754944e-38, %v1707
    %v1709 = vsel %vm1706, %v1708, %v1704
    %v1710 = vmul.f32 1.0, %v1709
    %v1711 = vtanh.pop %v1671
    %v1712 = vxor.u32 %v1672, 2147483648
    %v1713 = vmul.f32 %v1712, 1.442695
    %v1714 = vpow.pop %v1713
    %v1715 = vadd.f32 %v1714, 1.0
    %v1716 = vrcp.pop %v1715
    %v1717 = vmul.f32 %v1715, %v1716
    %v1718 = vsub.f32 1.0, %v1717
    %v1719 = vmul.f32 %v1716, %v1718
    %v1720 = vadd.f32 %v1716, %v1719
    %vm1721 = vweird.f32 %v1715
    %vm1722 = vweird.f32 %v1716
    %vm1723 = vmor %vm1721, %vm1722
    %v1724 = vsel %vm1723, %v1716, %v1720
    %v1725 = vand.u32 2147483647, %v1715
    %vm1726 = vcmp.eq.f32.partialorder %v1725, 8.507059e+37
    %v1727 = vand.u32 %v1715, 2147483648
    %v1728 = vor.u32 1.1754944e-38, %v1727
    %v1729 = vsel %vm1726, %v1728, %v1724
    %v1730 = vmul.f32 1.0, %v1729
    %v1731 = vmul.f32 %v1710, %v1275
    %v1732 = vmul.f32 %v1691, %v1711
    %v1733 = vadd.f32 %v1731, %v1732
    %v1734 = vtanh.pop %v1733
    %v1735 = vmul.f32 %v1730, %v1734
    %v1740 = vrot.slane %v1484, 6
    %v1741 = vrot.slane %v1510, 6
    %v1742 = vrot.slane %v1536, 6
    %v1743 = vrot.slane %v1562, 6
    %v1744 = vrot.slane %v1484, 7
    %v1745 = vrot.slane %v1510, 7
    %v1746 = vrot.slane %v1536, 7
    %v1747 = vrot.slane %v1562, 7
    %v1756 = vadd.f32 %v93, %v1740
    %v1757 = vadd.f32 %v94, %v1741
    %v1758 = vadd.f32 %v95, %v1742
    %v1759 = vadd.f32 %v96, %v1743
    %v1760 = vadd.f32 %v97, %v1744
    %v1761 = vadd.f32 %v98, %v1745
    %v1762 = vadd.f32 %v99, %v1746
    %v1763 = vadd.f32 %v100, %v1747
    %v1764 = vxor.u32 %v1756, 2147483648
    %v1765 = vxor.u32 %v1760, 2147483648
    %v1766 = vmul.f32 %v1764, 1.442695
    %v1767 = vpow.pop %v1766
    %v1768 = vmul.f32 %v1765, 1.442695
    %v1769 = vpow.pop %v1768
    %v1770 = vadd.f32 %v1767, 1.0
    %v1771 = vadd.f32 %v1769, 1.0
    %v1772 = vrcp.pop %v1770
    %v1773 = vmul.f32 %v1770, %v1772
    %v1774 = vsub.f32 1.0, %v1773
    %v1775 = vmul.f32 %v1772, %v1774
    %v1776 = vadd.f32 %v1772, %v1775
    %vm1777 = vweird.f32 %v1770
    %vm1778 = vweird.f32 %v1772
    %vm1779 = vmor %vm1777, %vm1778
    %v1780 = vsel %vm1779, %v1772, %v1776
    %v1781 = vand.u32 2147483647, %v1770
    %vm1782 = vcmp.eq.f32.partialorder %v1781, 8.507059e+37
    %v1783 = vand.u32 %v1770, 2147483648
    %v1784 = vor.u32 1.1754944e-38, %v1783
    %v1785 = vsel %vm1782, %v1784, %v1780
    %v1786 = vmul.f32 1.0, %v1785
    %v1787 = vrcp.pop %v1771
    %v1788 = vmul.f32 %v1771, %v1787
    %v1789 = vsub.f32 1.0, %v1788
    %v1790 = vmul.f32 %v1787, %v1789
    %v1791 = vadd.f32 %v1787, %v1790
    %vm1792 = vweird.f32 %v1771
    %vm1793 = vweird.f32 %v1787
    %vm1794 = vmor %vm1792, %vm1793
    %v1795 = vsel %vm1794, %v1787, %v1791
    %v1796 = vand.u32 2147483647, %v1771
    %vm1797 = vcmp.eq.f32.partialorder %v1796, 8.507059e+37
    %v1798 = vand.u32 %v1771, 2147483648
    %v1799 = vor.u32 1.1754944e-38, %v1798
    %v1800 = vsel %vm1797, %v1799, %v1795
    %v1801 = vmul.f32 1.0, %v1800
    %v1802 = vxor.u32 %v1757, 2147483648
    %v1803 = vxor.u32 %v1761, 2147483648
    %v1804 = vmul.f32 %v1802, 1.442695
    %v1805 = vpow.pop %v1804
    %v1806 = vmul.f32 %v1803, 1.442695
    %v1807 = vpow.pop %v1806
    %v1808 = vadd.f32 %v1805, 1.0
    %v1809 = vadd.f32 %v1807, 1.0
    %v1810 = vrcp.pop %v1808
    %v1811 = vmul.f32 %v1808, %v1810
    %v1812 = vsub.f32 1.0, %v1811
    %v1813 = vmul.f32 %v1810, %v1812
    %v1814 = vadd.f32 %v1810, %v1813
    %vm1815 = vweird.f32 %v1808
    %vm1816 = vweird.f32 %v1810
    %vm1817 = vmor %vm1815, %vm1816
    %v1818 = vsel %vm1817, %v1810, %v1814
    %v1819 = vand.u32 2147483647, %v1808
    %vm1820 = vcmp.eq.f32.partialorder %v1819, 8.507059e+37
    %v1821 = vand.u32 %v1808, 2147483648
    %v1822 = vor.u32 1.1754944e-38, %v1821
    %v1823 = vsel %vm1820, %v1822, %v1818
    %v1824 = vmul.f32 1.0, %v1823
    %v1825 = vrcp.pop %v1809
    %v1826 = vmul.f32 %v1809, %v1825
    %v1827 = vsub.f32 1.0, %v1826
    %v1828 = vmul.f32 %v1825, %v1827
    %v1829 = vadd.f32 %v1825, %v1828
    %vm1830 = vweird.f32 %v1809
    %vm1831 = vweird.f32 %v1825
    %vm1832 = vmor %vm1830, %vm1831
    %v1833 = vsel %vm1832, %v1825, %v1829
    %v1834 = vand.u32 2147483647, %v1809
    %vm1835 = vcmp.eq.f32.partialorder %v1834, 8.507059e+37
    %v1836 = vand.u32 %v1809, 2147483648
    %v1837 = vor.u32 1.1754944e-38, %v1836
    %v1838 = vsel %vm1835, %v1837, %v1833
    %v1839 = vmul.f32 1.0, %v1838
    %v1840 = vtanh.pop %v1758
    %v1841 = vtanh.pop %v1762
    %v1842 = vxor.u32 %v1759, 2147483648
    %v1843 = vxor.u32 %v1763, 2147483648
    %v1844 = vmul.f32 %v1842, 1.442695
    %v1845 = vpow.pop %v1844
    %v1846 = vmul.f32 %v1843, 1.442695
    %v1847 = vpow.pop %v1846
    %v1848 = vadd.f32 %v1845, 1.0
    %v1849 = vadd.f32 %v1847, 1.0
    %v1850 = vrcp.pop %v1848
    %v1851 = vmul.f32 %v1848, %v1850
    %v1852 = vsub.f32 1.0, %v1851
    %v1853 = vmul.f32 %v1850, %v1852
    %v1854 = vadd.f32 %v1850, %v1853
    %vm1855 = vweird.f32 %v1848
    %vm1856 = vweird.f32 %v1850
    %vm1857 = vmor %vm1855, %vm1856
    %v1858 = vsel %vm1857, %v1850, %v1854
    %v1859 = vand.u32 2147483647, %v1848
    %vm1860 = vcmp.eq.f32.partialorder %v1859, 8.507059e+37
    %v1861 = vand.u32 %v1848, 2147483648
    %v1862 = vor.u32 1.1754944e-38, %v1861
    %v1863 = vsel %vm1860, %v1862, %v1858
    %v1864 = vmul.f32 1.0, %v1863
    %v1865 = vrcp.pop %v1849
    %v1866 = vmul.f32 %v1849, %v1865
    %v1867 = vsub.f32 1.0, %v1866
    %v1868 = vmul.f32 %v1865, %v1867
    %v1869 = vadd.f32 %v1865, %v1868
    %vm1870 = vweird.f32 %v1849
    %vm1871 = vweird.f32 %v1865
    %vm1872 = vmor %vm1870, %vm1871
    %v1873 = vsel %vm1872, %v1865, %v1869
    %v1874 = vand.u32 2147483647, %v1849
    %vm1875 = vcmp.eq.f32.partialorder %v1874, 8.507059e+37
    %v1876 = vand.u32 %v1849, 2147483648
    %v1877 = vor.u32 1.1754944e-38, %v1876
    %v1878 = vsel %vm1875, %v1877, %v1873
    %v1879 = vmul.f32 1.0, %v1878
    %v1882 = vrot.slane %v1428, 7
    %v1883 = vrot.slane %v1429, 7
    %v1886 = vmul.f32 %v1824, %v1882
    %v1887 = vmul.f32 %v1839, %v1883
    %v1888 = vmul.f32 %v1786, %v1840
    %v1889 = vmul.f32 %v1801, %v1841
    %v1890 = vadd.f32 %v1886, %v1888
    %v1891 = vadd.f32 %v1887, %v1889
    %v1892 = vtanh.pop %v1890
    %v1893 = vtanh.pop %v1891
    %v1894 = vmul.f32 %v1864, %v1892
    %v1895 = vmul.f32 %v1879, %v1893
    %v1898 = vrot.slane %v1895, 7
    %vm1899 = vcmask 1043459
    %v1900 = vsel %vm1899, %v1898, %v1894
    %v1903 = vrot.slane %v1735, 6
    %v1905 = vpack.c.bf16 %v1900, %v1900
    %v1906 = vpack.c.bf16 %v1903, %v1903
    %v1909 = vrot.slane %v1905, 1
    %v1910 = vrot.slane %v1906, 1
    %1913 = vmatpush.bf16.msra.mxu0 %v803
    %1914 = vmatpush.bf16.msra.mxu0 %v795
    %1915 = vmatpush.bf16.msra.mxu0 %v787
    %1916 = vmatpush.bf16.msra.mxu0 %v779
    %1917 = vmatpush.bf16.msra.mxu0 %v771
    %1918 = vmatpush.bf16.msra.mxu0 %v763
    %1919 = vmatpush.bf16.msra.mxu0 %v755
    %1920 = vmatpush.bf16.msra.mxu0 %v747
    %1921 = vmatmul.bf16.gmra.mxu0 %v1909
    %v1922 = vpop.f32.mrf.mxu0
    %v1923 = vadd.f32 0.0, %v1922
    %v1924 = vpop.f32.mrf.mxu0
    %1925 = vdwg.mxu0
    %1926 = vmatpush.bf16.msra.mxu0 %v867
    %1927 = vmatpush.bf16.msra.mxu0 %v859
    %1928 = vmatpush.bf16.msra.mxu0 %v851
    %1929 = vmatpush.bf16.msra.mxu0 %v843
    %1930 = vmatpush.bf16.msra.mxu0 %v835
    %1931 = vmatpush.bf16.msra.mxu0 %v827
    %1932 = vmatpush.bf16.msra.mxu0 %v819
    %1933 = vmatpush.bf16.msra.mxu0 %v811
    %1934 = vmatmul.bf16.gmra.mxu0 %v1910
    %v1935 = vpop.f32.mrf.mxu0
    %v1936 = vadd.f32 %v1923, %v1935
    %v1937 = vpop.f32.mrf.mxu0
    %1938 = vdwg.mxu0
    %1939 = vmatpush.bf16.msra.mxu0 %v804
    %1940 = vmatpush.bf16.msra.mxu0 %v796
    %1941 = vmatpush.bf16.msra.mxu0 %v788
    %1942 = vmatpush.bf16.msra.mxu0 %v780
    %1943 = vmatpush.bf16.msra.mxu0 %v772
    %1944 = vmatpush.bf16.msra.mxu0 %v764
    %1945 = vmatpush.bf16.msra.mxu0 %v756
    %1946 = vmatpush.bf16.msra.mxu0 %v748
    %1947 = vmatmul.bf16.gmra.mxu0 %v1909
    %v1948 = vpop.f32.mrf.mxu0
    %v1949 = vadd.f32 0.0, %v1948
    %v1950 = vpop.f32.mrf.mxu0
    %1951 = vdwg.mxu0
    %1952 = vmatpush.bf16.msra.mxu0 %v868
    %1953 = vmatpush.bf16.msra.mxu0 %v860
    %1954 = vmatpush.bf16.msra.mxu0 %v852
    %1955 = vmatpush.bf16.msra.mxu0 %v844
    %1956 = vmatpush.bf16.msra.mxu0 %v836
    %1957 = vmatpush.bf16.msra.mxu0 %v828
    %1958 = vmatpush.bf16.msra.mxu0 %v820
    %1959 = vmatpush.bf16.msra.mxu0 %v812
    %1960 = vmatmul.bf16.gmra.mxu0 %v1910
    %v1961 = vpop.f32.mrf.mxu0
    %v1962 = vadd.f32 %v1949, %v1961
    %v1963 = vpop.f32.mrf.mxu0
    %1964 = vdwg.mxu0
    %1965 = vmatpush.bf16.msra.mxu0 %v805
    %1966 = vmatpush.bf16.msra.mxu0 %v797
    %1967 = vmatpush.bf16.msra.mxu0 %v789
    %1968 = vmatpush.bf16.msra.mxu0 %v781
    %1969 = vmatpush.bf16.msra.mxu0 %v773
    %1970 = vmatpush.bf16.msra.mxu0 %v765
    %1971 = vmatpush.bf16.msra.mxu0 %v757
    %1972 = vmatpush.bf16.msra.mxu0 %v749
    %1973 = vmatmul.bf16.gmra.mxu0 %v1909
    %v1974 = vpop.f32.mrf.mxu0
    %v1975 = vadd.f32 0.0, %v1974
    %v1976 = vpop.f32.mrf.mxu0
    %1977 = vdwg.mxu0
    %1978 = vmatpush.bf16.msra.mxu0 %v869
    %1979 = vmatpush.bf16.msra.mxu0 %v861
    %1980 = vmatpush.bf16.msra.mxu0 %v853
    %1981 = vmatpush.bf16.msra.mxu0 %v845
    %1982 = vmatpush.bf16.msra.mxu0 %v837
    %1983 = vmatpush.bf16.msra.mxu0 %v829
    %1984 = vmatpush.bf16.msra.mxu0 %v821
    %1985 = vmatpush.bf16.msra.mxu0 %v813
    %1986 = vmatmul.bf16.gmra.mxu0 %v1910
    %v1987 = vpop.f32.mrf.mxu0
    %v1988 = vadd.f32 %v1975, %v1987
    %v1989 = vpop.f32.mrf.mxu0
    %1990 = vdwg.mxu0
    %1991 = vmatpush.bf16.msra.mxu0 %v806
    %1992 = vmatpush.bf16.msra.mxu0 %v798
    %1993 = vmatpush.bf16.msra.mxu0 %v790
    %1994 = vmatpush.bf16.msra.mxu0 %v782
    %1995 = vmatpush.bf16.msra.mxu0 %v774
    %1996 = vmatpush.bf16.msra.mxu0 %v766
    %1997 = vmatpush.bf16.msra.mxu0 %v758
    %1998 = vmatpush.bf16.msra.mxu0 %v750
    %1999 = vmatmul.bf16.gmra.mxu0 %v1909
    %v2000 = vpop.f32.mrf.mxu0
    %v2001 = vadd.f32 0.0, %v2000
    %v2002 = vpop.f32.mrf.mxu0
    %2003 = vdwg.mxu0
    %2004 = vmatpush.bf16.msra.mxu0 %v870
    %2005 = vmatpush.bf16.msra.mxu0 %v862
    %2006 = vmatpush.bf16.msra.mxu0 %v854
    %2007 = vmatpush.bf16.msra.mxu0 %v846
    %2008 = vmatpush.bf16.msra.mxu0 %v838
    %2009 = vmatpush.bf16.msra.mxu0 %v830
    %2010 = vmatpush.bf16.msra.mxu0 %v822
    %2011 = vmatpush.bf16.msra.mxu0 %v814
    %2012 = vmatmul.bf16.gmra.mxu0 %v1910
    %v2013 = vpop.f32.mrf.mxu0
    %v2014 = vadd.f32 %v2001, %v2013
    %v2015 = vpop.f32.mrf.mxu0
    %2016 = vdwg.mxu0
    %2017 = vmatpush.bf16.msra.mxu0 %v807
    %2018 = vmatpush.bf16.msra.mxu0 %v799
    %2019 = vmatpush.bf16.msra.mxu0 %v791
    %2020 = vmatpush.bf16.msra.mxu0 %v783
    %2021 = vmatpush.bf16.msra.mxu0 %v775
    %2022 = vmatpush.bf16.msra.mxu0 %v767
    %2023 = vmatpush.bf16.msra.mxu0 %v759
    %2024 = vmatpush.bf16.msra.mxu0 %v751
    %2025 = vmatmul.bf16.gmra.mxu0 %v1909
    %v2026 = vpop.f32.mrf.mxu0
    %v2027 = vadd.f32 0.0, %v2026
    %v2028 = vpop.f32.mrf.mxu0
    %2029 = vdwg.mxu0
    %2030 = vmatpush.bf16.msra.mxu0 %v871
    %2031 = vmatpush.bf16.msra.mxu0 %v863
    %2032 = vmatpush.bf16.msra.mxu0 %v855
    %2033 = vmatpush.bf16.msra.mxu0 %v847
    %2034 = vmatpush.bf16.msra.mxu0 %v839
    %2035 = vmatpush.bf16.msra.mxu0 %v831
    %2036 = vmatpush.bf16.msra.mxu0 %v823
    %2037 = vmatpush.bf16.msra.mxu0 %v815
    %2038 = vmatmul.bf16.gmra.mxu0 %v1910
    %v2039 = vpop.f32.mrf.mxu0
    %v2040 = vadd.f32 %v2027, %v2039
    %v2041 = vpop.f32.mrf.mxu0
    %2042 = vdwg.mxu0
    %2043 = vmatpush.bf16.msra.mxu0 %v808
    %2044 = vmatpush.bf16.msra.mxu0 %v800
    %2045 = vmatpush.bf16.msra.mxu0 %v792
    %2046 = vmatpush.bf16.msra.mxu0 %v784
    %2047 = vmatpush.bf16.msra.mxu0 %v776
    %2048 = vmatpush.bf16.msra.mxu0 %v768
    %2049 = vmatpush.bf16.msra.mxu0 %v760
    %2050 = vmatpush.bf16.msra.mxu0 %v752
    %2051 = vmatmul.bf16.gmra.mxu0 %v1909
    %v2052 = vpop.f32.mrf.mxu0
    %v2053 = vadd.f32 0.0, %v2052
    %v2054 = vpop.f32.mrf.mxu0
    %2055 = vdwg.mxu0
    %2056 = vmatpush.bf16.msra.mxu0 %v872
    %2057 = vmatpush.bf16.msra.mxu0 %v864
    %2058 = vmatpush.bf16.msra.mxu0 %v856
    %2059 = vmatpush.bf16.msra.mxu0 %v848
    %2060 = vmatpush.bf16.msra.mxu0 %v840
    %2061 = vmatpush.bf16.msra.mxu0 %v832
    %2062 = vmatpush.bf16.msra.mxu0 %v824
    %2063 = vmatpush.bf16.msra.mxu0 %v816
    %2064 = vmatmul.bf16.gmra.mxu0 %v1910
    %v2065 = vpop.f32.mrf.mxu0
    %v2066 = vadd.f32 %v2053, %v2065
    %v2067 = vpop.f32.mrf.mxu0
    %2068 = vdwg.mxu0
    %2069 = vmatpush.bf16.msra.mxu0 %v809
    %2070 = vmatpush.bf16.msra.mxu0 %v801
    %2071 = vmatpush.bf16.msra.mxu0 %v793
    %2072 = vmatpush.bf16.msra.mxu0 %v785
    %2073 = vmatpush.bf16.msra.mxu0 %v777
    %2074 = vmatpush.bf16.msra.mxu0 %v769
    %2075 = vmatpush.bf16.msra.mxu0 %v761
    %2076 = vmatpush.bf16.msra.mxu0 %v753
    %2077 = vmatmul.bf16.gmra.mxu0 %v1909
    %v2078 = vpop.f32.mrf.mxu0
    %v2079 = vadd.f32 0.0, %v2078
    %v2080 = vpop.f32.mrf.mxu0
    %2081 = vdwg.mxu0
    %2082 = vmatpush.bf16.msra.mxu0 %v873
    %2083 = vmatpush.bf16.msra.mxu0 %v865
    %2084 = vmatpush.bf16.msra.mxu0 %v857
    %2085 = vmatpush.bf16.msra.mxu0 %v849
    %2086 = vmatpush.bf16.msra.mxu0 %v841
    %2087 = vmatpush.bf16.msra.mxu0 %v833
    %2088 = vmatpush.bf16.msra.mxu0 %v825
    %2089 = vmatpush.bf16.msra.mxu0 %v817
    %2090 = vmatmul.bf16.gmra.mxu0 %v1910
    %v2091 = vpop.f32.mrf.mxu0
    %v2092 = vadd.f32 %v2079, %v2091
    %v2093 = vpop.f32.mrf.mxu0
    %2094 = vdwg.mxu0
    %2095 = vmatpush.bf16.msra.mxu0 %v810
    %2096 = vmatpush.bf16.msra.mxu0 %v802
    %2097 = vmatpush.bf16.msra.mxu0 %v794
    %2098 = vmatpush.bf16.msra.mxu0 %v786
    %2099 = vmatpush.bf16.msra.mxu0 %v778
    %2100 = vmatpush.bf16.msra.mxu0 %v770
    %2101 = vmatpush.bf16.msra.mxu0 %v762
    %2102 = vmatpush.bf16.msra.mxu0 %v754
    %2103 = vmatmul.bf16.gmra.mxu0 %v1909
    %v2104 = vpop.f32.mrf.mxu0
    %v2105 = vadd.f32 0.0, %v2104
    %v2106 = vpop.f32.mrf.mxu0
    %2107 = vdwg.mxu0
    %2108 = vmatpush.bf16.msra.mxu0 %v874
    %2109 = vmatpush.bf16.msra.mxu0 %v866
    %2110 = vmatpush.bf16.msra.mxu0 %v858
    %2111 = vmatpush.bf16.msra.mxu0 %v850
    %2112 = vmatpush.bf16.msra.mxu0 %v842
    %2113 = vmatpush.bf16.msra.mxu0 %v834
    %2114 = vmatpush.bf16.msra.mxu0 %v826
    %2115 = vmatpush.bf16.msra.mxu0 %v818
    %2116 = vmatmul.bf16.gmra.mxu0 %v1910
    %v2117 = vpop.f32.mrf.mxu0
    %v2118 = vadd.f32 %v2105, %v2117
    %v2119 = vpop.f32.mrf.mxu0
    %2120 = vdwg.mxu0
    %v2121 = vadd.f32 %v2040, %v49
    %v2122 = vadd.f32 %v2066, %v50
    %v2123 = vadd.f32 %v2092, %v51
    %v2124 = vadd.f32 %v2118, %v52
    %v2125 = vxor.u32 %v2121, 2147483648
    %v2126 = vmul.f32 %v2125, 1.442695
    %v2127 = vpow.pop %v2126
    %v2128 = vadd.f32 %v2127, 1.0
    %v2129 = vrcp.pop %v2128
    %v2130 = vmul.f32 %v2128, %v2129
    %v2131 = vsub.f32 1.0, %v2130
    %v2132 = vmul.f32 %v2129, %v2131
    %v2133 = vadd.f32 %v2129, %v2132
    %vm2134 = vweird.f32 %v2128
    %vm2135 = vweird.f32 %v2129
    %vm2136 = vmor %vm2134, %vm2135
    %v2137 = vsel %vm2136, %v2129, %v2133
    %v2138 = vand.u32 2147483647, %v2128
    %vm2139 = vcmp.eq.f32.partialorder %v2138, 8.507059e+37
    %v2140 = vand.u32 %v2128, 2147483648
    %v2141 = vor.u32 1.1754944e-38, %v2140
    %v2142 = vsel %vm2139, %v2141, %v2137
    %v2143 = vmul.f32 1.0, %v2142
    %v2144 = vxor.u32 %v2122, 2147483648
    %v2145 = vmul.f32 %v2144, 1.442695
    %v2146 = vpow.pop %v2145
    %v2147 = vadd.f32 %v2146, 1.0
    %v2148 = vrcp.pop %v2147
    %v2149 = vmul.f32 %v2147, %v2148
    %v2150 = vsub.f32 1.0, %v2149
    %v2151 = vmul.f32 %v2148, %v2150
    %v2152 = vadd.f32 %v2148, %v2151
    %vm2153 = vweird.f32 %v2147
    %vm2154 = vweird.f32 %v2148
    %vm2155 = vmor %vm2153, %vm2154
    %v2156 = vsel %vm2155, %v2148, %v2152
    %v2157 = vand.u32 2147483647, %v2147
    %vm2158 = vcmp.eq.f32.partialorder %v2157, 8.507059e+37
    %v2159 = vand.u32 %v2147, 2147483648
    %v2160 = vor.u32 1.1754944e-38, %v2159
    %v2161 = vsel %vm2158, %v2160, %v2156
    %v2162 = vmul.f32 1.0, %v2161
    %v2163 = vtanh.pop %v2123
    %v2164 = vxor.u32 %v2124, 2147483648
    %v2165 = vmul.f32 %v2164, 1.442695
    %v2166 = vpow.pop %v2165
    %v2167 = vadd.f32 %v2166, 1.0
    %v2168 = vrcp.pop %v2167
    %v2169 = vmul.f32 %v2167, %v2168
    %v2170 = vsub.f32 1.0, %v2169
    %v2171 = vmul.f32 %v2168, %v2170
    %v2172 = vadd.f32 %v2168, %v2171
    %vm2173 = vweird.f32 %v2167
    %vm2174 = vweird.f32 %v2168
    %vm2175 = vmor %vm2173, %vm2174
    %v2176 = vsel %vm2175, %v2168, %v2172
    %v2177 = vand.u32 2147483647, %v2167
    %vm2178 = vcmp.eq.f32.partialorder %v2177, 8.507059e+37
    %v2179 = vand.u32 %v2167, 2147483648
    %v2180 = vor.u32 1.1754944e-38, %v2179
    %v2181 = vsel %vm2178, %v2180, %v2176
    %v2182 = vmul.f32 1.0, %v2181
    %v2183 = vmul.f32 %v2162, %v1733
    %v2184 = vmul.f32 %v2143, %v2163
    %v2185 = vadd.f32 %v2183, %v2184
    %v2186 = vtanh.pop %v2185
    %v2187 = vmul.f32 %v2182, %v2186
    %v2192 = vrot.slane %v1936, 5
    %v2193 = vrot.slane %v1962, 5
    %v2194 = vrot.slane %v1988, 5
    %v2195 = vrot.slane %v2014, 5
    %v2196 = vrot.slane %v1936, 6
    %v2197 = vrot.slane %v1962, 6
    %v2198 = vrot.slane %v1988, 6
    %v2199 = vrot.slane %v2014, 6
    %v2208 = vadd.f32 %v93, %v2192
    %v2209 = vadd.f32 %v94, %v2193
    %v2210 = vadd.f32 %v95, %v2194
    %v2211 = vadd.f32 %v96, %v2195
    %v2212 = vadd.f32 %v97, %v2196
    %v2213 = vadd.f32 %v98, %v2197
    %v2214 = vadd.f32 %v99, %v2198
    %v2215 = vadd.f32 %v100, %v2199
    %v2216 = vxor.u32 %v2208, 2147483648
    %v2217 = vxor.u32 %v2212, 2147483648
    %v2218 = vmul.f32 %v2216, 1.442695
    %v2219 = vpow.pop %v2218
    %v2220 = vmul.f32 %v2217, 1.442695
    %v2221 = vpow.pop %v2220
    %v2222 = vadd.f32 %v2219, 1.0
    %v2223 = vadd.f32 %v2221, 1.0
    %v2224 = vrcp.pop %v2222
    %v2225 = vmul.f32 %v2222, %v2224
    %v2226 = vsub.f32 1.0, %v2225
    %v2227 = vmul.f32 %v2224, %v2226
    %v2228 = vadd.f32 %v2224, %v2227
    %vm2229 = vweird.f32 %v2222
    %vm2230 = vweird.f32 %v2224
    %vm2231 = vmor %vm2229, %vm2230
    %v2232 = vsel %vm2231, %v2224, %v2228
    %v2233 = vand.u32 2147483647, %v2222
    %vm2234 = vcmp.eq.f32.partialorder %v2233, 8.507059e+37
    %v2235 = vand.u32 %v2222, 2147483648
    %v2236 = vor.u32 1.1754944e-38, %v2235
    %v2237 = vsel %vm2234, %v2236, %v2232
    %v2238 = vmul.f32 1.0, %v2237
    %v2239 = vrcp.pop %v2223
    %v2240 = vmul.f32 %v2223, %v2239
    %v2241 = vsub.f32 1.0, %v2240
    %v2242 = vmul.f32 %v2239, %v2241
    %v2243 = vadd.f32 %v2239, %v2242
    %vm2244 = vweird.f32 %v2223
    %vm2245 = vweird.f32 %v2239
    %vm2246 = vmor %vm2244, %vm2245
    %v2247 = vsel %vm2246, %v2239, %v2243
    %v2248 = vand.u32 2147483647, %v2223
    %vm2249 = vcmp.eq.f32.partialorder %v2248, 8.507059e+37
    %v2250 = vand.u32 %v2223, 2147483648
    %v2251 = vor.u32 1.1754944e-38, %v2250
    %v2252 = vsel %vm2249, %v2251, %v2247
    %v2253 = vmul.f32 1.0, %v2252
    %v2254 = vxor.u32 %v2209, 2147483648
    %v2255 = vxor.u32 %v2213, 2147483648
    %v2256 = vmul.f32 %v2254, 1.442695
    %v2257 = vpow.pop %v2256
    %v2258 = vmul.f32 %v2255, 1.442695
    %v2259 = vpow.pop %v2258
    %v2260 = vadd.f32 %v2257, 1.0
    %v2261 = vadd.f32 %v2259, 1.0
    %v2262 = vrcp.pop %v2260
    %v2263 = vmul.f32 %v2260, %v2262
    %v2264 = vsub.f32 1.0, %v2263
    %v2265 = vmul.f32 %v2262, %v2264
    %v2266 = vadd.f32 %v2262, %v2265
    %vm2267 = vweird.f32 %v2260
    %vm2268 = vweird.f32 %v2262
    %vm2269 = vmor %vm2267, %vm2268
    %v2270 = vsel %vm2269, %v2262, %v2266
    %v2271 = vand.u32 2147483647, %v2260
    %vm2272 = vcmp.eq.f32.partialorder %v2271, 8.507059e+37
    %v2273 = vand.u32 %v2260, 2147483648
    %v2274 = vor.u32 1.1754944e-38, %v2273
    %v2275 = vsel %vm2272, %v2274, %v2270
    %v2276 = vmul.f32 1.0, %v2275
    %v2277 = vrcp.pop %v2261
    %v2278 = vmul.f32 %v2261, %v2277
    %v2279 = vsub.f32 1.0, %v2278
    %v2280 = vmul.f32 %v2277, %v2279
    %v2281 = vadd.f32 %v2277, %v2280
    %vm2282 = vweird.f32 %v2261
    %vm2283 = vweird.f32 %v2277
    %vm2284 = vmor %vm2282, %vm2283
    %v2285 = vsel %vm2284, %v2277, %v2281
    %v2286 = vand.u32 2147483647, %v2261
    %vm2287 = vcmp.eq.f32.partialorder %v2286, 8.507059e+37
    %v2288 = vand.u32 %v2261, 2147483648
    %v2289 = vor.u32 1.1754944e-38, %v2288
    %v2290 = vsel %vm2287, %v2289, %v2285
    %v2291 = vmul.f32 1.0, %v2290
    %v2292 = vtanh.pop %v2210
    %v2293 = vtanh.pop %v2214
    %v2294 = vxor.u32 %v2211, 2147483648
    %v2295 = vxor.u32 %v2215, 2147483648
    %v2296 = vmul.f32 %v2294, 1.442695
    %v2297 = vpow.pop %v2296
    %v2298 = vmul.f32 %v2295, 1.442695
    %v2299 = vpow.pop %v2298
    %v2300 = vadd.f32 %v2297, 1.0
    %v2301 = vadd.f32 %v2299, 1.0
    %v2302 = vrcp.pop %v2300
    %v2303 = vmul.f32 %v2300, %v2302
    %v2304 = vsub.f32 1.0, %v2303
    %v2305 = vmul.f32 %v2302, %v2304
    %v2306 = vadd.f32 %v2302, %v2305
    %vm2307 = vweird.f32 %v2300
    %vm2308 = vweird.f32 %v2302
    %vm2309 = vmor %vm2307, %vm2308
    %v2310 = vsel %vm2309, %v2302, %v2306
    %v2311 = vand.u32 2147483647, %v2300
    %vm2312 = vcmp.eq.f32.partialorder %v2311, 8.507059e+37
    %v2313 = vand.u32 %v2300, 2147483648
    %v2314 = vor.u32 1.1754944e-38, %v2313
    %v2315 = vsel %vm2312, %v2314, %v2310
    %v2316 = vmul.f32 1.0, %v2315
    %v2317 = vrcp.pop %v2301
    %v2318 = vmul.f32 %v2301, %v2317
    %v2319 = vsub.f32 1.0, %v2318
    %v2320 = vmul.f32 %v2317, %v2319
    %v2321 = vadd.f32 %v2317, %v2320
    %vm2322 = vweird.f32 %v2301
    %vm2323 = vweird.f32 %v2317
    %vm2324 = vmor %vm2322, %vm2323
    %v2325 = vsel %vm2324, %v2317, %v2321
    %v2326 = vand.u32 2147483647, %v2301
    %vm2327 = vcmp.eq.f32.partialorder %v2326, 8.507059e+37
    %v2328 = vand.u32 %v2301, 2147483648
    %v2329 = vor.u32 1.1754944e-38, %v2328
    %v2330 = vsel %vm2327, %v2329, %v2325
    %v2331 = vmul.f32 1.0, %v2330
    %v2334 = vrot.slane %v1890, 7
    %v2335 = vrot.slane %v1891, 7
    %v2338 = vmul.f32 %v2276, %v2334
    %v2339 = vmul.f32 %v2291, %v2335
    %v2340 = vmul.f32 %v2238, %v2292
    %v2341 = vmul.f32 %v2253, %v2293
    %v2342 = vadd.f32 %v2338, %v2340
    %v2343 = vadd.f32 %v2339, %v2341
    %v2344 = vtanh.pop %v2342
    %v2345 = vtanh.pop %v2343
    %v2346 = vmul.f32 %v2316, %v2344
    %v2347 = vmul.f32 %v2331, %v2345
    %v2350 = vrot.slane %v2347, 7
    %vm2351 = vcmask 1044484
    %v2352 = vsel %vm2351, %v2350, %v2346
    %v2355 = vrot.slane %v2187, 5
    %v2357 = vpack.c.bf16 %v2352, %v2352
    %v2358 = vpack.c.bf16 %v2355, %v2355
    %v2360 = vshrl.u32 %v2357, 16
    %v2362 = vrot.slane %v2360, 1
    %v2363 = vshll.u32 %v2357, 16
    %v2365 = vrot.slane %v2363, 2
    %v2366 = vor.u32 %v2362, %v2365
    %v2368 = vshrl.u32 %v2358, 16
    %v2370 = vrot.slane %v2368, 1
    %v2371 = vshll.u32 %v2358, 16
    %v2373 = vrot.slane %v2371, 2
    %v2374 = vor.u32 %v2370, %v2373
    %2377 = vmatpush.bf16.msra.mxu0 %v803
    %2378 = vmatpush.bf16.msra.mxu0 %v795
    %2379 = vmatpush.bf16.msra.mxu0 %v787
    %2380 = vmatpush.bf16.msra.mxu0 %v779
    %2381 = vmatpush.bf16.msra.mxu0 %v771
    %2382 = vmatpush.bf16.msra.mxu0 %v763
    %2383 = vmatpush.bf16.msra.mxu0 %v755
    %2384 = vmatpush.bf16.msra.mxu0 %v747
    %2385 = vmatmul.bf16.gmra.mxu0 %v2366
    %v2386 = vpop.f32.mrf.mxu0
    %v2387 = vadd.f32 0.0, %v2386
    %v2388 = vpop.f32.mrf.mxu0
    %2389 = vdwg.mxu0
    %2390 = vmatpush.bf16.msra.mxu0 %v867
    %2391 = vmatpush.bf16.msra.mxu0 %v859
    %2392 = vmatpush.bf16.msra.mxu0 %v851
    %2393 = vmatpush.bf16.msra.mxu0 %v843
    %2394 = vmatpush.bf16.msra.mxu0 %v835
    %2395 = vmatpush.bf16.msra.mxu0 %v827
    %2396 = vmatpush.bf16.msra.mxu0 %v819
    %2397 = vmatpush.bf16.msra.mxu0 %v811
    %2398 = vmatmul.bf16.gmra.mxu0 %v2374
    %v2399 = vpop.f32.mrf.mxu0
    %v2400 = vadd.f32 %v2387, %v2399
    %v2401 = vpop.f32.mrf.mxu0
    %2402 = vdwg.mxu0
    %2403 = vmatpush.bf16.msra.mxu0 %v804
    %2404 = vmatpush.bf16.msra.mxu0 %v796
    %2405 = vmatpush.bf16.msra.mxu0 %v788
    %2406 = vmatpush.bf16.msra.mxu0 %v780
    %2407 = vmatpush.bf16.msra.mxu0 %v772
    %2408 = vmatpush.bf16.msra.mxu0 %v764
    %2409 = vmatpush.bf16.msra.mxu0 %v756
    %2410 = vmatpush.bf16.msra.mxu0 %v748
    %2411 = vmatmul.bf16.gmra.mxu0 %v2366
    %v2412 = vpop.f32.mrf.mxu0
    %v2413 = vadd.f32 0.0, %v2412
    %v2414 = vpop.f32.mrf.mxu0
    %2415 = vdwg.mxu0
    %2416 = vmatpush.bf16.msra.mxu0 %v868
    %2417 = vmatpush.bf16.msra.mxu0 %v860
    %2418 = vmatpush.bf16.msra.mxu0 %v852
    %2419 = vmatpush.bf16.msra.mxu0 %v844
    %2420 = vmatpush.bf16.msra.mxu0 %v836
    %2421 = vmatpush.bf16.msra.mxu0 %v828
    %2422 = vmatpush.bf16.msra.mxu0 %v820
    %2423 = vmatpush.bf16.msra.mxu0 %v812
    %2424 = vmatmul.bf16.gmra.mxu0 %v2374
    %v2425 = vpop.f32.mrf.mxu0
    %v2426 = vadd.f32 %v2413, %v2425
    %v2427 = vpop.f32.mrf.mxu0
    %2428 = vdwg.mxu0
    %2429 = vmatpush.bf16.msra.mxu0 %v805
    %2430 = vmatpush.bf16.msra.mxu0 %v797
    %2431 = vmatpush.bf16.msra.mxu0 %v789
    %2432 = vmatpush.bf16.msra.mxu0 %v781
    %2433 = vmatpush.bf16.msra.mxu0 %v773
    %2434 = vmatpush.bf16.msra.mxu0 %v765
    %2435 = vmatpush.bf16.msra.mxu0 %v757
    %2436 = vmatpush.bf16.msra.mxu0 %v749
    %2437 = vmatmul.bf16.gmra.mxu0 %v2366
    %v2438 = vpop.f32.mrf.mxu0
    %v2439 = vadd.f32 0.0, %v2438
    %v2440 = vpop.f32.mrf.mxu0
    %2441 = vdwg.mxu0
    %2442 = vmatpush.bf16.msra.mxu0 %v869
    %2443 = vmatpush.bf16.msra.mxu0 %v861
    %2444 = vmatpush.bf16.msra.mxu0 %v853
    %2445 = vmatpush.bf16.msra.mxu0 %v845
    %2446 = vmatpush.bf16.msra.mxu0 %v837
    %2447 = vmatpush.bf16.msra.mxu0 %v829
    %2448 = vmatpush.bf16.msra.mxu0 %v821
    %2449 = vmatpush.bf16.msra.mxu0 %v813
    %2450 = vmatmul.bf16.gmra.mxu0 %v2374
    %v2451 = vpop.f32.mrf.mxu0
    %v2452 = vadd.f32 %v2439, %v2451
    %v2453 = vpop.f32.mrf.mxu0
    %2454 = vdwg.mxu0
    %2455 = vmatpush.bf16.msra.mxu0 %v806
    %2456 = vmatpush.bf16.msra.mxu0 %v798
    %2457 = vmatpush.bf16.msra.mxu0 %v790
    %2458 = vmatpush.bf16.msra.mxu0 %v782
    %2459 = vmatpush.bf16.msra.mxu0 %v774
    %2460 = vmatpush.bf16.msra.mxu0 %v766
    %2461 = vmatpush.bf16.msra.mxu0 %v758
    %2462 = vmatpush.bf16.msra.mxu0 %v750
    %2463 = vmatmul.bf16.gmra.mxu0 %v2366
    %v2464 = vpop.f32.mrf.mxu0
    %v2465 = vadd.f32 0.0, %v2464
    %v2466 = vpop.f32.mrf.mxu0
    %2467 = vdwg.mxu0
    %2468 = vmatpush.bf16.msra.mxu0 %v870
    %2469 = vmatpush.bf16.msra.mxu0 %v862
    %2470 = vmatpush.bf16.msra.mxu0 %v854
    %2471 = vmatpush.bf16.msra.mxu0 %v846
    %2472 = vmatpush.bf16.msra.mxu0 %v838
    %2473 = vmatpush.bf16.msra.mxu0 %v830
    %2474 = vmatpush.bf16.msra.mxu0 %v822
    %2475 = vmatpush.bf16.msra.mxu0 %v814
    %2476 = vmatmul.bf16.gmra.mxu0 %v2374
    %v2477 = vpop.f32.mrf.mxu0
    %v2478 = vadd.f32 %v2465, %v2477
    %v2479 = vpop.f32.mrf.mxu0
    %2480 = vdwg.mxu0
    %2481 = vmatpush.bf16.msra.mxu0 %v807
    %2482 = vmatpush.bf16.msra.mxu0 %v799
    %2483 = vmatpush.bf16.msra.mxu0 %v791
    %2484 = vmatpush.bf16.msra.mxu0 %v783
    %2485 = vmatpush.bf16.msra.mxu0 %v775
    %2486 = vmatpush.bf16.msra.mxu0 %v767
    %2487 = vmatpush.bf16.msra.mxu0 %v759
    %2488 = vmatpush.bf16.msra.mxu0 %v751
    %2489 = vmatmul.bf16.gmra.mxu0 %v2366
    %v2490 = vpop.f32.mrf.mxu0
    %v2491 = vadd.f32 0.0, %v2490
    %v2492 = vpop.f32.mrf.mxu0
    %2493 = vdwg.mxu0
    %2494 = vmatpush.bf16.msra.mxu0 %v871
    %2495 = vmatpush.bf16.msra.mxu0 %v863
    %2496 = vmatpush.bf16.msra.mxu0 %v855
    %2497 = vmatpush.bf16.msra.mxu0 %v847
    %2498 = vmatpush.bf16.msra.mxu0 %v839
    %2499 = vmatpush.bf16.msra.mxu0 %v831
    %2500 = vmatpush.bf16.msra.mxu0 %v823
    %2501 = vmatpush.bf16.msra.mxu0 %v815
    %2502 = vmatmul.bf16.gmra.mxu0 %v2374
    %v2503 = vpop.f32.mrf.mxu0
    %v2504 = vadd.f32 %v2491, %v2503
    %v2505 = vpop.f32.mrf.mxu0
    %2506 = vdwg.mxu0
    %2507 = vmatpush.bf16.msra.mxu0 %v808
    %2508 = vmatpush.bf16.msra.mxu0 %v800
    %2509 = vmatpush.bf16.msra.mxu0 %v792
    %2510 = vmatpush.bf16.msra.mxu0 %v784
    %2511 = vmatpush.bf16.msra.mxu0 %v776
    %2512 = vmatpush.bf16.msra.mxu0 %v768
    %2513 = vmatpush.bf16.msra.mxu0 %v760
    %2514 = vmatpush.bf16.msra.mxu0 %v752
    %2515 = vmatmul.bf16.gmra.mxu0 %v2366
    %v2516 = vpop.f32.mrf.mxu0
    %v2517 = vadd.f32 0.0, %v2516
    %v2518 = vpop.f32.mrf.mxu0
    %2519 = vdwg.mxu0
    %2520 = vmatpush.bf16.msra.mxu0 %v872
    %2521 = vmatpush.bf16.msra.mxu0 %v864
    %2522 = vmatpush.bf16.msra.mxu0 %v856
    %2523 = vmatpush.bf16.msra.mxu0 %v848
    %2524 = vmatpush.bf16.msra.mxu0 %v840
    %2525 = vmatpush.bf16.msra.mxu0 %v832
    %2526 = vmatpush.bf16.msra.mxu0 %v824
    %2527 = vmatpush.bf16.msra.mxu0 %v816
    %2528 = vmatmul.bf16.gmra.mxu0 %v2374
    %v2529 = vpop.f32.mrf.mxu0
    %v2530 = vadd.f32 %v2517, %v2529
    %v2531 = vpop.f32.mrf.mxu0
    %2532 = vdwg.mxu0
    %2533 = vmatpush.bf16.msra.mxu0 %v809
    %2534 = vmatpush.bf16.msra.mxu0 %v801
    %2535 = vmatpush.bf16.msra.mxu0 %v793
    %2536 = vmatpush.bf16.msra.mxu0 %v785
    %2537 = vmatpush.bf16.msra.mxu0 %v777
    %2538 = vmatpush.bf16.msra.mxu0 %v769
    %2539 = vmatpush.bf16.msra.mxu0 %v761
    %2540 = vmatpush.bf16.msra.mxu0 %v753
    %2541 = vmatmul.bf16.gmra.mxu0 %v2366
    %v2542 = vpop.f32.mrf.mxu0
    %v2543 = vadd.f32 0.0, %v2542
    %v2544 = vpop.f32.mrf.mxu0
    %2545 = vdwg.mxu0
    %2546 = vmatpush.bf16.msra.mxu0 %v873
    %2547 = vmatpush.bf16.msra.mxu0 %v865
    %2548 = vmatpush.bf16.msra.mxu0 %v857
    %2549 = vmatpush.bf16.msra.mxu0 %v849
    %2550 = vmatpush.bf16.msra.mxu0 %v841
    %2551 = vmatpush.bf16.msra.mxu0 %v833
    %2552 = vmatpush.bf16.msra.mxu0 %v825
    %2553 = vmatpush.bf16.msra.mxu0 %v817
    %2554 = vmatmul.bf16.gmra.mxu0 %v2374
    %v2555 = vpop.f32.mrf.mxu0
    %v2556 = vadd.f32 %v2543, %v2555
    %v2557 = vpop.f32.mrf.mxu0
    %2558 = vdwg.mxu0
    %2559 = vmatpush.bf16.msra.mxu0 %v810
    %2560 = vmatpush.bf16.msra.mxu0 %v802
    %2561 = vmatpush.bf16.msra.mxu0 %v794
    %2562 = vmatpush.bf16.msra.mxu0 %v786
    %2563 = vmatpush.bf16.msra.mxu0 %v778
    %2564 = vmatpush.bf16.msra.mxu0 %v770
    %2565 = vmatpush.bf16.msra.mxu0 %v762
    %2566 = vmatpush.bf16.msra.mxu0 %v754
    %2567 = vmatmul.bf16.gmra.mxu0 %v2366
    %v2568 = vpop.f32.mrf.mxu0
    %v2569 = vadd.f32 0.0, %v2568
    %v2570 = vpop.f32.mrf.mxu0
    %2571 = vdwg.mxu0
    %2572 = vmatpush.bf16.msra.mxu0 %v874
    %2573 = vmatpush.bf16.msra.mxu0 %v866
    %2574 = vmatpush.bf16.msra.mxu0 %v858
    %2575 = vmatpush.bf16.msra.mxu0 %v850
    %2576 = vmatpush.bf16.msra.mxu0 %v842
    %2577 = vmatpush.bf16.msra.mxu0 %v834
    %2578 = vmatpush.bf16.msra.mxu0 %v826
    %2579 = vmatpush.bf16.msra.mxu0 %v818
    %2580 = vmatmul.bf16.gmra.mxu0 %v2374
    %v2581 = vpop.f32.mrf.mxu0
    %v2582 = vadd.f32 %v2569, %v2581
    %v2583 = vpop.f32.mrf.mxu0
    %2584 = vdwg.mxu0
    %v2585 = vadd.f32 %v2504, %v49
    %v2586 = vadd.f32 %v2530, %v50
    %v2587 = vadd.f32 %v2556, %v51
    %v2588 = vadd.f32 %v2582, %v52
    %v2589 = vxor.u32 %v2585, 2147483648
    %v2590 = vmul.f32 %v2589, 1.442695
    %v2591 = vpow.pop %v2590
    %v2592 = vadd.f32 %v2591, 1.0
    %v2593 = vrcp.pop %v2592
    %v2594 = vmul.f32 %v2592, %v2593
    %v2595 = vsub.f32 1.0, %v2594
    %v2596 = vmul.f32 %v2593, %v2595
    %v2597 = vadd.f32 %v2593, %v2596
    %vm2598 = vweird.f32 %v2592
    %vm2599 = vweird.f32 %v2593
    %vm2600 = vmor %vm2598, %vm2599
    %v2601 = vsel %vm2600, %v2593, %v2597
    %v2602 = vand.u32 2147483647, %v2592
    %vm2603 = vcmp.eq.f32.partialorder %v2602, 8.507059e+37
    %v2604 = vand.u32 %v2592, 2147483648
    %v2605 = vor.u32 1.1754944e-38, %v2604
    %v2606 = vsel %vm2603, %v2605, %v2601
    %v2607 = vmul.f32 1.0, %v2606
    %v2608 = vxor.u32 %v2586, 2147483648
    %v2609 = vmul.f32 %v2608, 1.442695
    %v2610 = vpow.pop %v2609
    %v2611 = vadd.f32 %v2610, 1.0
    %v2612 = vrcp.pop %v2611
    %v2613 = vmul.f32 %v2611, %v2612
    %v2614 = vsub.f32 1.0, %v2613
    %v2615 = vmul.f32 %v2612, %v2614
    %v2616 = vadd.f32 %v2612, %v2615
    %vm2617 = vweird.f32 %v2611
    %vm2618 = vweird.f32 %v2612
    %vm2619 = vmor %vm2617, %vm2618
    %v2620 = vsel %vm2619, %v2612, %v2616
    %v2621 = vand.u32 2147483647, %v2611
    %vm2622 = vcmp.eq.f32.partialorder %v2621, 8.507059e+37
    %v2623 = vand.u32 %v2611, 2147483648
    %v2624 = vor.u32 1.1754944e-38, %v2623
    %v2625 = vsel %vm2622, %v2624, %v2620
    %v2626 = vmul.f32 1.0, %v2625
    %v2627 = vtanh.pop %v2587
    %v2628 = vxor.u32 %v2588, 2147483648
    %v2629 = vmul.f32 %v2628, 1.442695
    %v2630 = vpow.pop %v2629
    %v2631 = vadd.f32 %v2630, 1.0
    %v2632 = vrcp.pop %v2631
    %v2633 = vmul.f32 %v2631, %v2632
    %v2634 = vsub.f32 1.0, %v2633
    %v2635 = vmul.f32 %v2632, %v2634
    %v2636 = vadd.f32 %v2632, %v2635
    %vm2637 = vweird.f32 %v2631
    %vm2638 = vweird.f32 %v2632
    %vm2639 = vmor %vm2637, %vm2638
    %v2640 = vsel %vm2639, %v2632, %v2636
    %v2641 = vand.u32 2147483647, %v2631
    %vm2642 = vcmp.eq.f32.partialorder %v2641, 8.507059e+37
    %v2643 = vand.u32 %v2631, 2147483648
    %v2644 = vor.u32 1.1754944e-38, %v2643
    %v2645 = vsel %vm2642, %v2644, %v2640
    %v2646 = vmul.f32 1.0, %v2645
    %v2647 = vmul.f32 %v2626, %v2185
    %v2648 = vmul.f32 %v2607, %v2627
    %v2649 = vadd.f32 %v2647, %v2648
    %v2650 = vtanh.pop %v2649
    %v2651 = vmul.f32 %v2646, %v2650
    %v2656 = vrot.slane %v2400, 4
    %v2657 = vrot.slane %v2426, 4
    %v2658 = vrot.slane %v2452, 4
    %v2659 = vrot.slane %v2478, 4
    %v2660 = vrot.slane %v2400, 5
    %v2661 = vrot.slane %v2426, 5
    %v2662 = vrot.slane %v2452, 5
    %v2663 = vrot.slane %v2478, 5
    %v2672 = vadd.f32 %v93, %v2656
    %v2673 = vadd.f32 %v94, %v2657
    %v2674 = vadd.f32 %v95, %v2658
    %v2675 = vadd.f32 %v96, %v2659
    %v2676 = vadd.f32 %v97, %v2660
    %v2677 = vadd.f32 %v98, %v2661
    %v2678 = vadd.f32 %v99, %v2662
    %v2679 = vadd.f32 %v100, %v2663
    %v2680 = vxor.u32 %v2672, 2147483648
    %v2681 = vxor.u32 %v2676, 2147483648
    %v2682 = vmul.f32 %v2680, 1.442695
    %v2683 = vpow.pop %v2682
    %v2684 = vmul.f32 %v2681, 1.442695
    %v2685 = vpow.pop %v2684
    %v2686 = vadd.f32 %v2683, 1.0
    %v2687 = vadd.f32 %v2685, 1.0
    %v2688 = vrcp.pop %v2686
    %v2689 = vmul.f32 %v2686, %v2688
    %v2690 = vsub.f32 1.0, %v2689
    %v2691 = vmul.f32 %v2688, %v2690
    %v2692 = vadd.f32 %v2688, %v2691
    %vm2693 = vweird.f32 %v2686
    %vm2694 = vweird.f32 %v2688
    %vm2695 = vmor %vm2693, %vm2694
    %v2696 = vsel %vm2695, %v2688, %v2692
    %v2697 = vand.u32 2147483647, %v2686
    %vm2698 = vcmp.eq.f32.partialorder %v2697, 8.507059e+37
    %v2699 = vand.u32 %v2686, 2147483648
    %v2700 = vor.u32 1.1754944e-38, %v2699
    %v2701 = vsel %vm2698, %v2700, %v2696
    %v2702 = vmul.f32 1.0, %v2701
    %v2703 = vrcp.pop %v2687
    %v2704 = vmul.f32 %v2687, %v2703
    %v2705 = vsub.f32 1.0, %v2704
    %v2706 = vmul.f32 %v2703, %v2705
    %v2707 = vadd.f32 %v2703, %v2706
    %vm2708 = vweird.f32 %v2687
    %vm2709 = vweird.f32 %v2703
    %vm2710 = vmor %vm2708, %vm2709
    %v2711 = vsel %vm2710, %v2703, %v2707
    %v2712 = vand.u32 2147483647, %v2687
    %vm2713 = vcmp.eq.f32.partialorder %v2712, 8.507059e+37
    %v2714 = vand.u32 %v2687, 2147483648
    %v2715 = vor.u32 1.1754944e-38, %v2714
    %v2716 = vsel %vm2713, %v2715, %v2711
    %v2717 = vmul.f32 1.0, %v2716
    %v2718 = vxor.u32 %v2673, 2147483648
    %v2719 = vxor.u32 %v2677, 2147483648
    %v2720 = vmul.f32 %v2718, 1.442695
    %v2721 = vpow.pop %v2720
    %v2722 = vmul.f32 %v2719, 1.442695
    %v2723 = vpow.pop %v2722
    %v2724 = vadd.f32 %v2721, 1.0
    %v2725 = vadd.f32 %v2723, 1.0
    %v2726 = vrcp.pop %v2724
    %v2727 = vmul.f32 %v2724, %v2726
    %v2728 = vsub.f32 1.0, %v2727
    %v2729 = vmul.f32 %v2726, %v2728
    %v2730 = vadd.f32 %v2726, %v2729
    %vm2731 = vweird.f32 %v2724
    %vm2732 = vweird.f32 %v2726
    %vm2733 = vmor %vm2731, %vm2732
    %v2734 = vsel %vm2733, %v2726, %v2730
    %v2735 = vand.u32 2147483647, %v2724
    %vm2736 = vcmp.eq.f32.partialorder %v2735, 8.507059e+37
    %v2737 = vand.u32 %v2724, 2147483648
    %v2738 = vor.u32 1.1754944e-38, %v2737
    %v2739 = vsel %vm2736, %v2738, %v2734
    %v2740 = vmul.f32 1.0, %v2739
    %v2741 = vrcp.pop %v2725
    %v2742 = vmul.f32 %v2725, %v2741
    %v2743 = vsub.f32 1.0, %v2742
    %v2744 = vmul.f32 %v2741, %v2743
    %v2745 = vadd.f32 %v2741, %v2744
    %vm2746 = vweird.f32 %v2725
    %vm2747 = vweird.f32 %v2741
    %vm2748 = vmor %vm2746, %vm2747
    %v2749 = vsel %vm2748, %v2741, %v2745
    %v2750 = vand.u32 2147483647, %v2725
    %vm2751 = vcmp.eq.f32.partialorder %v2750, 8.507059e+37
    %v2752 = vand.u32 %v2725, 2147483648
    %v2753 = vor.u32 1.1754944e-38, %v2752
    %v2754 = vsel %vm2751, %v2753, %v2749
    %v2755 = vmul.f32 1.0, %v2754
    %v2756 = vtanh.pop %v2674
    %v2757 = vtanh.pop %v2678
    %v2758 = vxor.u32 %v2675, 2147483648
    %v2759 = vxor.u32 %v2679, 2147483648
    %v2760 = vmul.f32 %v2758, 1.442695
    %v2761 = vpow.pop %v2760
    %v2762 = vmul.f32 %v2759, 1.442695
    %v2763 = vpow.pop %v2762
    %v2764 = vadd.f32 %v2761, 1.0
    %v2765 = vadd.f32 %v2763, 1.0
    %v2766 = vrcp.pop %v2764
    %v2767 = vmul.f32 %v2764, %v2766
    %v2768 = vsub.f32 1.0, %v2767
    %v2769 = vmul.f32 %v2766, %v2768
    %v2770 = vadd.f32 %v2766, %v2769
    %vm2771 = vweird.f32 %v2764
    %vm2772 = vweird.f32 %v2766
    %vm2773 = vmor %vm2771, %vm2772
    %v2774 = vsel %vm2773, %v2766, %v2770
    %v2775 = vand.u32 2147483647, %v2764
    %vm2776 = vcmp.eq.f32.partialorder %v2775, 8.507059e+37
    %v2777 = vand.u32 %v2764, 2147483648
    %v2778 = vor.u32 1.1754944e-38, %v2777
    %v2779 = vsel %vm2776, %v2778, %v2774
    %v2780 = vmul.f32 1.0, %v2779
    %v2781 = vrcp.pop %v2765
    %v2782 = vmul.f32 %v2765, %v2781
    %v2783 = vsub.f32 1.0, %v2782
    %v2784 = vmul.f32 %v2781, %v2783
    %v2785 = vadd.f32 %v2781, %v2784
    %vm2786 = vweird.f32 %v2765
    %vm2787 = vweird.f32 %v2781
    %vm2788 = vmor %vm2786, %vm2787
    %v2789 = vsel %vm2788, %v2781, %v2785
    %v2790 = vand.u32 2147483647, %v2765
    %vm2791 = vcmp.eq.f32.partialorder %v2790, 8.507059e+37
    %v2792 = vand.u32 %v2765, 2147483648
    %v2793 = vor.u32 1.1754944e-38, %v2792
    %v2794 = vsel %vm2791, %v2793, %v2789
    %v2795 = vmul.f32 1.0, %v2794
    %v2798 = vrot.slane %v2342, 7
    %v2799 = vrot.slane %v2343, 7
    %v2802 = vmul.f32 %v2740, %v2798
    %v2803 = vmul.f32 %v2755, %v2799
    %v2804 = vmul.f32 %v2702, %v2756
    %v2805 = vmul.f32 %v2717, %v2757
    %v2806 = vadd.f32 %v2802, %v2804
    %v2807 = vadd.f32 %v2803, %v2805
    %v2808 = vtanh.pop %v2806
    %v2809 = vtanh.pop %v2807
    %v2810 = vmul.f32 %v2780, %v2808
    %v2811 = vmul.f32 %v2795, %v2809
    %v2814 = vrot.slane %v2811, 7
    %vm2815 = vcmask 1045509
    %v2816 = vsel %vm2815, %v2814, %v2810
    %v2819 = vrot.slane %v2651, 4
    %v2821 = vpack.c.bf16 %v2816, %v2816
    %v2822 = vpack.c.bf16 %v2819, %v2819
    %v2825 = vrot.slane %v2821, 2
    %v2826 = vrot.slane %v2822, 2
    %2829 = vmatpush.bf16.msra.mxu0 %v803
    %2830 = vmatpush.bf16.msra.mxu0 %v795
    %2831 = vmatpush.bf16.msra.mxu0 %v787
    %2832 = vmatpush.bf16.msra.mxu0 %v779
    %2833 = vmatpush.bf16.msra.mxu0 %v771
    %2834 = vmatpush.bf16.msra.mxu0 %v763
    %2835 = vmatpush.bf16.msra.mxu0 %v755
    %2836 = vmatpush.bf16.msra.mxu0 %v747
    %2837 = vmatmul.bf16.gmra.mxu0 %v2825
    %v2838 = vpop.f32.mrf.mxu0
    %v2839 = vadd.f32 0.0, %v2838
    %v2840 = vpop.f32.mrf.mxu0
    %2841 = vdwg.mxu0
    %2842 = vmatpush.bf16.msra.mxu0 %v867
    %2843 = vmatpush.bf16.msra.mxu0 %v859
    %2844 = vmatpush.bf16.msra.mxu0 %v851
    %2845 = vmatpush.bf16.msra.mxu0 %v843
    %2846 = vmatpush.bf16.msra.mxu0 %v835
    %2847 = vmatpush.bf16.msra.mxu0 %v827
    %2848 = vmatpush.bf16.msra.mxu0 %v819
    %2849 = vmatpush.bf16.msra.mxu0 %v811
    %2850 = vmatmul.bf16.gmra.mxu0 %v2826
    %v2851 = vpop.f32.mrf.mxu0
    %v2852 = vadd.f32 %v2839, %v2851
    %v2853 = vpop.f32.mrf.mxu0
    %2854 = vdwg.mxu0
    %2855 = vmatpush.bf16.msra.mxu0 %v804
    %2856 = vmatpush.bf16.msra.mxu0 %v796
    %2857 = vmatpush.bf16.msra.mxu0 %v788
    %2858 = vmatpush.bf16.msra.mxu0 %v780
    %2859 = vmatpush.bf16.msra.mxu0 %v772
    %2860 = vmatpush.bf16.msra.mxu0 %v764
    %2861 = vmatpush.bf16.msra.mxu0 %v756
    %2862 = vmatpush.bf16.msra.mxu0 %v748
    %2863 = vmatmul.bf16.gmra.mxu0 %v2825
    %v2864 = vpop.f32.mrf.mxu0
    %v2865 = vadd.f32 0.0, %v2864
    %v2866 = vpop.f32.mrf.mxu0
    %2867 = vdwg.mxu0
    %2868 = vmatpush.bf16.msra.mxu0 %v868
    %2869 = vmatpush.bf16.msra.mxu0 %v860
    %2870 = vmatpush.bf16.msra.mxu0 %v852
    %2871 = vmatpush.bf16.msra.mxu0 %v844
    %2872 = vmatpush.bf16.msra.mxu0 %v836
    %2873 = vmatpush.bf16.msra.mxu0 %v828
    %2874 = vmatpush.bf16.msra.mxu0 %v820
    %2875 = vmatpush.bf16.msra.mxu0 %v812
    %2876 = vmatmul.bf16.gmra.mxu0 %v2826
    %v2877 = vpop.f32.mrf.mxu0
    %v2878 = vadd.f32 %v2865, %v2877
    %v2879 = vpop.f32.mrf.mxu0
    %2880 = vdwg.mxu0
    %2881 = vmatpush.bf16.msra.mxu0 %v805
    %2882 = vmatpush.bf16.msra.mxu0 %v797
    %2883 = vmatpush.bf16.msra.mxu0 %v789
    %2884 = vmatpush.bf16.msra.mxu0 %v781
    %2885 = vmatpush.bf16.msra.mxu0 %v773
    %2886 = vmatpush.bf16.msra.mxu0 %v765
    %2887 = vmatpush.bf16.msra.mxu0 %v757
    %2888 = vmatpush.bf16.msra.mxu0 %v749
    %2889 = vmatmul.bf16.gmra.mxu0 %v2825
    %v2890 = vpop.f32.mrf.mxu0
    %v2891 = vadd.f32 0.0, %v2890
    %v2892 = vpop.f32.mrf.mxu0
    %2893 = vdwg.mxu0
    %2894 = vmatpush.bf16.msra.mxu0 %v869
    %2895 = vmatpush.bf16.msra.mxu0 %v861
    %2896 = vmatpush.bf16.msra.mxu0 %v853
    %2897 = vmatpush.bf16.msra.mxu0 %v845
    %2898 = vmatpush.bf16.msra.mxu0 %v837
    %2899 = vmatpush.bf16.msra.mxu0 %v829
    %2900 = vmatpush.bf16.msra.mxu0 %v821
    %2901 = vmatpush.bf16.msra.mxu0 %v813
    %2902 = vmatmul.bf16.gmra.mxu0 %v2826
    %v2903 = vpop.f32.mrf.mxu0
    %v2904 = vadd.f32 %v2891, %v2903
    %v2905 = vpop.f32.mrf.mxu0
    %2906 = vdwg.mxu0
    %2907 = vmatpush.bf16.msra.mxu0 %v806
    %2908 = vmatpush.bf16.msra.mxu0 %v798
    %2909 = vmatpush.bf16.msra.mxu0 %v790
    %2910 = vmatpush.bf16.msra.mxu0 %v782
    %2911 = vmatpush.bf16.msra.mxu0 %v774
    %2912 = vmatpush.bf16.msra.mxu0 %v766
    %2913 = vmatpush.bf16.msra.mxu0 %v758
    %2914 = vmatpush.bf16.msra.mxu0 %v750
    %2915 = vmatmul.bf16.gmra.mxu0 %v2825
    %v2916 = vpop.f32.mrf.mxu0
    %v2917 = vadd.f32 0.0, %v2916
    %v2918 = vpop.f32.mrf.mxu0
    %2919 = vdwg.mxu0
    %2920 = vmatpush.bf16.msra.mxu0 %v870
    %2921 = vmatpush.bf16.msra.mxu0 %v862
    %2922 = vmatpush.bf16.msra.mxu0 %v854
    %2923 = vmatpush.bf16.msra.mxu0 %v846
    %2924 = vmatpush.bf16.msra.mxu0 %v838
    %2925 = vmatpush.bf16.msra.mxu0 %v830
    %2926 = vmatpush.bf16.msra.mxu0 %v822
    %2927 = vmatpush.bf16.msra.mxu0 %v814
    %2928 = vmatmul.bf16.gmra.mxu0 %v2826
    %v2929 = vpop.f32.mrf.mxu0
    %v2930 = vadd.f32 %v2917, %v2929
    %v2931 = vpop.f32.mrf.mxu0
    %2932 = vdwg.mxu0
    %2933 = vmatpush.bf16.msra.mxu0 %v807
    %2934 = vmatpush.bf16.msra.mxu0 %v799
    %2935 = vmatpush.bf16.msra.mxu0 %v791
    %2936 = vmatpush.bf16.msra.mxu0 %v783
    %2937 = vmatpush.bf16.msra.mxu0 %v775
    %2938 = vmatpush.bf16.msra.mxu0 %v767
    %2939 = vmatpush.bf16.msra.mxu0 %v759
    %2940 = vmatpush.bf16.msra.mxu0 %v751
    %2941 = vmatmul.bf16.gmra.mxu0 %v2825
    %v2942 = vpop.f32.mrf.mxu0
    %v2943 = vadd.f32 0.0, %v2942
    %v2944 = vpop.f32.mrf.mxu0
    %2945 = vdwg.mxu0
    %2946 = vmatpush.bf16.msra.mxu0 %v871
    %2947 = vmatpush.bf16.msra.mxu0 %v863
    %2948 = vmatpush.bf16.msra.mxu0 %v855
    %2949 = vmatpush.bf16.msra.mxu0 %v847
    %2950 = vmatpush.bf16.msra.mxu0 %v839
    %2951 = vmatpush.bf16.msra.mxu0 %v831
    %2952 = vmatpush.bf16.msra.mxu0 %v823
    %2953 = vmatpush.bf16.msra.mxu0 %v815
    %2954 = vmatmul.bf16.gmra.mxu0 %v2826
    %v2955 = vpop.f32.mrf.mxu0
    %v2956 = vadd.f32 %v2943, %v2955
    %v2957 = vpop.f32.mrf.mxu0
    %2958 = vdwg.mxu0
    %2959 = vmatpush.bf16.msra.mxu0 %v808
    %2960 = vmatpush.bf16.msra.mxu0 %v800
    %2961 = vmatpush.bf16.msra.mxu0 %v792
    %2962 = vmatpush.bf16.msra.mxu0 %v784
    %2963 = vmatpush.bf16.msra.mxu0 %v776
    %2964 = vmatpush.bf16.msra.mxu0 %v768
    %2965 = vmatpush.bf16.msra.mxu0 %v760
    %2966 = vmatpush.bf16.msra.mxu0 %v752
    %2967 = vmatmul.bf16.gmra.mxu0 %v2825
    %v2968 = vpop.f32.mrf.mxu0
    %v2969 = vadd.f32 0.0, %v2968
    %v2970 = vpop.f32.mrf.mxu0
    %2971 = vdwg.mxu0
    %2972 = vmatpush.bf16.msra.mxu0 %v872
    %2973 = vmatpush.bf16.msra.mxu0 %v864
    %2974 = vmatpush.bf16.msra.mxu0 %v856
    %2975 = vmatpush.bf16.msra.mxu0 %v848
    %2976 = vmatpush.bf16.msra.mxu0 %v840
    %2977 = vmatpush.bf16.msra.mxu0 %v832
    %2978 = vmatpush.bf16.msra.mxu0 %v824
    %2979 = vmatpush.bf16.msra.mxu0 %v816
    %2980 = vmatmul.bf16.gmra.mxu0 %v2826
    %v2981 = vpop.f32.mrf.mxu0
    %v2982 = vadd.f32 %v2969, %v2981
    %v2983 = vpop.f32.mrf.mxu0
    %2984 = vdwg.mxu0
    %2985 = vmatpush.bf16.msra.mxu0 %v809
    %2986 = vmatpush.bf16.msra.mxu0 %v801
    %2987 = vmatpush.bf16.msra.mxu0 %v793
    %2988 = vmatpush.bf16.msra.mxu0 %v785
    %2989 = vmatpush.bf16.msra.mxu0 %v777
    %2990 = vmatpush.bf16.msra.mxu0 %v769
    %2991 = vmatpush.bf16.msra.mxu0 %v761
    %2992 = vmatpush.bf16.msra.mxu0 %v753
    %2993 = vmatmul.bf16.gmra.mxu0 %v2825
    %v2994 = vpop.f32.mrf.mxu0
    %v2995 = vadd.f32 0.0, %v2994
    %v2996 = vpop.f32.mrf.mxu0
    %2997 = vdwg.mxu0
    %2998 = vmatpush.bf16.msra.mxu0 %v873
    %2999 = vmatpush.bf16.msra.mxu0 %v865
    %3000 = vmatpush.bf16.msra.mxu0 %v857
    %3001 = vmatpush.bf16.msra.mxu0 %v849
    %3002 = vmatpush.bf16.msra.mxu0 %v841
    %3003 = vmatpush.bf16.msra.mxu0 %v833
    %3004 = vmatpush.bf16.msra.mxu0 %v825
    %3005 = vmatpush.bf16.msra.mxu0 %v817
    %3006 = vmatmul.bf16.gmra.mxu0 %v2826
    %v3007 = vpop.f32.mrf.mxu0
    %v3008 = vadd.f32 %v2995, %v3007
    %v3009 = vpop.f32.mrf.mxu0
    %3010 = vdwg.mxu0
    %3011 = vmatpush.bf16.msra.mxu0 %v810
    %3012 = vmatpush.bf16.msra.mxu0 %v802
    %3013 = vmatpush.bf16.msra.mxu0 %v794
    %3014 = vmatpush.bf16.msra.mxu0 %v786
    %3015 = vmatpush.bf16.msra.mxu0 %v778
    %3016 = vmatpush.bf16.msra.mxu0 %v770
    %3017 = vmatpush.bf16.msra.mxu0 %v762
    %3018 = vmatpush.bf16.msra.mxu0 %v754
    %3019 = vmatmul.bf16.gmra.mxu0 %v2825
    %v3020 = vpop.f32.mrf.mxu0
    %v3021 = vadd.f32 0.0, %v3020
    %v3022 = vpop.f32.mrf.mxu0
    %3023 = vdwg.mxu0
    %3024 = vmatpush.bf16.msra.mxu0 %v874
    %3025 = vmatpush.bf16.msra.mxu0 %v866
    %3026 = vmatpush.bf16.msra.mxu0 %v858
    %3027 = vmatpush.bf16.msra.mxu0 %v850
    %3028 = vmatpush.bf16.msra.mxu0 %v842
    %3029 = vmatpush.bf16.msra.mxu0 %v834
    %3030 = vmatpush.bf16.msra.mxu0 %v826
    %3031 = vmatpush.bf16.msra.mxu0 %v818
    %3032 = vmatmul.bf16.gmra.mxu0 %v2826
    %v3033 = vpop.f32.mrf.mxu0
    %v3034 = vadd.f32 %v3021, %v3033
    %v3035 = vpop.f32.mrf.mxu0
    %3036 = vdwg.mxu0
    %v3037 = vadd.f32 %v2956, %v49
    %v3038 = vadd.f32 %v2982, %v50
    %v3039 = vadd.f32 %v3008, %v51
    %v3040 = vadd.f32 %v3034, %v52
    %v3041 = vxor.u32 %v3037, 2147483648
    %v3042 = vmul.f32 %v3041, 1.442695
    %v3043 = vpow.pop %v3042
    %v3044 = vadd.f32 %v3043, 1.0
    %v3045 = vrcp.pop %v3044
    %v3046 = vmul.f32 %v3044, %v3045
    %v3047 = vsub.f32 1.0, %v3046
    %v3048 = vmul.f32 %v3045, %v3047
    %v3049 = vadd.f32 %v3045, %v3048
    %vm3050 = vweird.f32 %v3044
    %vm3051 = vweird.f32 %v3045
    %vm3052 = vmor %vm3050, %vm3051
    %v3053 = vsel %vm3052, %v3045, %v3049
    %v3054 = vand.u32 2147483647, %v3044
    %vm3055 = vcmp.eq.f32.partialorder %v3054, 8.507059e+37
    %v3056 = vand.u32 %v3044, 2147483648
    %v3057 = vor.u32 1.1754944e-38, %v3056
    %v3058 = vsel %vm3055, %v3057, %v3053
    %v3059 = vmul.f32 1.0, %v3058
    %v3060 = vxor.u32 %v3038, 2147483648
    %v3061 = vmul.f32 %v3060, 1.442695
    %v3062 = vpow.pop %v3061
    %v3063 = vadd.f32 %v3062, 1.0
    %v3064 = vrcp.pop %v3063
    %v3065 = vmul.f32 %v3063, %v3064
    %v3066 = vsub.f32 1.0, %v3065
    %v3067 = vmul.f32 %v3064, %v3066
    %v3068 = vadd.f32 %v3064, %v3067
    %vm3069 = vweird.f32 %v3063
    %vm3070 = vweird.f32 %v3064
    %vm3071 = vmor %vm3069, %vm3070
    %v3072 = vsel %vm3071, %v3064, %v3068
    %v3073 = vand.u32 2147483647, %v3063
    %vm3074 = vcmp.eq.f32.partialorder %v3073, 8.507059e+37
    %v3075 = vand.u32 %v3063, 2147483648
    %v3076 = vor.u32 1.1754944e-38, %v3075
    %v3077 = vsel %vm3074, %v3076, %v3072
    %v3078 = vmul.f32 1.0, %v3077
    %v3079 = vtanh.pop %v3039
    %v3080 = vxor.u32 %v3040, 2147483648
    %v3081 = vmul.f32 %v3080, 1.442695
    %v3082 = vpow.pop %v3081
    %v3083 = vadd.f32 %v3082, 1.0
    %v3084 = vrcp.pop %v3083
    %v3085 = vmul.f32 %v3083, %v3084
    %v3086 = vsub.f32 1.0, %v3085
    %v3087 = vmul.f32 %v3084, %v3086
    %v3088 = vadd.f32 %v3084, %v3087
    %vm3089 = vweird.f32 %v3083
    %vm3090 = vweird.f32 %v3084
    %vm3091 = vmor %vm3089, %vm3090
    %v3092 = vsel %vm3091, %v3084, %v3088
    %v3093 = vand.u32 2147483647, %v3083
    %vm3094 = vcmp.eq.f32.partialorder %v3093, 8.507059e+37
    %v3095 = vand.u32 %v3083, 2147483648
    %v3096 = vor.u32 1.1754944e-38, %v3095
    %v3097 = vsel %vm3094, %v3096, %v3092
    %v3098 = vmul.f32 1.0, %v3097
    %v3099 = vmul.f32 %v3078, %v2649
    %v3100 = vmul.f32 %v3059, %v3079
    %v3101 = vadd.f32 %v3099, %v3100
    %v3102 = vtanh.pop %v3101
    %v3103 = vmul.f32 %v3098, %v3102
    %v3108 = vrot.slane %v2852, 3
    %v3109 = vrot.slane %v2878, 3
    %v3110 = vrot.slane %v2904, 3
    %v3111 = vrot.slane %v2930, 3
    %v3112 = vrot.slane %v2852, 4
    %v3113 = vrot.slane %v2878, 4
    %v3114 = vrot.slane %v2904, 4
    %v3115 = vrot.slane %v2930, 4
    %v3124 = vadd.f32 %v93, %v3108
    %v3125 = vadd.f32 %v94, %v3109
    %v3126 = vadd.f32 %v95, %v3110
    %v3127 = vadd.f32 %v96, %v3111
    %v3128 = vadd.f32 %v97, %v3112
    %v3129 = vadd.f32 %v98, %v3113
    %v3130 = vadd.f32 %v99, %v3114
    %v3131 = vadd.f32 %v100, %v3115
    %v3132 = vxor.u32 %v3124, 2147483648
    %v3133 = vxor.u32 %v3128, 2147483648
    %v3134 = vmul.f32 %v3132, 1.442695
    %v3135 = vpow.pop %v3134
    %v3136 = vmul.f32 %v3133, 1.442695
    %v3137 = vpow.pop %v3136
    %v3138 = vadd.f32 %v3135, 1.0
    %v3139 = vadd.f32 %v3137, 1.0
    %v3140 = vrcp.pop %v3138
    %v3141 = vmul.f32 %v3138, %v3140
    %v3142 = vsub.f32 1.0, %v3141
    %v3143 = vmul.f32 %v3140, %v3142
    %v3144 = vadd.f32 %v3140, %v3143
    %vm3145 = vweird.f32 %v3138
    %vm3146 = vweird.f32 %v3140
    %vm3147 = vmor %vm3145, %vm3146
    %v3148 = vsel %vm3147, %v3140, %v3144
    %v3149 = vand.u32 2147483647, %v3138
    %vm3150 = vcmp.eq.f32.partialorder %v3149, 8.507059e+37
    %v3151 = vand.u32 %v3138, 2147483648
    %v3152 = vor.u32 1.1754944e-38, %v3151
    %v3153 = vsel %vm3150, %v3152, %v3148
    %v3154 = vmul.f32 1.0, %v3153
    %v3155 = vrcp.pop %v3139
    %v3156 = vmul.f32 %v3139, %v3155
    %v3157 = vsub.f32 1.0, %v3156
    %v3158 = vmul.f32 %v3155, %v3157
    %v3159 = vadd.f32 %v3155, %v3158
    %vm3160 = vweird.f32 %v3139
    %vm3161 = vweird.f32 %v3155
    %vm3162 = vmor %vm3160, %vm3161
    %v3163 = vsel %vm3162, %v3155, %v3159
    %v3164 = vand.u32 2147483647, %v3139
    %vm3165 = vcmp.eq.f32.partialorder %v3164, 8.507059e+37
    %v3166 = vand.u32 %v3139, 2147483648
    %v3167 = vor.u32 1.1754944e-38, %v3166
    %v3168 = vsel %vm3165, %v3167, %v3163
    %v3169 = vmul.f32 1.0, %v3168
    %v3170 = vxor.u32 %v3125, 2147483648
    %v3171 = vxor.u32 %v3129, 2147483648
    %v3172 = vmul.f32 %v3170, 1.442695
    %v3173 = vpow.pop %v3172
    %v3174 = vmul.f32 %v3171, 1.442695
    %v3175 = vpow.pop %v3174
    %v3176 = vadd.f32 %v3173, 1.0
    %v3177 = vadd.f32 %v3175, 1.0
    %v3178 = vrcp.pop %v3176
    %v3179 = vmul.f32 %v3176, %v3178
    %v3180 = vsub.f32 1.0, %v3179
    %v3181 = vmul.f32 %v3178, %v3180
    %v3182 = vadd.f32 %v3178, %v3181
    %vm3183 = vweird.f32 %v3176
    %vm3184 = vweird.f32 %v3178
    %vm3185 = vmor %vm3183, %vm3184
    %v3186 = vsel %vm3185, %v3178, %v3182
    %v3187 = vand.u32 2147483647, %v3176
    %vm3188 = vcmp.eq.f32.partialorder %v3187, 8.507059e+37
    %v3189 = vand.u32 %v3176, 2147483648
    %v3190 = vor.u32 1.1754944e-38, %v3189
    %v3191 = vsel %vm3188, %v3190, %v3186
    %v3192 = vmul.f32 1.0, %v3191
    %v3193 = vrcp.pop %v3177
    %v3194 = vmul.f32 %v3177, %v3193
    %v3195 = vsub.f32 1.0, %v3194
    %v3196 = vmul.f32 %v3193, %v3195
    %v3197 = vadd.f32 %v3193, %v3196
    %vm3198 = vweird.f32 %v3177
    %vm3199 = vweird.f32 %v3193
    %vm3200 = vmor %vm3198, %vm3199
    %v3201 = vsel %vm3200, %v3193, %v3197
    %v3202 = vand.u32 2147483647, %v3177
    %vm3203 = vcmp.eq.f32.partialorder %v3202, 8.507059e+37
    %v3204 = vand.u32 %v3177, 2147483648
    %v3205 = vor.u32 1.1754944e-38, %v3204
    %v3206 = vsel %vm3203, %v3205, %v3201
    %v3207 = vmul.f32 1.0, %v3206
    %v3208 = vtanh.pop %v3126
    %v3209 = vtanh.pop %v3130
    %v3210 = vxor.u32 %v3127, 2147483648
    %v3211 = vxor.u32 %v3131, 2147483648
    %v3212 = vmul.f32 %v3210, 1.442695
    %v3213 = vpow.pop %v3212
    %v3214 = vmul.f32 %v3211, 1.442695
    %v3215 = vpow.pop %v3214
    %v3216 = vadd.f32 %v3213, 1.0
    %v3217 = vadd.f32 %v3215, 1.0
    %v3218 = vrcp.pop %v3216
    %v3219 = vmul.f32 %v3216, %v3218
    %v3220 = vsub.f32 1.0, %v3219
    %v3221 = vmul.f32 %v3218, %v3220
    %v3222 = vadd.f32 %v3218, %v3221
    %vm3223 = vweird.f32 %v3216
    %vm3224 = vweird.f32 %v3218
    %vm3225 = vmor %vm3223, %vm3224
    %v3226 = vsel %vm3225, %v3218, %v3222
    %v3227 = vand.u32 2147483647, %v3216
    %vm3228 = vcmp.eq.f32.partialorder %v3227, 8.507059e+37
    %v3229 = vand.u32 %v3216, 2147483648
    %v3230 = vor.u32 1.1754944e-38, %v3229
    %v3231 = vsel %vm3228, %v3230, %v3226
    %v3232 = vmul.f32 1.0, %v3231
    %v3233 = vrcp.pop %v3217
    %v3234 = vmul.f32 %v3217, %v3233
    %v3235 = vsub.f32 1.0, %v3234
    %v3236 = vmul.f32 %v3233, %v3235
    %v3237 = vadd.f32 %v3233, %v3236
    %vm3238 = vweird.f32 %v3217
    %vm3239 = vweird.f32 %v3233
    %vm3240 = vmor %vm3238, %vm3239
    %v3241 = vsel %vm3240, %v3233, %v3237
    %v3242 = vand.u32 2147483647, %v3217
    %vm3243 = vcmp.eq.f32.partialorder %v3242, 8.507059e+37
    %v3244 = vand.u32 %v3217, 2147483648
    %v3245 = vor.u32 1.1754944e-38, %v3244
    %v3246 = vsel %vm3243, %v3245, %v3241
    %v3247 = vmul.f32 1.0, %v3246
    %v3250 = vrot.slane %v2806, 7
    %v3251 = vrot.slane %v2807, 7
    %v3254 = vmul.f32 %v3192, %v3250
    %v3255 = vmul.f32 %v3207, %v3251
    %v3256 = vmul.f32 %v3154, %v3208
    %v3257 = vmul.f32 %v3169, %v3209
    %v3258 = vadd.f32 %v3254, %v3256
    %v3259 = vadd.f32 %v3255, %v3257
    %v3260 = vtanh.pop %v3258
    %v3261 = vtanh.pop %v3259
    %v3262 = vmul.f32 %v3232, %v3260
    %v3263 = vmul.f32 %v3247, %v3261
    %v3266 = vrot.slane %v3263, 7
    %vm3267 = vcmask 1046534
    %v3268 = vsel %vm3267, %v3266, %v3262
    %v3271 = vrot.slane %v3103, 3
    %v3273 = vpack.c.bf16 %v3268, %v3268
    %v3274 = vpack.c.bf16 %v3271, %v3271
    %v3276 = vshrl.u32 %v3273, 16
    %v3278 = vrot.slane %v3276, 2
    %v3279 = vshll.u32 %v3273, 16
    %v3281 = vrot.slane %v3279, 3
    %v3282 = vor.u32 %v3278, %v3281
    %v3284 = vshrl.u32 %v3274, 16
    %v3286 = vrot.slane %v3284, 2
    %v3287 = vshll.u32 %v3274, 16
    %v3289 = vrot.slane %v3287, 3
    %v3290 = vor.u32 %v3286, %v3289
    %3293 = vmatpush.bf16.msra.mxu0 %v803
    %3294 = vmatpush.bf16.msra.mxu0 %v795
    %3295 = vmatpush.bf16.msra.mxu0 %v787
    %3296 = vmatpush.bf16.msra.mxu0 %v779
    %3297 = vmatpush.bf16.msra.mxu0 %v771
    %3298 = vmatpush.bf16.msra.mxu0 %v763
    %3299 = vmatpush.bf16.msra.mxu0 %v755
    %3300 = vmatpush.bf16.msra.mxu0 %v747
    %3301 = vmatmul.bf16.gmra.mxu0 %v3282
    %v3302 = vpop.f32.mrf.mxu0
    %v3303 = vadd.f32 0.0, %v3302
    %v3304 = vpop.f32.mrf.mxu0
    %3305 = vdwg.mxu0
    %3306 = vmatpush.bf16.msra.mxu0 %v867
    %3307 = vmatpush.bf16.msra.mxu0 %v859
    %3308 = vmatpush.bf16.msra.mxu0 %v851
    %3309 = vmatpush.bf16.msra.mxu0 %v843
    %3310 = vmatpush.bf16.msra.mxu0 %v835
    %3311 = vmatpush.bf16.msra.mxu0 %v827
    %3312 = vmatpush.bf16.msra.mxu0 %v819
    %3313 = vmatpush.bf16.msra.mxu0 %v811
    %3314 = vmatmul.bf16.gmra.mxu0 %v3290
    %v3315 = vpop.f32.mrf.mxu0
    %v3316 = vadd.f32 %v3303, %v3315
    %v3317 = vpop.f32.mrf.mxu0
    %3318 = vdwg.mxu0
    %3319 = vmatpush.bf16.msra.mxu0 %v804
    %3320 = vmatpush.bf16.msra.mxu0 %v796
    %3321 = vmatpush.bf16.msra.mxu0 %v788
    %3322 = vmatpush.bf16.msra.mxu0 %v780
    %3323 = vmatpush.bf16.msra.mxu0 %v772
    %3324 = vmatpush.bf16.msra.mxu0 %v764
    %3325 = vmatpush.bf16.msra.mxu0 %v756
    %3326 = vmatpush.bf16.msra.mxu0 %v748
    %3327 = vmatmul.bf16.gmra.mxu0 %v3282
    %v3328 = vpop.f32.mrf.mxu0
    %v3329 = vadd.f32 0.0, %v3328
    %v3330 = vpop.f32.mrf.mxu0
    %3331 = vdwg.mxu0
    %3332 = vmatpush.bf16.msra.mxu0 %v868
    %3333 = vmatpush.bf16.msra.mxu0 %v860
    %3334 = vmatpush.bf16.msra.mxu0 %v852
    %3335 = vmatpush.bf16.msra.mxu0 %v844
    %3336 = vmatpush.bf16.msra.mxu0 %v836
    %3337 = vmatpush.bf16.msra.mxu0 %v828
    %3338 = vmatpush.bf16.msra.mxu0 %v820
    %3339 = vmatpush.bf16.msra.mxu0 %v812
    %3340 = vmatmul.bf16.gmra.mxu0 %v3290
    %v3341 = vpop.f32.mrf.mxu0
    %v3342 = vadd.f32 %v3329, %v3341
    %v3343 = vpop.f32.mrf.mxu0
    %3344 = vdwg.mxu0
    %3345 = vmatpush.bf16.msra.mxu0 %v805
    %3346 = vmatpush.bf16.msra.mxu0 %v797
    %3347 = vmatpush.bf16.msra.mxu0 %v789
    %3348 = vmatpush.bf16.msra.mxu0 %v781
    %3349 = vmatpush.bf16.msra.mxu0 %v773
    %3350 = vmatpush.bf16.msra.mxu0 %v765
    %3351 = vmatpush.bf16.msra.mxu0 %v757
    %3352 = vmatpush.bf16.msra.mxu0 %v749
    %3353 = vmatmul.bf16.gmra.mxu0 %v3282
    %v3354 = vpop.f32.mrf.mxu0
    %v3355 = vadd.f32 0.0, %v3354
    %v3356 = vpop.f32.mrf.mxu0
    %3357 = vdwg.mxu0
    %3358 = vmatpush.bf16.msra.mxu0 %v869
    %3359 = vmatpush.bf16.msra.mxu0 %v861
    %3360 = vmatpush.bf16.msra.mxu0 %v853
    %3361 = vmatpush.bf16.msra.mxu0 %v845
    %3362 = vmatpush.bf16.msra.mxu0 %v837
    %3363 = vmatpush.bf16.msra.mxu0 %v829
    %3364 = vmatpush.bf16.msra.mxu0 %v821
    %3365 = vmatpush.bf16.msra.mxu0 %v813
    %3366 = vmatmul.bf16.gmra.mxu0 %v3290
    %v3367 = vpop.f32.mrf.mxu0
    %v3368 = vadd.f32 %v3355, %v3367
    %v3369 = vpop.f32.mrf.mxu0
    %3370 = vdwg.mxu0
    %3371 = vmatpush.bf16.msra.mxu0 %v806
    %3372 = vmatpush.bf16.msra.mxu0 %v798
    %3373 = vmatpush.bf16.msra.mxu0 %v790
    %3374 = vmatpush.bf16.msra.mxu0 %v782
    %3375 = vmatpush.bf16.msra.mxu0 %v774
    %3376 = vmatpush.bf16.msra.mxu0 %v766
    %3377 = vmatpush.bf16.msra.mxu0 %v758
    %3378 = vmatpush.bf16.msra.mxu0 %v750
    %3379 = vmatmul.bf16.gmra.mxu0 %v3282
    %v3380 = vpop.f32.mrf.mxu0
    %v3381 = vadd.f32 0.0, %v3380
    %v3382 = vpop.f32.mrf.mxu0
    %3383 = vdwg.mxu0
    %3384 = vmatpush.bf16.msra.mxu0 %v870
    %3385 = vmatpush.bf16.msra.mxu0 %v862
    %3386 = vmatpush.bf16.msra.mxu0 %v854
    %3387 = vmatpush.bf16.msra.mxu0 %v846
    %3388 = vmatpush.bf16.msra.mxu0 %v838
    %3389 = vmatpush.bf16.msra.mxu0 %v830
    %3390 = vmatpush.bf16.msra.mxu0 %v822
    %3391 = vmatpush.bf16.msra.mxu0 %v814
    %3392 = vmatmul.bf16.gmra.mxu0 %v3290
    %v3393 = vpop.f32.mrf.mxu0
    %v3394 = vadd.f32 %v3381, %v3393
    %v3395 = vpop.f32.mrf.mxu0
    %3396 = vdwg.mxu0
    %3397 = vmatpush.bf16.msra.mxu0 %v807
    %3398 = vmatpush.bf16.msra.mxu0 %v799
    %3399 = vmatpush.bf16.msra.mxu0 %v791
    %3400 = vmatpush.bf16.msra.mxu0 %v783
    %3401 = vmatpush.bf16.msra.mxu0 %v775
    %3402 = vmatpush.bf16.msra.mxu0 %v767
    %3403 = vmatpush.bf16.msra.mxu0 %v759
    %3404 = vmatpush.bf16.msra.mxu0 %v751
    %3405 = vmatmul.bf16.gmra.mxu0 %v3282
    %v3406 = vpop.f32.mrf.mxu0
    %v3407 = vadd.f32 0.0, %v3406
    %v3408 = vpop.f32.mrf.mxu0
    %3409 = vdwg.mxu0
    %3410 = vmatpush.bf16.msra.mxu0 %v871
    %3411 = vmatpush.bf16.msra.mxu0 %v863
    %3412 = vmatpush.bf16.msra.mxu0 %v855
    %3413 = vmatpush.bf16.msra.mxu0 %v847
    %3414 = vmatpush.bf16.msra.mxu0 %v839
    %3415 = vmatpush.bf16.msra.mxu0 %v831
    %3416 = vmatpush.bf16.msra.mxu0 %v823
    %3417 = vmatpush.bf16.msra.mxu0 %v815
    %3418 = vmatmul.bf16.gmra.mxu0 %v3290
    %v3419 = vpop.f32.mrf.mxu0
    %v3420 = vadd.f32 %v3407, %v3419
    %v3421 = vpop.f32.mrf.mxu0
    %3422 = vdwg.mxu0
    %3423 = vmatpush.bf16.msra.mxu0 %v808
    %3424 = vmatpush.bf16.msra.mxu0 %v800
    %3425 = vmatpush.bf16.msra.mxu0 %v792
    %3426 = vmatpush.bf16.msra.mxu0 %v784
    %3427 = vmatpush.bf16.msra.mxu0 %v776
    %3428 = vmatpush.bf16.msra.mxu0 %v768
    %3429 = vmatpush.bf16.msra.mxu0 %v760
    %3430 = vmatpush.bf16.msra.mxu0 %v752
    %3431 = vmatmul.bf16.gmra.mxu0 %v3282
    %v3432 = vpop.f32.mrf.mxu0
    %v3433 = vadd.f32 0.0, %v3432
    %v3434 = vpop.f32.mrf.mxu0
    %3435 = vdwg.mxu0
    %3436 = vmatpush.bf16.msra.mxu0 %v872
    %3437 = vmatpush.bf16.msra.mxu0 %v864
    %3438 = vmatpush.bf16.msra.mxu0 %v856
    %3439 = vmatpush.bf16.msra.mxu0 %v848
    %3440 = vmatpush.bf16.msra.mxu0 %v840
    %3441 = vmatpush.bf16.msra.mxu0 %v832
    %3442 = vmatpush.bf16.msra.mxu0 %v824
    %3443 = vmatpush.bf16.msra.mxu0 %v816
    %3444 = vmatmul.bf16.gmra.mxu0 %v3290
    %v3445 = vpop.f32.mrf.mxu0
    %v3446 = vadd.f32 %v3433, %v3445
    %v3447 = vpop.f32.mrf.mxu0
    %3448 = vdwg.mxu0
    %3449 = vmatpush.bf16.msra.mxu0 %v809
    %3450 = vmatpush.bf16.msra.mxu0 %v801
    %3451 = vmatpush.bf16.msra.mxu0 %v793
    %3452 = vmatpush.bf16.msra.mxu0 %v785
    %3453 = vmatpush.bf16.msra.mxu0 %v777
    %3454 = vmatpush.bf16.msra.mxu0 %v769
    %3455 = vmatpush.bf16.msra.mxu0 %v761
    %3456 = vmatpush.bf16.msra.mxu0 %v753
    %3457 = vmatmul.bf16.gmra.mxu0 %v3282
    %v3458 = vpop.f32.mrf.mxu0
    %v3459 = vadd.f32 0.0, %v3458
    %v3460 = vpop.f32.mrf.mxu0
    %3461 = vdwg.mxu0
    %3462 = vmatpush.bf16.msra.mxu0 %v873
    %3463 = vmatpush.bf16.msra.mxu0 %v865
    %3464 = vmatpush.bf16.msra.mxu0 %v857
    %3465 = vmatpush.bf16.msra.mxu0 %v849
    %3466 = vmatpush.bf16.msra.mxu0 %v841
    %3467 = vmatpush.bf16.msra.mxu0 %v833
    %3468 = vmatpush.bf16.msra.mxu0 %v825
    %3469 = vmatpush.bf16.msra.mxu0 %v817
    %3470 = vmatmul.bf16.gmra.mxu0 %v3290
    %v3471 = vpop.f32.mrf.mxu0
    %v3472 = vadd.f32 %v3459, %v3471
    %v3473 = vpop.f32.mrf.mxu0
    %3474 = vdwg.mxu0
    %3475 = vmatpush.bf16.msra.mxu0 %v810
    %3476 = vmatpush.bf16.msra.mxu0 %v802
    %3477 = vmatpush.bf16.msra.mxu0 %v794
    %3478 = vmatpush.bf16.msra.mxu0 %v786
    %3479 = vmatpush.bf16.msra.mxu0 %v778
    %3480 = vmatpush.bf16.msra.mxu0 %v770
    %3481 = vmatpush.bf16.msra.mxu0 %v762
    %3482 = vmatpush.bf16.msra.mxu0 %v754
    %3483 = vmatmul.bf16.gmra.mxu0 %v3282
    %v3484 = vpop.f32.mrf.mxu0
    %v3485 = vadd.f32 0.0, %v3484
    %v3486 = vpop.f32.mrf.mxu0
    %3487 = vdwg.mxu0
    %3488 = vmatpush.bf16.msra.mxu0 %v874
    %3489 = vmatpush.bf16.msra.mxu0 %v866
    %3490 = vmatpush.bf16.msra.mxu0 %v858
    %3491 = vmatpush.bf16.msra.mxu0 %v850
    %3492 = vmatpush.bf16.msra.mxu0 %v842
    %3493 = vmatpush.bf16.msra.mxu0 %v834
    %3494 = vmatpush.bf16.msra.mxu0 %v826
    %3495 = vmatpush.bf16.msra.mxu0 %v818
    %3496 = vmatmul.bf16.gmra.mxu0 %v3290
    %v3497 = vpop.f32.mrf.mxu0
    %v3498 = vadd.f32 %v3485, %v3497
    %v3499 = vpop.f32.mrf.mxu0
    %3500 = vdwg.mxu0
    %v3501 = vadd.f32 %v3420, %v49
    %v3502 = vadd.f32 %v3446, %v50
    %v3503 = vadd.f32 %v3472, %v51
    %v3504 = vadd.f32 %v3498, %v52
    %v3505 = vxor.u32 %v3501, 2147483648
    %v3506 = vmul.f32 %v3505, 1.442695
    %v3507 = vpow.pop %v3506
    %v3508 = vadd.f32 %v3507, 1.0
    %v3509 = vrcp.pop %v3508
    %v3510 = vmul.f32 %v3508, %v3509
    %v3511 = vsub.f32 1.0, %v3510
    %v3512 = vmul.f32 %v3509, %v3511
    %v3513 = vadd.f32 %v3509, %v3512
    %vm3514 = vweird.f32 %v3508
    %vm3515 = vweird.f32 %v3509
    %vm3516 = vmor %vm3514, %vm3515
    %v3517 = vsel %vm3516, %v3509, %v3513
    %v3518 = vand.u32 2147483647, %v3508
    %vm3519 = vcmp.eq.f32.partialorder %v3518, 8.507059e+37
    %v3520 = vand.u32 %v3508, 2147483648
    %v3521 = vor.u32 1.1754944e-38, %v3520
    %v3522 = vsel %vm3519, %v3521, %v3517
    %v3523 = vmul.f32 1.0, %v3522
    %v3524 = vxor.u32 %v3502, 2147483648
    %v3525 = vmul.f32 %v3524, 1.442695
    %v3526 = vpow.pop %v3525
    %v3527 = vadd.f32 %v3526, 1.0
    %v3528 = vrcp.pop %v3527
    %v3529 = vmul.f32 %v3527, %v3528
    %v3530 = vsub.f32 1.0, %v3529
    %v3531 = vmul.f32 %v3528, %v3530
    %v3532 = vadd.f32 %v3528, %v3531
    %vm3533 = vweird.f32 %v3527
    %vm3534 = vweird.f32 %v3528
    %vm3535 = vmor %vm3533, %vm3534
    %v3536 = vsel %vm3535, %v3528, %v3532
    %v3537 = vand.u32 2147483647, %v3527
    %vm3538 = vcmp.eq.f32.partialorder %v3537, 8.507059e+37
    %v3539 = vand.u32 %v3527, 2147483648
    %v3540 = vor.u32 1.1754944e-38, %v3539
    %v3541 = vsel %vm3538, %v3540, %v3536
    %v3542 = vmul.f32 1.0, %v3541
    %v3543 = vtanh.pop %v3503
    %v3544 = vxor.u32 %v3504, 2147483648
    %v3545 = vmul.f32 %v3544, 1.442695
    %v3546 = vpow.pop %v3545
    %v3547 = vadd.f32 %v3546, 1.0
    %v3548 = vrcp.pop %v3547
    %v3549 = vmul.f32 %v3547, %v3548
    %v3550 = vsub.f32 1.0, %v3549
    %v3551 = vmul.f32 %v3548, %v3550
    %v3552 = vadd.f32 %v3548, %v3551
    %vm3553 = vweird.f32 %v3547
    %vm3554 = vweird.f32 %v3548
    %vm3555 = vmor %vm3553, %vm3554
    %v3556 = vsel %vm3555, %v3548, %v3552
    %v3557 = vand.u32 2147483647, %v3547
    %vm3558 = vcmp.eq.f32.partialorder %v3557, 8.507059e+37
    %v3559 = vand.u32 %v3547, 2147483648
    %v3560 = vor.u32 1.1754944e-38, %v3559
    %v3561 = vsel %vm3558, %v3560, %v3556
    %v3562 = vmul.f32 1.0, %v3561
    %v3563 = vmul.f32 %v3542, %v3101
    %v3564 = vmul.f32 %v3523, %v3543
    %v3565 = vadd.f32 %v3563, %v3564
    %v3566 = vtanh.pop %v3565
    %v3567 = vmul.f32 %v3562, %v3566
    %v3572 = vrot.slane %v3316, 2
    %v3573 = vrot.slane %v3342, 2
    %v3574 = vrot.slane %v3368, 2
    %v3575 = vrot.slane %v3394, 2
    %v3576 = vrot.slane %v3316, 3
    %v3577 = vrot.slane %v3342, 3
    %v3578 = vrot.slane %v3368, 3
    %v3579 = vrot.slane %v3394, 3
    %v3588 = vadd.f32 %v93, %v3572
    %v3589 = vadd.f32 %v94, %v3573
    %v3590 = vadd.f32 %v95, %v3574
    %v3591 = vadd.f32 %v96, %v3575
    %v3592 = vadd.f32 %v97, %v3576
    %v3593 = vadd.f32 %v98, %v3577
    %v3594 = vadd.f32 %v99, %v3578
    %v3595 = vadd.f32 %v100, %v3579
    %v3596 = vxor.u32 %v3588, 2147483648
    %v3597 = vxor.u32 %v3592, 2147483648
    %v3598 = vmul.f32 %v3596, 1.442695
    %v3599 = vpow.pop %v3598
    %v3600 = vmul.f32 %v3597, 1.442695
    %v3601 = vpow.pop %v3600
    %v3602 = vadd.f32 %v3599, 1.0
    %v3603 = vadd.f32 %v3601, 1.0
    %v3604 = vrcp.pop %v3602
    %v3605 = vmul.f32 %v3602, %v3604
    %v3606 = vsub.f32 1.0, %v3605
    %v3607 = vmul.f32 %v3604, %v3606
    %v3608 = vadd.f32 %v3604, %v3607
    %vm3609 = vweird.f32 %v3602
    %vm3610 = vweird.f32 %v3604
    %vm3611 = vmor %vm3609, %vm3610
    %v3612 = vsel %vm3611, %v3604, %v3608
    %v3613 = vand.u32 2147483647, %v3602
    %vm3614 = vcmp.eq.f32.partialorder %v3613, 8.507059e+37
    %v3615 = vand.u32 %v3602, 2147483648
    %v3616 = vor.u32 1.1754944e-38, %v3615
    %v3617 = vsel %vm3614, %v3616, %v3612
    %v3618 = vmul.f32 1.0, %v3617
    %v3619 = vrcp.pop %v3603
    %v3620 = vmul.f32 %v3603, %v3619
    %v3621 = vsub.f32 1.0, %v3620
    %v3622 = vmul.f32 %v3619, %v3621
    %v3623 = vadd.f32 %v3619, %v3622
    %vm3624 = vweird.f32 %v3603
    %vm3625 = vweird.f32 %v3619
    %vm3626 = vmor %vm3624, %vm3625
    %v3627 = vsel %vm3626, %v3619, %v3623
    %v3628 = vand.u32 2147483647, %v3603
    %vm3629 = vcmp.eq.f32.partialorder %v3628, 8.507059e+37
    %v3630 = vand.u32 %v3603, 2147483648
    %v3631 = vor.u32 1.1754944e-38, %v3630
    %v3632 = vsel %vm3629, %v3631, %v3627
    %v3633 = vmul.f32 1.0, %v3632
    %v3634 = vxor.u32 %v3589, 2147483648
    %v3635 = vxor.u32 %v3593, 2147483648
    %v3636 = vmul.f32 %v3634, 1.442695
    %v3637 = vpow.pop %v3636
    %v3638 = vmul.f32 %v3635, 1.442695
    %v3639 = vpow.pop %v3638
    %v3640 = vadd.f32 %v3637, 1.0
    %v3641 = vadd.f32 %v3639, 1.0
    %v3642 = vrcp.pop %v3640
    %v3643 = vmul.f32 %v3640, %v3642
    %v3644 = vsub.f32 1.0, %v3643
    %v3645 = vmul.f32 %v3642, %v3644
    %v3646 = vadd.f32 %v3642, %v3645
    %vm3647 = vweird.f32 %v3640
    %vm3648 = vweird.f32 %v3642
    %vm3649 = vmor %vm3647, %vm3648
    %v3650 = vsel %vm3649, %v3642, %v3646
    %v3651 = vand.u32 2147483647, %v3640
    %vm3652 = vcmp.eq.f32.partialorder %v3651, 8.507059e+37
    %v3653 = vand.u32 %v3640, 2147483648
    %v3654 = vor.u32 1.1754944e-38, %v3653
    %v3655 = vsel %vm3652, %v3654, %v3650
    %v3656 = vmul.f32 1.0, %v3655
    %v3657 = vrcp.pop %v3641
    %v3658 = vmul.f32 %v3641, %v3657
    %v3659 = vsub.f32 1.0, %v3658
    %v3660 = vmul.f32 %v3657, %v3659
    %v3661 = vadd.f32 %v3657, %v3660
    %vm3662 = vweird.f32 %v3641
    %vm3663 = vweird.f32 %v3657
    %vm3664 = vmor %vm3662, %vm3663
    %v3665 = vsel %vm3664, %v3657, %v3661
    %v3666 = vand.u32 2147483647, %v3641
    %vm3667 = vcmp.eq.f32.partialorder %v3666, 8.507059e+37
    %v3668 = vand.u32 %v3641, 2147483648
    %v3669 = vor.u32 1.1754944e-38, %v3668
    %v3670 = vsel %vm3667, %v3669, %v3665
    %v3671 = vmul.f32 1.0, %v3670
    %v3672 = vtanh.pop %v3590
    %v3673 = vtanh.pop %v3594
    %v3674 = vxor.u32 %v3591, 2147483648
    %v3675 = vxor.u32 %v3595, 2147483648
    %v3676 = vmul.f32 %v3674, 1.442695
    %v3677 = vpow.pop %v3676
    %v3678 = vmul.f32 %v3675, 1.442695
    %v3679 = vpow.pop %v3678
    %v3680 = vadd.f32 %v3677, 1.0
    %v3681 = vadd.f32 %v3679, 1.0
    %v3682 = vrcp.pop %v3680
    %v3683 = vmul.f32 %v3680, %v3682
    %v3684 = vsub.f32 1.0, %v3683
    %v3685 = vmul.f32 %v3682, %v3684
    %v3686 = vadd.f32 %v3682, %v3685
    %vm3687 = vweird.f32 %v3680
    %vm3688 = vweird.f32 %v3682
    %vm3689 = vmor %vm3687, %vm3688
    %v3690 = vsel %vm3689, %v3682, %v3686
    %v3691 = vand.u32 2147483647, %v3680
    %vm3692 = vcmp.eq.f32.partialorder %v3691, 8.507059e+37
    %v3693 = vand.u32 %v3680, 2147483648
    %v3694 = vor.u32 1.1754944e-38, %v3693
    %v3695 = vsel %vm3692, %v3694, %v3690
    %v3696 = vmul.f32 1.0, %v3695
    %v3697 = vrcp.pop %v3681
    %v3698 = vmul.f32 %v3681, %v3697
    %v3699 = vsub.f32 1.0, %v3698
    %v3700 = vmul.f32 %v3697, %v3699
    %v3701 = vadd.f32 %v3697, %v3700
    %vm3702 = vweird.f32 %v3681
    %vm3703 = vweird.f32 %v3697
    %vm3704 = vmor %vm3702, %vm3703
    %v3705 = vsel %vm3704, %v3697, %v3701
    %v3706 = vand.u32 2147483647, %v3681
    %vm3707 = vcmp.eq.f32.partialorder %v3706, 8.507059e+37
    %v3708 = vand.u32 %v3681, 2147483648
    %v3709 = vor.u32 1.1754944e-38, %v3708
    %v3710 = vsel %vm3707, %v3709, %v3705
    %v3711 = vmul.f32 1.0, %v3710
    %v3714 = vrot.slane %v3258, 7
    %v3715 = vrot.slane %v3259, 7
    %v3718 = vmul.f32 %v3656, %v3714
    %v3719 = vmul.f32 %v3671, %v3715
    %v3720 = vmul.f32 %v3618, %v3672
    %v3721 = vmul.f32 %v3633, %v3673
    %v3722 = vadd.f32 %v3718, %v3720
    %v3723 = vadd.f32 %v3719, %v3721
    %v3724 = vtanh.pop %v3722
    %v3725 = vtanh.pop %v3723
    %v3726 = vmul.f32 %v3696, %v3724
    %v3727 = vmul.f32 %v3711, %v3725
    %v3730 = vrot.slane %v3727, 7
    %vm3731 = vcmask 1047559
    %v3732 = vsel %vm3731, %v3730, %v3726
    %v3735 = vrot.slane %v3567, 2
    %v3737 = vpack.c.bf16 %v3732, %v3732
    %v3738 = vpack.c.bf16 %v3735, %v3735
    %v3741 = vrot.slane %v3737, 3
    %v3742 = vrot.slane %v3738, 3
    %3745 = vmatpush.bf16.msra.mxu0 %v803
    %3746 = vmatpush.bf16.msra.mxu0 %v795
    %3747 = vmatpush.bf16.msra.mxu0 %v787
    %3748 = vmatpush.bf16.msra.mxu0 %v779
    %3749 = vmatpush.bf16.msra.mxu0 %v771
    %3750 = vmatpush.bf16.msra.mxu0 %v763
    %3751 = vmatpush.bf16.msra.mxu0 %v755
    %3752 = vmatpush.bf16.msra.mxu0 %v747
    %3753 = vmatmul.bf16.gmra.mxu0 %v3741
    %v3754 = vpop.f32.mrf.mxu0
    %v3755 = vadd.f32 0.0, %v3754
    %v3756 = vpop.f32.mrf.mxu0
    %3757 = vdwg.mxu0
    %3758 = vmatpush.bf16.msra.mxu0 %v867
    %3759 = vmatpush.bf16.msra.mxu0 %v859
    %3760 = vmatpush.bf16.msra.mxu0 %v851
    %3761 = vmatpush.bf16.msra.mxu0 %v843
    %3762 = vmatpush.bf16.msra.mxu0 %v835
    %3763 = vmatpush.bf16.msra.mxu0 %v827
    %3764 = vmatpush.bf16.msra.mxu0 %v819
    %3765 = vmatpush.bf16.msra.mxu0 %v811
    %3766 = vmatmul.bf16.gmra.mxu0 %v3742
    %v3767 = vpop.f32.mrf.mxu0
    %v3768 = vadd.f32 %v3755, %v3767
    %v3769 = vpop.f32.mrf.mxu0
    %3770 = vdwg.mxu0
    %3771 = vmatpush.bf16.msra.mxu0 %v804
    %3772 = vmatpush.bf16.msra.mxu0 %v796
    %3773 = vmatpush.bf16.msra.mxu0 %v788
    %3774 = vmatpush.bf16.msra.mxu0 %v780
    %3775 = vmatpush.bf16.msra.mxu0 %v772
    %3776 = vmatpush.bf16.msra.mxu0 %v764
    %3777 = vmatpush.bf16.msra.mxu0 %v756
    %3778 = vmatpush.bf16.msra.mxu0 %v748
    %3779 = vmatmul.bf16.gmra.mxu0 %v3741
    %v3780 = vpop.f32.mrf.mxu0
    %v3781 = vadd.f32 0.0, %v3780
    %v3782 = vpop.f32.mrf.mxu0
    %3783 = vdwg.mxu0
    %3784 = vmatpush.bf16.msra.mxu0 %v868
    %3785 = vmatpush.bf16.msra.mxu0 %v860
    %3786 = vmatpush.bf16.msra.mxu0 %v852
    %3787 = vmatpush.bf16.msra.mxu0 %v844
    %3788 = vmatpush.bf16.msra.mxu0 %v836
    %3789 = vmatpush.bf16.msra.mxu0 %v828
    %3790 = vmatpush.bf16.msra.mxu0 %v820
    %3791 = vmatpush.bf16.msra.mxu0 %v812
    %3792 = vmatmul.bf16.gmra.mxu0 %v3742
    %v3793 = vpop.f32.mrf.mxu0
    %v3794 = vadd.f32 %v3781, %v3793
    %v3795 = vpop.f32.mrf.mxu0
    %3796 = vdwg.mxu0
    %3797 = vmatpush.bf16.msra.mxu0 %v805
    %3798 = vmatpush.bf16.msra.mxu0 %v797
    %3799 = vmatpush.bf16.msra.mxu0 %v789
    %3800 = vmatpush.bf16.msra.mxu0 %v781
    %3801 = vmatpush.bf16.msra.mxu0 %v773
    %3802 = vmatpush.bf16.msra.mxu0 %v765
    %3803 = vmatpush.bf16.msra.mxu0 %v757
    %3804 = vmatpush.bf16.msra.mxu0 %v749
    %3805 = vmatmul.bf16.gmra.mxu0 %v3741
    %v3806 = vpop.f32.mrf.mxu0
    %v3807 = vadd.f32 0.0, %v3806
    %v3808 = vpop.f32.mrf.mxu0
    %3809 = vdwg.mxu0
    %3810 = vmatpush.bf16.msra.mxu0 %v869
    %3811 = vmatpush.bf16.msra.mxu0 %v861
    %3812 = vmatpush.bf16.msra.mxu0 %v853
    %3813 = vmatpush.bf16.msra.mxu0 %v845
    %3814 = vmatpush.bf16.msra.mxu0 %v837
    %3815 = vmatpush.bf16.msra.mxu0 %v829
    %3816 = vmatpush.bf16.msra.mxu0 %v821
    %3817 = vmatpush.bf16.msra.mxu0 %v813
    %3818 = vmatmul.bf16.gmra.mxu0 %v3742
    %v3819 = vpop.f32.mrf.mxu0
    %v3820 = vadd.f32 %v3807, %v3819
    %v3821 = vpop.f32.mrf.mxu0
    %3822 = vdwg.mxu0
    %3823 = vmatpush.bf16.msra.mxu0 %v806
    %3824 = vmatpush.bf16.msra.mxu0 %v798
    %3825 = vmatpush.bf16.msra.mxu0 %v790
    %3826 = vmatpush.bf16.msra.mxu0 %v782
    %3827 = vmatpush.bf16.msra.mxu0 %v774
    %3828 = vmatpush.bf16.msra.mxu0 %v766
    %3829 = vmatpush.bf16.msra.mxu0 %v758
    %3830 = vmatpush.bf16.msra.mxu0 %v750
    %3831 = vmatmul.bf16.gmra.mxu0 %v3741
    %v3832 = vpop.f32.mrf.mxu0
    %v3833 = vadd.f32 0.0, %v3832
    %v3834 = vpop.f32.mrf.mxu0
    %3835 = vdwg.mxu0
    %3836 = vmatpush.bf16.msra.mxu0 %v870
    %3837 = vmatpush.bf16.msra.mxu0 %v862
    %3838 = vmatpush.bf16.msra.mxu0 %v854
    %3839 = vmatpush.bf16.msra.mxu0 %v846
    %3840 = vmatpush.bf16.msra.mxu0 %v838
    %3841 = vmatpush.bf16.msra.mxu0 %v830
    %3842 = vmatpush.bf16.msra.mxu0 %v822
    %3843 = vmatpush.bf16.msra.mxu0 %v814
    %3844 = vmatmul.bf16.gmra.mxu0 %v3742
    %v3845 = vpop.f32.mrf.mxu0
    %v3846 = vadd.f32 %v3833, %v3845
    %v3847 = vpop.f32.mrf.mxu0
    %3848 = vdwg.mxu0
    %3849 = vmatpush.bf16.msra.mxu0 %v807
    %3850 = vmatpush.bf16.msra.mxu0 %v799
    %3851 = vmatpush.bf16.msra.mxu0 %v791
    %3852 = vmatpush.bf16.msra.mxu0 %v783
    %3853 = vmatpush.bf16.msra.mxu0 %v775
    %3854 = vmatpush.bf16.msra.mxu0 %v767
    %3855 = vmatpush.bf16.msra.mxu0 %v759
    %3856 = vmatpush.bf16.msra.mxu0 %v751
    %3857 = vmatmul.bf16.gmra.mxu0 %v3741
    %v3858 = vpop.f32.mrf.mxu0
    %v3859 = vadd.f32 0.0, %v3858
    %v3860 = vpop.f32.mrf.mxu0
    %3861 = vdwg.mxu0
    %3862 = vmatpush.bf16.msra.mxu0 %v871
    %3863 = vmatpush.bf16.msra.mxu0 %v863
    %3864 = vmatpush.bf16.msra.mxu0 %v855
    %3865 = vmatpush.bf16.msra.mxu0 %v847
    %3866 = vmatpush.bf16.msra.mxu0 %v839
    %3867 = vmatpush.bf16.msra.mxu0 %v831
    %3868 = vmatpush.bf16.msra.mxu0 %v823
    %3869 = vmatpush.bf16.msra.mxu0 %v815
    %3870 = vmatmul.bf16.gmra.mxu0 %v3742
    %v3871 = vpop.f32.mrf.mxu0
    %v3872 = vadd.f32 %v3859, %v3871
    %v3873 = vpop.f32.mrf.mxu0
    %3874 = vdwg.mxu0
    %3875 = vmatpush.bf16.msra.mxu0 %v808
    %3876 = vmatpush.bf16.msra.mxu0 %v800
    %3877 = vmatpush.bf16.msra.mxu0 %v792
    %3878 = vmatpush.bf16.msra.mxu0 %v784
    %3879 = vmatpush.bf16.msra.mxu0 %v776
    %3880 = vmatpush.bf16.msra.mxu0 %v768
    %3881 = vmatpush.bf16.msra.mxu0 %v760
    %3882 = vmatpush.bf16.msra.mxu0 %v752
    %3883 = vmatmul.bf16.gmra.mxu0 %v3741
    %v3884 = vpop.f32.mrf.mxu0
    %v3885 = vadd.f32 0.0, %v3884
    %v3886 = vpop.f32.mrf.mxu0
    %3887 = vdwg.mxu0
    %3888 = vmatpush.bf16.msra.mxu0 %v872
    %3889 = vmatpush.bf16.msra.mxu0 %v864
    %3890 = vmatpush.bf16.msra.mxu0 %v856
    %3891 = vmatpush.bf16.msra.mxu0 %v848
    %3892 = vmatpush.bf16.msra.mxu0 %v840
    %3893 = vmatpush.bf16.msra.mxu0 %v832
    %3894 = vmatpush.bf16.msra.mxu0 %v824
    %3895 = vmatpush.bf16.msra.mxu0 %v816
    %3896 = vmatmul.bf16.gmra.mxu0 %v3742
    %v3897 = vpop.f32.mrf.mxu0
    %v3898 = vadd.f32 %v3885, %v3897
    %v3899 = vpop.f32.mrf.mxu0
    %3900 = vdwg.mxu0
    %3901 = vmatpush.bf16.msra.mxu0 %v809
    %3902 = vmatpush.bf16.msra.mxu0 %v801
    %3903 = vmatpush.bf16.msra.mxu0 %v793
    %3904 = vmatpush.bf16.msra.mxu0 %v785
    %3905 = vmatpush.bf16.msra.mxu0 %v777
    %3906 = vmatpush.bf16.msra.mxu0 %v769
    %3907 = vmatpush.bf16.msra.mxu0 %v761
    %3908 = vmatpush.bf16.msra.mxu0 %v753
    %3909 = vmatmul.bf16.gmra.mxu0 %v3741
    %v3910 = vpop.f32.mrf.mxu0
    %v3911 = vadd.f32 0.0, %v3910
    %v3912 = vpop.f32.mrf.mxu0
    %3913 = vdwg.mxu0
    %3914 = vmatpush.bf16.msra.mxu0 %v873
    %3915 = vmatpush.bf16.msra.mxu0 %v865
    %3916 = vmatpush.bf16.msra.mxu0 %v857
    %3917 = vmatpush.bf16.msra.mxu0 %v849
    %3918 = vmatpush.bf16.msra.mxu0 %v841
    %3919 = vmatpush.bf16.msra.mxu0 %v833
    %3920 = vmatpush.bf16.msra.mxu0 %v825
    %3921 = vmatpush.bf16.msra.mxu0 %v817
    %3922 = vmatmul.bf16.gmra.mxu0 %v3742
    %v3923 = vpop.f32.mrf.mxu0
    %v3924 = vadd.f32 %v3911, %v3923
    %v3925 = vpop.f32.mrf.mxu0
    %3926 = vdwg.mxu0
    %3927 = vmatpush.bf16.msra.mxu0 %v810
    %3928 = vmatpush.bf16.msra.mxu0 %v802
    %3929 = vmatpush.bf16.msra.mxu0 %v794
    %3930 = vmatpush.bf16.msra.mxu0 %v786
    %3931 = vmatpush.bf16.msra.mxu0 %v778
    %3932 = vmatpush.bf16.msra.mxu0 %v770
    %3933 = vmatpush.bf16.msra.mxu0 %v762
    %3934 = vmatpush.bf16.msra.mxu0 %v754
    %3935 = vmatmul.bf16.gmra.mxu0 %v3741
    %v3936 = vpop.f32.mrf.mxu0
    %v3937 = vadd.f32 0.0, %v3936
    %v3938 = vpop.f32.mrf.mxu0
    %3939 = vdwg.mxu0
    %3940 = vmatpush.bf16.msra.mxu0 %v874
    %3941 = vmatpush.bf16.msra.mxu0 %v866
    %3942 = vmatpush.bf16.msra.mxu0 %v858
    %3943 = vmatpush.bf16.msra.mxu0 %v850
    %3944 = vmatpush.bf16.msra.mxu0 %v842
    %3945 = vmatpush.bf16.msra.mxu0 %v834
    %3946 = vmatpush.bf16.msra.mxu0 %v826
    %3947 = vmatpush.bf16.msra.mxu0 %v818
    %3948 = vmatmul.bf16.gmra.mxu0 %v3742
    %v3949 = vpop.f32.mrf.mxu0
    %v3950 = vadd.f32 %v3937, %v3949
    %v3951 = vpop.f32.mrf.mxu0
    %3952 = vdwg.mxu0
    %v3953 = vadd.f32 %v3872, %v49
    %v3954 = vadd.f32 %v3898, %v50
    %v3955 = vadd.f32 %v3924, %v51
    %v3956 = vadd.f32 %v3950, %v52
    %v3957 = vxor.u32 %v3953, 2147483648
    %v3958 = vmul.f32 %v3957, 1.442695
    %v3959 = vpow.pop %v3958
    %v3960 = vadd.f32 %v3959, 1.0
    %v3961 = vrcp.pop %v3960
    %v3962 = vmul.f32 %v3960, %v3961
    %v3963 = vsub.f32 1.0, %v3962
    %v3964 = vmul.f32 %v3961, %v3963
    %v3965 = vadd.f32 %v3961, %v3964
    %vm3966 = vweird.f32 %v3960
    %vm3967 = vweird.f32 %v3961
    %vm3968 = vmor %vm3966, %vm3967
    %v3969 = vsel %vm3968, %v3961, %v3965
    %v3970 = vand.u32 2147483647, %v3960
    %vm3971 = vcmp.eq.f32.partialorder %v3970, 8.507059e+37
    %v3972 = vand.u32 %v3960, 2147483648
    %v3973 = vor.u32 1.1754944e-38, %v3972
    %v3974 = vsel %vm3971, %v3973, %v3969
    %v3975 = vmul.f32 1.0, %v3974
    %v3976 = vxor.u32 %v3954, 2147483648
    %v3977 = vmul.f32 %v3976, 1.442695
    %v3978 = vpow.pop %v3977
    %v3979 = vadd.f32 %v3978, 1.0
    %v3980 = vrcp.pop %v3979
    %v3981 = vmul.f32 %v3979, %v3980
    %v3982 = vsub.f32 1.0, %v3981
    %v3983 = vmul.f32 %v3980, %v3982
    %v3984 = vadd.f32 %v3980, %v3983
    %vm3985 = vweird.f32 %v3979
    %vm3986 = vweird.f32 %v3980
    %vm3987 = vmor %vm3985, %vm3986
    %v3988 = vsel %vm3987, %v3980, %v3984
    %v3989 = vand.u32 2147483647, %v3979
    %vm3990 = vcmp.eq.f32.partialorder %v3989, 8.507059e+37
    %v3991 = vand.u32 %v3979, 2147483648
    %v3992 = vor.u32 1.1754944e-38, %v3991
    %v3993 = vsel %vm3990, %v3992, %v3988
    %v3994 = vmul.f32 1.0, %v3993
    %v3995 = vtanh.pop %v3955
    %v3996 = vxor.u32 %v3956, 2147483648
    %v3997 = vmul.f32 %v3996, 1.442695
    %v3998 = vpow.pop %v3997
    %v3999 = vadd.f32 %v3998, 1.0
    %v4000 = vrcp.pop %v3999
    %v4001 = vmul.f32 %v3999, %v4000
    %v4002 = vsub.f32 1.0, %v4001
    %v4003 = vmul.f32 %v4000, %v4002
    %v4004 = vadd.f32 %v4000, %v4003
    %vm4005 = vweird.f32 %v3999
    %vm4006 = vweird.f32 %v4000
    %vm4007 = vmor %vm4005, %vm4006
    %v4008 = vsel %vm4007, %v4000, %v4004
    %v4009 = vand.u32 2147483647, %v3999
    %vm4010 = vcmp.eq.f32.partialorder %v4009, 8.507059e+37
    %v4011 = vand.u32 %v3999, 2147483648
    %v4012 = vor.u32 1.1754944e-38, %v4011
    %v4013 = vsel %vm4010, %v4012, %v4008
    %v4014 = vmul.f32 1.0, %v4013
    %v4015 = vmul.f32 %v3994, %v3565
    %v4016 = vmul.f32 %v3975, %v3995
    %v4017 = vadd.f32 %v4015, %v4016
    %v4018 = vtanh.pop %v4017
    %v4019 = vmul.f32 %v4014, %v4018
    %v4024 = vrot.slane %v3768, 1
    %v4025 = vrot.slane %v3794, 1
    %v4026 = vrot.slane %v3820, 1
    %v4027 = vrot.slane %v3846, 1
    %v4028 = vrot.slane %v3768, 2
    %v4029 = vrot.slane %v3794, 2
    %v4030 = vrot.slane %v3820, 2
    %v4031 = vrot.slane %v3846, 2
    %v4040 = vadd.f32 %v93, %v4024
    %v4041 = vadd.f32 %v94, %v4025
    %v4042 = vadd.f32 %v95, %v4026
    %v4043 = vadd.f32 %v96, %v4027
    %v4044 = vadd.f32 %v97, %v4028
    %v4045 = vadd.f32 %v98, %v4029
    %v4046 = vadd.f32 %v99, %v4030
    %v4047 = vadd.f32 %v100, %v4031
    %v4048 = vxor.u32 %v4040, 2147483648
    %v4049 = vxor.u32 %v4044, 2147483648
    %v4050 = vmul.f32 %v4048, 1.442695
    %v4051 = vpow.pop %v4050
    %v4052 = vmul.f32 %v4049, 1.442695
    %v4053 = vpow.pop %v4052
    %v4054 = vadd.f32 %v4051, 1.0
    %v4055 = vadd.f32 %v4053, 1.0
    %v4056 = vrcp.pop %v4054
    %v4057 = vmul.f32 %v4054, %v4056
    %v4058 = vsub.f32 1.0, %v4057
    %v4059 = vmul.f32 %v4056, %v4058
    %v4060 = vadd.f32 %v4056, %v4059
    %vm4061 = vweird.f32 %v4054
    %vm4062 = vweird.f32 %v4056
    %vm4063 = vmor %vm4061, %vm4062
    %v4064 = vsel %vm4063, %v4056, %v4060
    %v4065 = vand.u32 2147483647, %v4054
    %vm4066 = vcmp.eq.f32.partialorder %v4065, 8.507059e+37
    %v4067 = vand.u32 %v4054, 2147483648
    %v4068 = vor.u32 1.1754944e-38, %v4067
    %v4069 = vsel %vm4066, %v4068, %v4064
    %v4070 = vmul.f32 1.0, %v4069
    %v4071 = vrcp.pop %v4055
    %v4072 = vmul.f32 %v4055, %v4071
    %v4073 = vsub.f32 1.0, %v4072
    %v4074 = vmul.f32 %v4071, %v4073
    %v4075 = vadd.f32 %v4071, %v4074
    %vm4076 = vweird.f32 %v4055
    %vm4077 = vweird.f32 %v4071
    %vm4078 = vmor %vm4076, %vm4077
    %v4079 = vsel %vm4078, %v4071, %v4075
    %v4080 = vand.u32 2147483647, %v4055
    %vm4081 = vcmp.eq.f32.partialorder %v4080, 8.507059e+37
    %v4082 = vand.u32 %v4055, 2147483648
    %v4083 = vor.u32 1.1754944e-38, %v4082
    %v4084 = vsel %vm4081, %v4083, %v4079
    %v4085 = vmul.f32 1.0, %v4084
    %v4086 = vxor.u32 %v4041, 2147483648
    %v4087 = vxor.u32 %v4045, 2147483648
    %v4088 = vmul.f32 %v4086, 1.442695
    %v4089 = vpow.pop %v4088
    %v4090 = vmul.f32 %v4087, 1.442695
    %v4091 = vpow.pop %v4090
    %v4092 = vadd.f32 %v4089, 1.0
    %v4093 = vadd.f32 %v4091, 1.0
    %v4094 = vrcp.pop %v4092
    %v4095 = vmul.f32 %v4092, %v4094
    %v4096 = vsub.f32 1.0, %v4095
    %v4097 = vmul.f32 %v4094, %v4096
    %v4098 = vadd.f32 %v4094, %v4097
    %vm4099 = vweird.f32 %v4092
    %vm4100 = vweird.f32 %v4094
    %vm4101 = vmor %vm4099, %vm4100
    %v4102 = vsel %vm4101, %v4094, %v4098
    %v4103 = vand.u32 2147483647, %v4092
    %vm4104 = vcmp.eq.f32.partialorder %v4103, 8.507059e+37
    %v4105 = vand.u32 %v4092, 2147483648
    %v4106 = vor.u32 1.1754944e-38, %v4105
    %v4107 = vsel %vm4104, %v4106, %v4102
    %v4108 = vmul.f32 1.0, %v4107
    %v4109 = vrcp.pop %v4093
    %v4110 = vmul.f32 %v4093, %v4109
    %v4111 = vsub.f32 1.0, %v4110
    %v4112 = vmul.f32 %v4109, %v4111
    %v4113 = vadd.f32 %v4109, %v4112
    %vm4114 = vweird.f32 %v4093
    %vm4115 = vweird.f32 %v4109
    %vm4116 = vmor %vm4114, %vm4115
    %v4117 = vsel %vm4116, %v4109, %v4113
    %v4118 = vand.u32 2147483647, %v4093
    %vm4119 = vcmp.eq.f32.partialorder %v4118, 8.507059e+37
    %v4120 = vand.u32 %v4093, 2147483648
    %v4121 = vor.u32 1.1754944e-38, %v4120
    %v4122 = vsel %vm4119, %v4121, %v4117
    %v4123 = vmul.f32 1.0, %v4122
    %v4124 = vtanh.pop %v4042
    %v4125 = vtanh.pop %v4046
    %v4126 = vxor.u32 %v4043, 2147483648
    %v4127 = vxor.u32 %v4047, 2147483648
    %v4128 = vmul.f32 %v4126, 1.442695
    %v4129 = vpow.pop %v4128
    %v4130 = vmul.f32 %v4127, 1.442695
    %v4131 = vpow.pop %v4130
    %v4132 = vadd.f32 %v4129, 1.0
    %v4133 = vadd.f32 %v4131, 1.0
    %v4134 = vrcp.pop %v4132
    %v4135 = vmul.f32 %v4132, %v4134
    %v4136 = vsub.f32 1.0, %v4135
    %v4137 = vmul.f32 %v4134, %v4136
    %v4138 = vadd.f32 %v4134, %v4137
    %vm4139 = vweird.f32 %v4132
    %vm4140 = vweird.f32 %v4134
    %vm4141 = vmor %vm4139, %vm4140
    %v4142 = vsel %vm4141, %v4134, %v4138
    %v4143 = vand.u32 2147483647, %v4132
    %vm4144 = vcmp.eq.f32.partialorder %v4143, 8.507059e+37
    %v4145 = vand.u32 %v4132, 2147483648
    %v4146 = vor.u32 1.1754944e-38, %v4145
    %v4147 = vsel %vm4144, %v4146, %v4142
    %v4148 = vmul.f32 1.0, %v4147
    %v4149 = vrcp.pop %v4133
    %v4150 = vmul.f32 %v4133, %v4149
    %v4151 = vsub.f32 1.0, %v4150
    %v4152 = vmul.f32 %v4149, %v4151
    %v4153 = vadd.f32 %v4149, %v4152
    %vm4154 = vweird.f32 %v4133
    %vm4155 = vweird.f32 %v4149
    %vm4156 = vmor %vm4154, %vm4155
    %v4157 = vsel %vm4156, %v4149, %v4153
    %v4158 = vand.u32 2147483647, %v4133
    %vm4159 = vcmp.eq.f32.partialorder %v4158, 8.507059e+37
    %v4160 = vand.u32 %v4133, 2147483648
    %v4161 = vor.u32 1.1754944e-38, %v4160
    %v4162 = vsel %vm4159, %v4161, %v4157
    %v4163 = vmul.f32 1.0, %v4162
    %v4166 = vrot.slane %v3722, 7
    %v4167 = vrot.slane %v3723, 7
    %v4170 = vmul.f32 %v4108, %v4166
    %v4171 = vmul.f32 %v4123, %v4167
    %v4172 = vmul.f32 %v4070, %v4124
    %v4173 = vmul.f32 %v4085, %v4125
    %v4174 = vadd.f32 %v4170, %v4172
    %v4175 = vadd.f32 %v4171, %v4173
    %v4176 = vtanh.pop %v4174
    %v4177 = vtanh.pop %v4175
    %v4178 = vmul.f32 %v4148, %v4176
    %v4179 = vmul.f32 %v4163, %v4177
    %v4182 = vrot.slane %v4179, 7
    %v4186 = vrot.slane %v4019, 1
    %v4188 = vpack.c.bf16 %v4182, %v4178
    %v4189 = vpack.c.bf16 %v4186, %v4186
    %v4191 = vshrl.u32 %v4188, 16
    %v4193 = vrot.slane %v4191, 3
    %v4194 = vshll.u32 %v4188, 16
    %v4196 = vrot.slane %v4194, 4
    %v4197 = vor.u32 %v4193, %v4196
    %v4199 = vshrl.u32 %v4189, 16
    %v4201 = vrot.slane %v4199, 3
    %v4202 = vshll.u32 %v4189, 16
    %v4204 = vrot.slane %v4202, 4
    %v4205 = vor.u32 %v4201, %v4204
    %4208 = vmatpush.bf16.msra.mxu0 %v807
    %4209 = vmatpush.bf16.msra.mxu0 %v799
    %4210 = vmatpush.bf16.msra.mxu0 %v791
    %4211 = vmatpush.bf16.msra.mxu0 %v783
    %4212 = vmatpush.bf16.msra.mxu0 %v775
    %4213 = vmatpush.bf16.msra.mxu0 %v767
    %4214 = vmatpush.bf16.msra.mxu0 %v759
    %4215 = vmatpush.bf16.msra.mxu0 %v751
    %4216 = vmatmul.bf16.gmra.mxu0 %v4197
    %v4217 = vpop.f32.mrf.mxu0
    %v4218 = vadd.f32 0.0, %v4217
    %v4219 = vpop.f32.mrf.mxu0
    %4220 = vdwg.mxu0
    %4221 = vmatpush.bf16.msra.mxu0 %v871
    %4222 = vmatpush.bf16.msra.mxu0 %v863
    %4223 = vmatpush.bf16.msra.mxu0 %v855
    %4224 = vmatpush.bf16.msra.mxu0 %v847
    %4225 = vmatpush.bf16.msra.mxu0 %v839
    %4226 = vmatpush.bf16.msra.mxu0 %v831
    %4227 = vmatpush.bf16.msra.mxu0 %v823
    %4228 = vmatpush.bf16.msra.mxu0 %v815
    %4229 = vmatmul.bf16.gmra.mxu0 %v4205
    %v4230 = vpop.f32.mrf.mxu0
    %v4231 = vadd.f32 %v4218, %v4230
    %v4232 = vpop.f32.mrf.mxu0
    %4233 = vdwg.mxu0
    %4234 = vmatpush.bf16.msra.mxu0 %v808
    %4235 = vmatpush.bf16.msra.mxu0 %v800
    %4236 = vmatpush.bf16.msra.mxu0 %v792
    %4237 = vmatpush.bf16.msra.mxu0 %v784
    %4238 = vmatpush.bf16.msra.mxu0 %v776
    %4239 = vmatpush.bf16.msra.mxu0 %v768
    %4240 = vmatpush.bf16.msra.mxu0 %v760
    %4241 = vmatpush.bf16.msra.mxu0 %v752
    %4242 = vmatmul.bf16.gmra.mxu0 %v4197
    %v4243 = vpop.f32.mrf.mxu0
    %v4244 = vadd.f32 0.0, %v4243
    %v4245 = vpop.f32.mrf.mxu0
    %4246 = vdwg.mxu0
    %4247 = vmatpush.bf16.msra.mxu0 %v872
    %4248 = vmatpush.bf16.msra.mxu0 %v864
    %4249 = vmatpush.bf16.msra.mxu0 %v856
    %4250 = vmatpush.bf16.msra.mxu0 %v848
    %4251 = vmatpush.bf16.msra.mxu0 %v840
    %4252 = vmatpush.bf16.msra.mxu0 %v832
    %4253 = vmatpush.bf16.msra.mxu0 %v824
    %4254 = vmatpush.bf16.msra.mxu0 %v816
    %4255 = vmatmul.bf16.gmra.mxu0 %v4205
    %v4256 = vpop.f32.mrf.mxu0
    %v4257 = vadd.f32 %v4244, %v4256
    %v4258 = vpop.f32.mrf.mxu0
    %4259 = vdwg.mxu0
    %4260 = vmatpush.bf16.msra.mxu0 %v809
    %4261 = vmatpush.bf16.msra.mxu0 %v801
    %4262 = vmatpush.bf16.msra.mxu0 %v793
    %4263 = vmatpush.bf16.msra.mxu0 %v785
    %4264 = vmatpush.bf16.msra.mxu0 %v777
    %4265 = vmatpush.bf16.msra.mxu0 %v769
    %4266 = vmatpush.bf16.msra.mxu0 %v761
    %4267 = vmatpush.bf16.msra.mxu0 %v753
    %4268 = vmatmul.bf16.gmra.mxu0 %v4197
    %v4269 = vpop.f32.mrf.mxu0
    %v4270 = vadd.f32 0.0, %v4269
    %v4271 = vpop.f32.mrf.mxu0
    %4272 = vdwg.mxu0
    %4273 = vmatpush.bf16.msra.mxu0 %v873
    %4274 = vmatpush.bf16.msra.mxu0 %v865
    %4275 = vmatpush.bf16.msra.mxu0 %v857
    %4276 = vmatpush.bf16.msra.mxu0 %v849
    %4277 = vmatpush.bf16.msra.mxu0 %v841
    %4278 = vmatpush.bf16.msra.mxu0 %v833
    %4279 = vmatpush.bf16.msra.mxu0 %v825
    %4280 = vmatpush.bf16.msra.mxu0 %v817
    %4281 = vmatmul.bf16.gmra.mxu0 %v4205
    %v4282 = vpop.f32.mrf.mxu0
    %v4283 = vadd.f32 %v4270, %v4282
    %v4284 = vpop.f32.mrf.mxu0
    %4285 = vdwg.mxu0
    %4286 = vmatpush.bf16.msra.mxu0 %v810
    %4287 = vmatpush.bf16.msra.mxu0 %v802
    %4288 = vmatpush.bf16.msra.mxu0 %v794
    %4289 = vmatpush.bf16.msra.mxu0 %v786
    %4290 = vmatpush.bf16.msra.mxu0 %v778
    %4291 = vmatpush.bf16.msra.mxu0 %v770
    %4292 = vmatpush.bf16.msra.mxu0 %v762
    %4293 = vmatpush.bf16.msra.mxu0 %v754
    %4294 = vmatmul.bf16.gmra.mxu0 %v4197
    %v4295 = vpop.f32.mrf.mxu0
    %v4296 = vadd.f32 0.0, %v4295
    %v4297 = vpop.f32.mrf.mxu0
    %4298 = vdwg.mxu0
    %4299 = vmatpush.bf16.msra.mxu0 %v874
    %4300 = vmatpush.bf16.msra.mxu0 %v866
    %4301 = vmatpush.bf16.msra.mxu0 %v858
    %4302 = vmatpush.bf16.msra.mxu0 %v850
    %4303 = vmatpush.bf16.msra.mxu0 %v842
    %4304 = vmatpush.bf16.msra.mxu0 %v834
    %4305 = vmatpush.bf16.msra.mxu0 %v826
    %4306 = vmatpush.bf16.msra.mxu0 %v818
    %4307 = vmatmul.bf16.gmra.mxu0 %v4205
    %v4308 = vpop.f32.mrf.mxu0
    %v4309 = vadd.f32 %v4296, %v4308
    %v4310 = vpop.f32.mrf.mxu0
    %4311 = vdwg.mxu0
    %v4312 = vadd.f32 %v4231, %v49
    %v4313 = vadd.f32 %v4257, %v50
    %v4314 = vadd.f32 %v4283, %v51
    %v4315 = vadd.f32 %v4309, %v52
    %v4316 = vxor.u32 %v4312, 2147483648
    %v4317 = vmul.f32 %v4316, 1.442695
    %v4318 = vpow.pop %v4317
    %v4319 = vadd.f32 %v4318, 1.0
    %v4320 = vrcp.pop %v4319
    %v4321 = vmul.f32 %v4319, %v4320
    %v4322 = vsub.f32 1.0, %v4321
    %v4323 = vmul.f32 %v4320, %v4322
    %v4324 = vadd.f32 %v4320, %v4323
    %vm4325 = vweird.f32 %v4319
    %vm4326 = vweird.f32 %v4320
    %vm4327 = vmor %vm4325, %vm4326
    %v4328 = vsel %vm4327, %v4320, %v4324
    %v4329 = vand.u32 2147483647, %v4319
    %vm4330 = vcmp.eq.f32.partialorder %v4329, 8.507059e+37
    %v4331 = vand.u32 %v4319, 2147483648
    %v4332 = vor.u32 1.1754944e-38, %v4331
    %v4333 = vsel %vm4330, %v4332, %v4328
    %v4334 = vmul.f32 1.0, %v4333
    %v4335 = vxor.u32 %v4313, 2147483648
    %v4336 = vmul.f32 %v4335, 1.442695
    %v4337 = vpow.pop %v4336
    %v4338 = vadd.f32 %v4337, 1.0
    %v4339 = vrcp.pop %v4338
    %v4340 = vmul.f32 %v4338, %v4339
    %v4341 = vsub.f32 1.0, %v4340
    %v4342 = vmul.f32 %v4339, %v4341
    %v4343 = vadd.f32 %v4339, %v4342
    %vm4344 = vweird.f32 %v4338
    %vm4345 = vweird.f32 %v4339
    %vm4346 = vmor %vm4344, %vm4345
    %v4347 = vsel %vm4346, %v4339, %v4343
    %v4348 = vand.u32 2147483647, %v4338
    %vm4349 = vcmp.eq.f32.partialorder %v4348, 8.507059e+37
    %v4350 = vand.u32 %v4338, 2147483648
    %v4351 = vor.u32 1.1754944e-38, %v4350
    %v4352 = vsel %vm4349, %v4351, %v4347
    %v4353 = vmul.f32 1.0, %v4352
    %v4354 = vtanh.pop %v4314
    %v4355 = vxor.u32 %v4315, 2147483648
    %v4356 = vmul.f32 %v4355, 1.442695
    %v4357 = vpow.pop %v4356
    %v4358 = vadd.f32 %v4357, 1.0
    %v4359 = vrcp.pop %v4358
    %v4360 = vmul.f32 %v4358, %v4359
    %v4361 = vsub.f32 1.0, %v4360
    %v4362 = vmul.f32 %v4359, %v4361
    %v4363 = vadd.f32 %v4359, %v4362
    %vm4364 = vweird.f32 %v4358
    %vm4365 = vweird.f32 %v4359
    %vm4366 = vmor %vm4364, %vm4365
    %v4367 = vsel %vm4366, %v4359, %v4363
    %v4368 = vand.u32 2147483647, %v4358
    %vm4369 = vcmp.eq.f32.partialorder %v4368, 8.507059e+37
    %v4370 = vand.u32 %v4358, 2147483648
    %v4371 = vor.u32 1.1754944e-38, %v4370
    %v4372 = vsel %vm4369, %v4371, %v4367
    %v4373 = vmul.f32 1.0, %v4372
    %v4374 = vmul.f32 %v4353, %v4017
    %v4375 = vmul.f32 %v4334, %v4354
    %v4376 = vadd.f32 %v4374, %v4375
    %v4377 = vtanh.pop %v4376
    %v4378 = vmul.f32 %v4373, %v4377
    %v4379 = vld [vmem:[%s5] sm:$0xff]
    %v4380 = vld [vmem:[%s5 + $0x8] sm:$0xff]
    %v4381 = vld [vmem:[%s5 + $0x10] sm:$0xff]
    %v4382 = vld [vmem:[%s5 + $0x18] sm:$0xff]
    %v4383 = vld [vmem:[%s5 + $0x20] sm:$0xff]
    %v4384 = vld [vmem:[%s5 + $0x28] sm:$0xff]
    %v4385 = vld [vmem:[%s5 + $0x30] sm:$0xff]
    %v4386 = vld [vmem:[%s5 + $0x38] sm:$0xff]
    %v4387 = vld [vmem:[%s5 + $0x40] sm:$0xff]
    %v4388 = vld [vmem:[%s5 + $0x48] sm:$0xff]
    %v4389 = vld [vmem:[%s5 + $0x50] sm:$0xff]
    %v4390 = vld [vmem:[%s5 + $0x58] sm:$0xff]
    %v4391 = vld [vmem:[%s5 + $0x60] sm:$0xff]
    %v4392 = vld [vmem:[%s5 + $0x68] sm:$0xff]
    %v4393 = vld [vmem:[%s5 + $0x70] sm:$0xff]
    %v4394 = vld [vmem:[%s5 + $0x78] sm:$0xff]
    %v4395 = vld [vmem:[%s6] sm:$0x1]
    %v4397 = vperm.slane %v4395, 0
    %4399 = vmatpush.msra.mxu0 %v4394
    %4400 = vmatpush.msra.mxu0 %v4393
    %4401 = vmatpush.msra.mxu0 %v4392
    %4402 = vmatpush.msra.mxu0 %v4391
    %4403 = vmatpush.msra.mxu0 %v4390
    %4404 = vmatpush.msra.mxu0 %v4389
    %4405 = vmatpush.msra.mxu0 %v4388
    %4406 = vmatpush.msra.mxu0 %v4387
    %4407 = vmatpush.msra.mxu0 %v4386
    %4408 = vmatpush.msra.mxu0 %v4385
    %4409 = vmatpush.msra.mxu0 %v4384
    %4410 = vmatpush.msra.mxu0 %v4383
    %4411 = vmatpush.msra.mxu0 %v4382
    %4412 = vmatpush.msra.mxu0 %v4381
    %4413 = vmatpush.msra.mxu0 %v4380
    %4414 = vmatpush.msra.mxu0 %v4379
    %4415 = vmatmul.f32.gmra.mxu0 %v4378
    %v4416 = vpop.f32.mrf.mxu0
    %v4417 = vadd.f32 %v4397, %v4416
    %4418 = vdwg.mxu0
    %vm4419 = vcmask 58368
    %4420 = vst.msk [vmem:[#allocation5] sm:$0x3] %vm4419, %v4417
    // Predicated region
    $region34: #{lstm_forward.1} parent=1 // pred_check
      _
    $region35: #{lstm_forward.1} parent=1 // pred_check_branch
      %4422 = sbr.rel (0) target = $region37
    $region36: #{lstm_forward.1} parent=1 // pred_region
      %4424 = vsyncadd [#allocation4], 0
      %s4426 = sshll.u32 [#allocation5], 4
      %s4427 = int_to_ptr.vmem [resolvable:$true] %s4426
      %s4428 = sshll.u32 %s7, 4
      %s4429 = int_to_ptr.hbm [resolvable:$true] %s4428
      %4431 = dma.vmem_to_hbm [thread:$0]  %s4427, 32, %s4429, [#allocation4]
    $region37: #{lstm_forward.1} parent=1 // pred_fallthru
      _
    // Predicated region
    $region38: #{lstm_forward.1} parent=1 // pred_check
      _
    $region39: #{lstm_forward.1} parent=1 // pred_check_branch
      %4433 = sbr.rel (0) target = $region41
    $region40: #{lstm_forward.1} parent=1 // pred_region
      %4435 = dma.done [#allocation4], 32
    $region41: #{lstm_forward.1} parent=1 // pred_fallthru
      _
    %4436 = vsyncpa [#allocation3], 1
    %4437 = vsyncpa [#allocation4], 1

</llo_original>
